<compile_context>
chip_gen: v6e
topology: v6e:2x2x1
jax: 0.10.0
libtpu: 0.0.40
codegen_flags: <defaults>
</compile_context>

<pallas_src>
import collections
import functools
import math

import jax
import jax.numpy as jnp
from jax import lax
from jax.experimental import pallas as pl
from jax.experimental.pallas import tpu as pltpu

EPS = 1e-5          # nn.BatchNorm2d default eps
C_PAD = 128         # every channel-like axis padded to one full lane width
MATS_PER_STAGE = 13
ROWS_PER_STAGE = 12

StageCfg = collections.namedtuple("StageCfg", "cin cout has_shortcut")
NetCfg = collections.namedtuple("NetCfg", "in_channels num_classes mem_size stages")

_VMEM = functools.partial(pl.BlockSpec, memory_space=pltpu.MemorySpace.VMEM)


# ------------------------------ fused kernel --------------------------------

def _make_kernel(cfg):
    n_stages = len(cfg.stages)
    mem_size = cfg.mem_size

    def kernel(x_ref, mats_ref, rows_ref, logits_ref, metrics_ref):
        f32 = jnp.float32
        B = x_ref.shape[0]
        lane = lax.broadcasted_iota(jnp.int32, (1, C_PAD), 1)

        def mm(a, i):                       # (B,128) @ (128,128) on the MXU
            return jnp.dot(a, mats_ref[i], preferred_element_type=f32)

        def row(i):                         # (1,128) bias / scalar row
            return rows_ref[pl.ds(i, 1), :]

        def bn(t):                          # training-mode BN, gamma=1, beta=0
            mean = jnp.mean(t, axis=0, keepdims=True)
            var = jnp.mean((t - mean) ** 2, axis=0, keepdims=True)
            return (t - mean) * lax.rsqrt(var + EPS)

        # ----- stem: relu(bn1(conv1(x))) -----
        h = jnp.maximum(bn(mm(x_ref[...], 0) + row(0)), 0.0)

        metric_vals = []
        for s, st in enumerate(cfg.stages):
            mb = 1 + s * MATS_PER_STAGE
            rb = 1 + s * ROWS_PER_STAGE
            cout = st.cout

            # ----- shortcut (1x1 conv, no bias, + BN) or identity -----
            identity = bn(mm(h, mb + 12)) if st.has_shortcut else h

            # ----- conv1 -> bn1 -> relu ; conv2 -> bn2 -----
            t = jnp.maximum(bn(mm(h, mb + 0) + row(rb + 0)), 0.0)
            t = bn(mm(t, mb + 1) + row(rb + 1))

            # ----- channel attention (avg-pool == max-pool on a 1x1 map) -----
            hid = jnp.maximum(mm(t, mb + 2), 0.0)
            t = t * jax.nn.sigmoid(2.0 * mm(hid, mb + 3))

            # ----- spatial attention (7x7 conv on 1x1 map -> centre tap) -----
            valid_c = lane < cout
            c_avg = jnp.sum(t, axis=1, keepdims=True) * (1.0 / cout)
            c_max = jnp.max(jnp.where(valid_c, t, -1e30), axis=1, keepdims=True)
            s_map = jax.nn.sigmoid(c_avg * row(rb + 7) + c_max * row(rb + 8)
                                   + row(rb + 9))
            t = t * s_map

            # ----- memory module -----
            q = jnp.maximum(mm(t, mb + 6) + row(rb + 2), 0.0)
            q = mm(q, mb + 7) + row(rb + 3)
            scores = mm(q, mb + 4) * (1.0 / math.sqrt(cout))
            scores = jnp.where(lane < mem_size, scores, -1e30)   # mask padded slots
            scores = scores - jnp.max(scores, axis=1, keepdims=True)
            e = jnp.exp(scores)
            attn = e * pl.reciprocal(jnp.sum(e, axis=1, keepdims=True), approx=True)
            retrieved = mm(attn, mb + 5)
            gate = jax.nn.sigmoid(mm(t, mb + 8) + mm(retrieved, mb + 9) + row(rb + 4))
            mem_out = gate * retrieved + (1.0 - gate) * t
            # TODO(synk): torch.no_grad in-place EMA update of self.memory is a
            # parameter side effect that does not affect this forward's output;
            # not reproduced.
            m_attn = jnp.sum(attn, keepdims=True) * (1.0 / (B * mem_size))

            # ----- spiking neurons (fresh state: membrane = leak*input = 0.1*x,
            #       matching the reference update (1-leak)*0 + leak*x) -----
            spikes = (0.1 * mem_out >= 1.0).astype(f32)
            spike_out = spikes          # firing_rate == spikes on the first step
            m_spike = jnp.sum(spikes, keepdims=True) * (1.0 / (B * cout))

            # ----- self-supervised predictor -----
            p = jnp.maximum(bn(mm(spike_out, mb + 10) + row(rb + 5)), 0.0)
            p = mm(p, mb + 11) + row(rb + 6)
            conf = jax.nn.sigmoid(jnp.sum(p * row(rb + 10), axis=1, keepdims=True)
                                  + row(rb + 11))
            m_conf = jnp.sum(conf, keepdims=True) * (1.0 / (B * C_PAD))

            # TODO(synk): should_expand() calls self.estimate_complexity which is
            # undefined in the reference module, so the recursive-expansion branch
            # (recursive_units / integrate conv) is omitted.

            h = jnp.maximum(spike_out + identity, 0.0)
            metric_vals += [m_attn, m_spike, m_conf]

        # ----- adaptive avgpool(1x1) == identity; fc -----
        logits_ref[...] = mm(h, 1 + n_stages * MATS_PER_STAGE) \
            + row(1 + n_stages * ROWS_PER_STAGE)

        # ----- pack all 9 scalar metrics into one lane-dense (1,128) row -----
        mrow = jnp.zeros((1, C_PAD), f32)
        for k, m in enumerate(metric_vals):
            mrow = jnp.where(lane == k, m, mrow)
        metrics_ref[...] = mrow

    return kernel


# --------------------- one-time parameter preparation ------------------------

def prepare_params(params):
    """Pack all weights into two lane-dense slabs (done ONCE, outside the jit)."""
    stem_w = params["stem"]["conv_w"]
    in_channels = stem_w.shape[1]
    num_classes = params["fc"]["w"].shape[0]
    mem_size = params["stage1"]["mem"].shape[0]

    def pad_mat(m):
        out = jnp.zeros((C_PAD, C_PAD), jnp.float32)
        return out.at[: m.shape[0], : m.shape[1]].set(m.astype(jnp.float32))

    def pad_row(v):
        out = jnp.zeros((C_PAD,), jnp.float32)
        return out.at[: v.shape[0]].set(v.astype(jnp.float32))

    def rep_row(s):   # scalar replicated across all 128 lanes
        return jnp.full((C_PAD,), s, dtype=jnp.float32)

    mats, rows, stages = [], [], []

    # stem
    mats.append(pad_mat(stem_w[:, :, 1, 1].T))
    rows.append(pad_row(params["stem"]["conv_b"]))

    for name in ("stage1", "stage2", "stage3"):
        p = params[name]
        cout, cin = p["conv1_w"].shape[0], p["conv1_w"].shape[1]
        has_shortcut = "shortcut_w" in p
        stages.append(StageCfg(cin, cout, has_shortcut))

        mats += [
            pad_mat(p["conv1_w"][:, :, 1, 1].T),
            pad_mat(p["conv2_w"][:, :, 1, 1].T),
            pad_mat(p["ca_w1"].T),
            pad_mat(p["ca_w2"].T),
            pad_mat(p["mem_keys"].T),
            pad_mat(p["mem"]),
            pad_mat(p["ctrl_w1"].T),
            pad_mat(p["ctrl_w2"].T),
            pad_mat(p["gate_w"][:, :cout].T),
            pad_mat(p["gate_w"][:, cout:].T),
            pad_mat(p["pred_w1"][:, :, 0, 0].T),
            pad_mat(p["pred_w2"][:, :, 0, 0].T),
            pad_mat(p["shortcut_w"][:, :, 0, 0].T) if has_shortcut
            else jnp.zeros((C_PAD, C_PAD), jnp.float32),
        ]
        rows += [
            pad_row(p["conv1_b"]),
            pad_row(p["conv2_b"]),
            pad_row(p["ctrl_b1"]),
            pad_row(p["ctrl_b2"]),
            pad_row(p["gate_b"]),
            pad_row(p["pred_b1"]),
            pad_row(p["pred_b2"]),
            rep_row(p["sa_w"][0, 0, 3, 3]),     # 7x7 conv centre tap, avg channel
            rep_row(p["sa_w"][0, 1, 3, 3]),     # 7x7 conv centre tap, max channel
            rep_row(p["sa_b"][0]),
            pad_row(p["conf_w"][0]),
            rep_row(p["conf_b"][0]),
        ]

    mats.append(pad_mat(params["fc"]["w"].T))
    rows.append(pad_row(params["fc"]["b"]))

    cfg = NetCfg(in_channels=in_channels, num_classes=num_classes,
                 mem_size=mem_size, stages=tuple(stages))
    return cfg, jnp.stack(mats), jnp.stack(rows)


# -------------------------------- forward ------------------------------------

def make_forward(cfg):
    kernel = _make_kernel(cfg)
    metric_names = [f"stage{s + 1}_{k}" for s in range(len(cfg.stages))
                    for k in ("memory_attention", "spike_rate",
                              "prediction_confidence")]

    @jax.jit
    def forward(x_nchw, mats, rows):
        B = x_nchw.shape[0]
        feat = x_nchw.reshape(B, -1).astype(jnp.float32)
        assert feat.shape[1] == cfg.in_channels, \
            "MemoryModule in the reference requires H*W == 1"
        x = jnp.pad(feat, ((0, 0), (0, C_PAD - feat.shape[1])))

        logits_pad, metrics_row = pl.pallas_call(
            kernel,
            out_shape=(jax.ShapeDtypeStruct((B, C_PAD), jnp.float32),
                       jax.ShapeDtypeStruct((1, C_PAD), jnp.float32)),
            in_specs=[_VMEM(), _VMEM(), _VMEM()],
            out_specs=(_VMEM(), _VMEM()),
        )(x, mats, rows)

        logits = logits_pad[:, :cfg.num_classes]
        metrics = {name: metrics_row[0, i] for i, name in enumerate(metric_names)}
        return logits, metrics

    return forward


# --------------------------- parameter init ----------------------------------

def init_params(key, in_channels=3, num_classes=10, base_channels=16):
    keys = iter(jax.random.split(key, 256))

    def nrm(shape, scale=1.0):
        return scale * jax.random.normal(next(keys), shape, dtype=jnp.float32)

    def conv_w(o, i, k):                        # kaiming normal, fan_out
        fan_out = o * k * k
        return nrm((o, i, k, k), scale=math.sqrt(2.0 / fan_out))

    def lin_w(o, i):
        return nrm((o, i), scale=1.0 / math.sqrt(i))

    def stage(cin, cout, reduction=16):
        cr = max(cout // reduction, 1)
        p = {
            "conv1_w": conv_w(cout, cin, 3), "conv1_b": nrm((cout,), 0.1),
            "conv2_w": conv_w(cout, cout, 3), "conv2_b": nrm((cout,), 0.1),
            "ca_w1": lin_w(cr, cout), "ca_w2": lin_w(cout, cr),
            "sa_w": conv_w(1, 2, 7), "sa_b": nrm((1,), 0.1),
            "mem": nrm((64, cout)), "mem_keys": nrm((64, cout)),
            "ctrl_w1": lin_w(cout, cout), "ctrl_b1": nrm((cout,), 0.1),
            "ctrl_w2": lin_w(cout, cout), "ctrl_b2": nrm((cout,), 0.1),
            "gate_w": lin_w(cout, 2 * cout), "gate_b": nrm((cout,), 0.1),
            "pred_w1": conv_w(cout, cout, 1), "pred_b1": nrm((cout,), 0.1),
            "pred_w2": conv_w(cout, cout, 1), "pred_b2": nrm((cout,), 0.1),
            "conf_w": lin_w(1, cout), "conf_b": nrm((1,), 0.1),
        }
        if cin != cout:
            p["shortcut_w"] = conv_w(cout, cin, 1)
        return p

    return {
        "stem": {"conv_w": conv_w(base_channels, in_channels, 3),
                 "conv_b": nrm((base_channels,), 0.1)},
        "stage1": stage(base_channels, base_channels),
        "stage2": stage(base_channels, base_channels * 2),
        "stage3": stage(base_channels * 2, base_channels * 4),
        "fc": {"w": lin_w(num_classes, base_channels * 4),
               "b": nrm((num_classes,), 0.1)},
    }


# --------------------------------- main ---------------------------------------

if __name__ == "__main__":
    key = jax.random.PRNGKey(0)
    pkey, xkey = jax.random.split(key)

    B, Cin, H, W = 2, 3, 1, 1          # spatial 1x1 (required by MemoryModule)
    num_classes, base_channels = 10, 16

    params = init_params(pkey, in_channels=Cin, num_classes=num_classes,
                         base_channels=base_channels)
    cfg, mats, rows = prepare_params(params)    # one-time packing / padding
    forward = make_forward(cfg)                 # jitted fused forward

    x = jax.random.normal(xkey, (B, Cin, H, W), dtype=jnp.float32)
    logits, metrics = forward(x, mats, rows)
    jax.block_until_ready(logits)
    jax.block_until_ready(metrics)

    assert logits.shape == (B, num_classes)
    assert len(metrics) == 9
    print("KERNEL_OK")
</pallas_src>

<mosaic_0001>
module attributes {stable_mosaic.version = 11 : i64} {
  func.func @kernel(%arg0: memref<2x128xf32, #tpu.memory_space<vmem>>, %arg1: memref<41x128x128xf32, #tpu.memory_space<vmem>>, %arg2: memref<38x128xf32, #tpu.memory_space<vmem>>, %arg3: memref<2x128xf32, #tpu.memory_space<vmem>>, %arg4: memref<1x128xf32, #tpu.memory_space<vmem>>) attributes {dimension_semantics = [], scalar_prefetch = 0 : i64, scratch_operands = 0 : i64, tpu.core_type = #tpu.core_type<tc>} {
    %0 = tpu.iota {dimensions = array<i32: 1>} : vector<1x128xi32>
    %c0 = arith.constant 0 : index
    %c0_0 = arith.constant 0 : index
    %1 = vector.load %arg0[%c0, %c0_0] : memref<2x128xf32, #tpu.memory_space<vmem>>, vector<2x128xf32>
    %c0_1 = arith.constant 0 : index
    %c0_2 = arith.constant 0 : index
    %c0_3 = arith.constant 0 : index
    %2 = vector.load %arg1[%c0_1, %c0_2, %c0_3] : memref<41x128x128xf32, #tpu.memory_space<vmem>>, vector<1x128x128xf32>
    %3 = vector.shape_cast %2 : vector<1x128x128xf32> to vector<128x128xf32>
    %cst = arith.constant dense<0.000000e+00> : vector<2x128xf32>
    %4 = tpu.matmul %1, %3, %cst {dimension_numbers = #tpu.dot_dimension_numbers<[1], [0], [0], [1], [0, 0, 1, 1], [], []>} : vector<2x128xf32>, vector<128x128xf32>, vector<2x128xf32> -> vector<2x128xf32>
    %c0_4 = arith.constant 0 : index
    %c0_5 = arith.constant 0 : index
    %5 = vector.load %arg2[%c0_4, %c0_5] : memref<38x128xf32, #tpu.memory_space<vmem>>, vector<1x128xf32>
    %6 = vector.broadcast %5 : vector<1x128xf32> to vector<2x128xf32>
    %7 = arith.addf %4, %6 : vector<2x128xf32>
    %cst_6 = arith.constant dense<0.000000e+00> : vector<128xf32>
    %8 = vector.multi_reduction <add>, %7, %cst_6 [0] : vector<2x128xf32> to vector<128xf32>
    %9 = vector.shape_cast %8 : vector<128xf32> to vector<1x128xf32>
    %cst_7 = arith.constant 2.000000e+00 : f32
    %10 = vector.broadcast %cst_7 : f32 to vector<1x128xf32>
    %11 = arith.divf %9, %10 : vector<1x128xf32>
    %12 = vector.broadcast %11 : vector<1x128xf32> to vector<2x128xf32>
    %13 = arith.subf %7, %12 : vector<2x128xf32>
    %14 = arith.mulf %13, %13 : vector<2x128xf32>
    %cst_8 = arith.constant dense<0.000000e+00> : vector<128xf32>
    %15 = vector.multi_reduction <add>, %14, %cst_8 [0] : vector<2x128xf32> to vector<128xf32>
    %16 = vector.shape_cast %15 : vector<128xf32> to vector<1x128xf32>
    %cst_9 = arith.constant 2.000000e+00 : f32
    %17 = vector.broadcast %cst_9 : f32 to vector<1x128xf32>
    %18 = arith.divf %16, %17 : vector<1x128xf32>
    %19 = vector.broadcast %11 : vector<1x128xf32> to vector<2x128xf32>
    %20 = arith.subf %7, %19 : vector<2x128xf32>
    %cst_10 = arith.constant 9.99999974E-6 : f32
    %21 = vector.broadcast %cst_10 : f32 to vector<1x128xf32>
    %22 = arith.addf %18, %21 : vector<1x128xf32>
    %23 = math.rsqrt %22 : vector<1x128xf32>
    %24 = vector.broadcast %23 : vector<1x128xf32> to vector<2x128xf32>
    %25 = arith.mulf %20, %24 : vector<2x128xf32>
    %cst_11 = arith.constant 0.000000e+00 : f32
    %26 = vector.broadcast %cst_11 : f32 to vector<2x128xf32>
    %27 = arith.maximumf %25, %26 : vector<2x128xf32>
    %c1 = arith.constant 1 : index
    %c0_12 = arith.constant 0 : index
    %c0_13 = arith.constant 0 : index
    %28 = vector.load %arg1[%c1, %c0_12, %c0_13] : memref<41x128x128xf32, #tpu.memory_space<vmem>>, vector<1x128x128xf32>
    %29 = vector.shape_cast %28 : vector<1x128x128xf32> to vector<128x128xf32>
    %cst_14 = arith.constant dense<0.000000e+00> : vector<2x128xf32>
    %30 = tpu.matmul %27, %29, %cst_14 {dimension_numbers = #tpu.dot_dimension_numbers<[1], [0], [0], [1], [0, 0, 1, 1], [], []>} : vector<2x128xf32>, vector<128x128xf32>, vector<2x128xf32> -> vector<2x128xf32>
    %c1_15 = arith.constant 1 : index
    %c0_16 = arith.constant 0 : index
    %31 = vector.load %arg2[%c1_15, %c0_16] : memref<38x128xf32, #tpu.memory_space<vmem>>, vector<1x128xf32>
    %32 = vector.broadcast %31 : vector<1x128xf32> to vector<2x128xf32>
    %33 = arith.addf %30, %32 : vector<2x128xf32>
    %cst_17 = arith.constant dense<0.000000e+00> : vector<128xf32>
    %34 = vector.multi_reduction <add>, %33, %cst_17 [0] : vector<2x128xf32> to vector<128xf32>
    %35 = vector.shape_cast %34 : vector<128xf32> to vector<1x128xf32>
    %cst_18 = arith.constant 2.000000e+00 : f32
    %36 = vector.broadcast %cst_18 : f32 to vector<1x128xf32>
    %37 = arith.divf %35, %36 : vector<1x128xf32>
    %38 = vector.broadcast %37 : vector<1x128xf32> to vector<2x128xf32>
    %39 = arith.subf %33, %38 : vector<2x128xf32>
    %40 = arith.mulf %39, %39 : vector<2x128xf32>
    %cst_19 = arith.constant dense<0.000000e+00> : vector<128xf32>
    %41 = vector.multi_reduction <add>, %40, %cst_19 [0] : vector<2x128xf32> to vector<128xf32>
    %42 = vector.shape_cast %41 : vector<128xf32> to vector<1x128xf32>
    %cst_20 = arith.constant 2.000000e+00 : f32
    %43 = vector.broadcast %cst_20 : f32 to vector<1x128xf32>
    %44 = arith.divf %42, %43 : vector<1x128xf32>
    %45 = vector.broadcast %37 : vector<1x128xf32> to vector<2x128xf32>
    %46 = arith.subf %33, %45 : vector<2x128xf32>
    %cst_21 = arith.constant 9.99999974E-6 : f32
    %47 = vector.broadcast %cst_21 : f32 to vector<1x128xf32>
    %48 = arith.addf %44, %47 : vector<1x128xf32>
    %49 = math.rsqrt %48 : vector<1x128xf32>
    %50 = vector.broadcast %49 : vector<1x128xf32> to vector<2x128xf32>
    %51 = arith.mulf %46, %50 : vector<2x128xf32>
    %cst_22 = arith.constant 0.000000e+00 : f32
    %52 = vector.broadcast %cst_22 : f32 to vector<2x128xf32>
    %53 = arith.maximumf %51, %52 : vector<2x128xf32>
    %c2 = arith.constant 2 : index
    %c0_23 = arith.constant 0 : index
    %c0_24 = arith.constant 0 : index
    %54 = vector.load %arg1[%c2, %c0_23, %c0_24] : memref<41x128x128xf32, #tpu.memory_space<vmem>>, vector<1x128x128xf32>
    %55 = vector.shape_cast %54 : vector<1x128x128xf32> to vector<128x128xf32>
    %cst_25 = arith.constant dense<0.000000e+00> : vector<2x128xf32>
    %56 = tpu.matmul %53, %55, %cst_25 {dimension_numbers = #tpu.dot_dimension_numbers<[1], [0], [0], [1], [0, 0, 1, 1], [], []>} : vector<2x128xf32>, vector<128x128xf32>, vector<2x128xf32> -> vector<2x128xf32>
    %c2_26 = arith.constant 2 : index
    %c0_27 = arith.constant 0 : index
    %57 = vector.load %arg2[%c2_26, %c0_27] : memref<38x128xf32, #tpu.memory_space<vmem>>, vector<1x128xf32>
    %58 = vector.broadcast %57 : vector<1x128xf32> to vector<2x128xf32>
    %59 = arith.addf %56, %58 : vector<2x128xf32>
    %cst_28 = arith.constant dense<0.000000e+00> : vector<128xf32>
    %60 = vector.multi_reduction <add>, %59, %cst_28 [0] : vector<2x128xf32> to vector<128xf32>
    %61 = vector.shape_cast %60 : vector<128xf32> to vector<1x128xf32>
    %cst_29 = arith.constant 2.000000e+00 : f32
    %62 = vector.broadcast %cst_29 : f32 to vector<1x128xf32>
    %63 = arith.divf %61, %62 : vector<1x128xf32>
    %64 = vector.broadcast %63 : vector<1x128xf32> to vector<2x128xf32>
    %65 = arith.subf %59, %64 : vector<2x128xf32>
    %66 = arith.mulf %65, %65 : vector<2x128xf32>
    %cst_30 = arith.constant dense<0.000000e+00> : vector<128xf32>
    %67 = vector.multi_reduction <add>, %66, %cst_30 [0] : vector<2x128xf32> to vector<128xf32>
    %68 = vector.shape_cast %67 : vector<128xf32> to vector<1x128xf32>
    %cst_31 = arith.constant 2.000000e+00 : f32
    %69 = vector.broadcast %cst_31 : f32 to vector<1x128xf32>
    %70 = arith.divf %68, %69 : vector<1x128xf32>
    %71 = vector.broadcast %63 : vector<1x128xf32> to vector<2x128xf32>
    %72 = arith.subf %59, %71 : vector<2x128xf32>
    %cst_32 = arith.constant 9.99999974E-6 : f32
    %73 = vector.broadcast %cst_32 : f32 to vector<1x128xf32>
    %74 = arith.addf %70, %73 : vector<1x128xf32>
    %75 = math.rsqrt %74 : vector<1x128xf32>
    %76 = vector.broadcast %75 : vector<1x128xf32> to vector<2x128xf32>
    %77 = arith.mulf %72, %76 : vector<2x128xf32>
    %c3 = arith.constant 3 : index
    %c0_33 = arith.constant 0 : index
    %c0_34 = arith.constant 0 : index
    %78 = vector.load %arg1[%c3, %c0_33, %c0_34] : memref<41x128x128xf32, #tpu.memory_space<vmem>>, vector<1x128x128xf32>
    %79 = vector.shape_cast %78 : vector<1x128x128xf32> to vector<128x128xf32>
    %cst_35 = arith.constant dense<0.000000e+00> : vector<2x128xf32>
    %80 = tpu.matmul %77, %79, %cst_35 {dimension_numbers = #tpu.dot_dimension_numbers<[1], [0], [0], [1], [0, 0, 1, 1], [], []>} : vector<2x128xf32>, vector<128x128xf32>, vector<2x128xf32> -> vector<2x128xf32>
    %cst_36 = arith.constant 0.000000e+00 : f32
    %81 = vector.broadcast %cst_36 : f32 to vector<2x128xf32>
    %82 = arith.maximumf %80, %81 : vector<2x128xf32>
    %c4 = arith.constant 4 : index
    %c0_37 = arith.constant 0 : index
    %c0_38 = arith.constant 0 : index
    %83 = vector.load %arg1[%c4, %c0_37, %c0_38] : memref<41x128x128xf32, #tpu.memory_space<vmem>>, vector<1x128x128xf32>
    %84 = vector.shape_cast %83 : vector<1x128x128xf32> to vector<128x128xf32>
    %cst_39 = arith.constant dense<0.000000e+00> : vector<2x128xf32>
    %85 = tpu.matmul %82, %84, %cst_39 {dimension_numbers = #tpu.dot_dimension_numbers<[1], [0], [0], [1], [0, 0, 1, 1], [], []>} : vector<2x128xf32>, vector<128x128xf32>, vector<2x128xf32> -> vector<2x128xf32>
    %cst_40 = arith.constant 2.000000e+00 : f32
    %86 = vector.broadcast %cst_40 : f32 to vector<2x128xf32>
    %87 = arith.mulf %86, %85 : vector<2x128xf32>
    %88 = arith.negf %87 : vector<2x128xf32>
    %89 = math.exp %88 : vector<2x128xf32>
    %cst_41 = arith.constant 1.000000e+00 : f32
    %90 = vector.broadcast %cst_41 : f32 to vector<2x128xf32>
    %91 = arith.addf %90, %89 : vector<2x128xf32>
    %92 = arith.divf %90, %91 : vector<2x128xf32>
    %93 = arith.mulf %77, %92 : vector<2x128xf32>
    %c16_i32 = arith.constant 16 : i32
    %94 = vector.broadcast %c16_i32 : i32 to vector<1x128xi32>
    %95 = arith.cmpi slt, %0, %94 : vector<1x128xi32>
    %cst_42 = arith.constant dense<0.000000e+00> : vector<2xf32>
    %96 = vector.multi_reduction <add>, %93, %cst_42 [1] : vector<2x128xf32> to vector<2xf32>
    %97 = vector.shape_cast %96 : vector<2xf32> to vector<2x1xf32>
    %cst_43 = arith.constant 6.250000e-02 : f32
    %98 = vector.broadcast %cst_43 : f32 to vector<2x1xf32>
    %99 = arith.mulf %97, %98 : vector<2x1xf32>
    %cst_44 = arith.constant -1.000000e+30 : f32
    %100 = vector.shape_cast %95 : vector<1x128xi1> to vector<1x128xi1>
    %101 = vector.broadcast %100 : vector<1x128xi1> to vector<2x128xi1>
    %102 = vector.broadcast %cst_44 : f32 to vector<2x128xf32>
    %103 = arith.select %101, %93, %102 : vector<2x128xi1>, vector<2x128xf32>
    %cst_45 = arith.constant dense<0xFF800000> : vector<2xf32>
    %104 = vector.multi_reduction <maximumf>, %103, %cst_45 [1] : vector<2x128xf32> to vector<2xf32>
    %105 = vector.shape_cast %104 : vector<2xf32> to vector<2x1xf32>
    %c8 = arith.constant 8 : index
    %c0_46 = arith.constant 0 : index
    %106 = vector.load %arg2[%c8, %c0_46] : memref<38x128xf32, #tpu.memory_space<vmem>>, vector<1x128xf32>
    %107 = vector.broadcast %99 : vector<2x1xf32> to vector<2x128xf32>
    %108 = vector.broadcast %106 : vector<1x128xf32> to vector<2x128xf32>
    %109 = arith.mulf %107, %108 : vector<2x128xf32>
    %c9 = arith.constant 9 : index
    %c0_47 = arith.constant 0 : index
    %110 = vector.load %arg2[%c9, %c0_47] : memref<38x128xf32, #tpu.memory_space<vmem>>, vector<1x128xf32>
    %111 = vector.broadcast %105 : vector<2x1xf32> to vector<2x128xf32>
    %112 = vector.broadcast %110 : vector<1x128xf32> to vector<2x128xf32>
    %113 = arith.mulf %111, %112 : vector<2x128xf32>
    %114 = arith.addf %109, %113 : vector<2x128xf32>
    %c10 = arith.constant 10 : index
    %c0_48 = arith.constant 0 : index
    %115 = vector.load %arg2[%c10, %c0_48] : memref<38x128xf32, #tpu.memory_space<vmem>>, vector<1x128xf32>
    %116 = vector.broadcast %115 : vector<1x128xf32> to vector<2x128xf32>
    %117 = arith.addf %114, %116 : vector<2x128xf32>
    %118 = arith.negf %117 : vector<2x128xf32>
    %119 = math.exp %118 : vector<2x128xf32>
    %cst_49 = arith.constant 1.000000e+00 : f32
    %120 = vector.broadcast %cst_49 : f32 to vector<2x128xf32>
    %121 = arith.addf %120, %119 : vector<2x128xf32>
    %122 = arith.divf %120, %121 : vector<2x128xf32>
    %123 = arith.mulf %93, %122 : vector<2x128xf32>
    %c7 = arith.constant 7 : index
    %c0_50 = arith.constant 0 : index
    %c0_51 = arith.constant 0 : index
    %124 = vector.load %arg1[%c7, %c0_50, %c0_51] : memref<41x128x128xf32, #tpu.memory_space<vmem>>, vector<1x128x128xf32>
    %125 = vector.shape_cast %124 : vector<1x128x128xf32> to vector<128x128xf32>
    %cst_52 = arith.constant dense<0.000000e+00> : vector<2x128xf32>
    %126 = tpu.matmul %123, %125, %cst_52 {dimension_numbers = #tpu.dot_dimension_numbers<[1], [0], [0], [1], [0, 0, 1, 1], [], []>} : vector<2x128xf32>, vector<128x128xf32>, vector<2x128xf32> -> vector<2x128xf32>
    %c3_53 = arith.constant 3 : index
    %c0_54 = arith.constant 0 : index
    %127 = vector.load %arg2[%c3_53, %c0_54] : memref<38x128xf32, #tpu.memory_space<vmem>>, vector<1x128xf32>
    %128 = vector.broadcast %127 : vector<1x128xf32> to vector<2x128xf32>
    %129 = arith.addf %126, %128 : vector<2x128xf32>
    %cst_55 = arith.constant 0.000000e+00 : f32
    %130 = vector.broadcast %cst_55 : f32 to vector<2x128xf32>
    %131 = arith.maximumf %129, %130 : vector<2x128xf32>
    %c8_56 = arith.constant 8 : index
    %c0_57 = arith.constant 0 : index
    %c0_58 = arith.constant 0 : index
    %132 = vector.load %arg1[%c8_56, %c0_57, %c0_58] : memref<41x128x128xf32, #tpu.memory_space<vmem>>, vector<1x128x128xf32>
    %133 = vector.shape_cast %132 : vector<1x128x128xf32> to vector<128x128xf32>
    %cst_59 = arith.constant dense<0.000000e+00> : vector<2x128xf32>
    %134 = tpu.matmul %131, %133, %cst_59 {dimension_numbers = #tpu.dot_dimension_numbers<[1], [0], [0], [1], [0, 0, 1, 1], [], []>} : vector<2x128xf32>, vector<128x128xf32>, vector<2x128xf32> -> vector<2x128xf32>
    %c4_60 = arith.constant 4 : index
    %c0_61 = arith.constant 0 : index
    %135 = vector.load %arg2[%c4_60, %c0_61] : memref<38x128xf32, #tpu.memory_space<vmem>>, vector<1x128xf32>
    %136 = vector.broadcast %135 : vector<1x128xf32> to vector<2x128xf32>
    %137 = arith.addf %134, %136 : vector<2x128xf32>
    %c5 = arith.constant 5 : index
    %c0_62 = arith.constant 0 : index
    %c0_63 = arith.constant 0 : index
    %138 = vector.load %arg1[%c5, %c0_62, %c0_63] : memref<41x128x128xf32, #tpu.memory_space<vmem>>, vector<1x128x128xf32>
    %139 = vector.shape_cast %138 : vector<1x128x128xf32> to vector<128x128xf32>
    %cst_64 = arith.constant dense<0.000000e+00> : vector<2x128xf32>
    %140 = tpu.matmul %137, %139, %cst_64 {dimension_numbers = #tpu.dot_dimension_numbers<[1], [0], [0], [1], [0, 0, 1, 1], [], []>} : vector<2x128xf32>, vector<128x128xf32>, vector<2x128xf32> -> vector<2x128xf32>
    %cst_65 = arith.constant 2.500000e-01 : f32
    %141 = vector.broadcast %cst_65 : f32 to vector<2x128xf32>
    %142 = arith.mulf %140, %141 : vector<2x128xf32>
    %c64_i32 = arith.constant 64 : i32
    %143 = vector.broadcast %c64_i32 : i32 to vector<1x128xi32>
    %144 = arith.cmpi slt, %0, %143 : vector<1x128xi32>
    %cst_66 = arith.constant -1.000000e+30 : f32
    %145 = vector.shape_cast %144 : vector<1x128xi1> to vector<1x128xi1>
    %146 = vector.broadcast %145 : vector<1x128xi1> to vector<2x128xi1>
    %147 = vector.broadcast %cst_66 : f32 to vector<2x128xf32>
    %148 = arith.select %146, %142, %147 : vector<2x128xi1>, vector<2x128xf32>
    %cst_67 = arith.constant dense<0xFF800000> : vector<2xf32>
    %149 = vector.multi_reduction <maximumf>, %148, %cst_67 [1] : vector<2x128xf32> to vector<2xf32>
    %150 = vector.shape_cast %149 : vector<2xf32> to vector<2x1xf32>
    %151 = vector.broadcast %150 : vector<2x1xf32> to vector<2x128xf32>
    %152 = arith.subf %148, %151 : vector<2x128xf32>
    %153 = math.exp %152 : vector<2x128xf32>
    %cst_68 = arith.constant dense<0.000000e+00> : vector<2xf32>
    %154 = vector.multi_reduction <add>, %153, %cst_68 [1] : vector<2x128xf32> to vector<2xf32>
    %155 = vector.shape_cast %154 : vector<2xf32> to vector<2x1xf32>
    %156 = tpu.reciprocal %155 {approx = true} : vector<2x1xf32> -> vector<2x1xf32>
    %157 = vector.broadcast %156 : vector<2x1xf32> to vector<2x128xf32>
    %158 = arith.mulf %153, %157 : vector<2x128xf32>
    %c6 = arith.constant 6 : index
    %c0_69 = arith.constant 0 : index
    %c0_70 = arith.constant 0 : index
    %159 = vector.load %arg1[%c6, %c0_69, %c0_70] : memref<41x128x128xf32, #tpu.memory_space<vmem>>, vector<1x128x128xf32>
    %160 = vector.shape_cast %159 : vector<1x128x128xf32> to vector<128x128xf32>
    %cst_71 = arith.constant dense<0.000000e+00> : vector<2x128xf32>
    %161 = tpu.matmul %158, %160, %cst_71 {dimension_numbers = #tpu.dot_dimension_numbers<[1], [0], [0], [1], [0, 0, 1, 1], [], []>} : vector<2x128xf32>, vector<128x128xf32>, vector<2x128xf32> -> vector<2x128xf32>
    %c9_72 = arith.constant 9 : index
    %c0_73 = arith.constant 0 : index
    %c0_74 = arith.constant 0 : index
    %162 = vector.load %arg1[%c9_72, %c0_73, %c0_74] : memref<41x128x128xf32, #tpu.memory_space<vmem>>, vector<1x128x128xf32>
    %163 = vector.shape_cast %162 : vector<1x128x128xf32> to vector<128x128xf32>
    %cst_75 = arith.constant dense<0.000000e+00> : vector<2x128xf32>
    %164 = tpu.matmul %123, %163, %cst_75 {dimension_numbers = #tpu.dot_dimension_numbers<[1], [0], [0], [1], [0, 0, 1, 1], [], []>} : vector<2x128xf32>, vector<128x128xf32>, vector<2x128xf32> -> vector<2x128xf32>
    %c10_76 = arith.constant 10 : index
    %c0_77 = arith.constant 0 : index
    %c0_78 = arith.constant 0 : index
    %165 = vector.load %arg1[%c10_76, %c0_77, %c0_78] : memref<41x128x128xf32, #tpu.memory_space<vmem>>, vector<1x128x128xf32>
    %166 = vector.shape_cast %165 : vector<1x128x128xf32> to vector<128x128xf32>
    %cst_79 = arith.constant dense<0.000000e+00> : vector<2x128xf32>
    %167 = tpu.matmul %161, %166, %cst_79 {dimension_numbers = #tpu.dot_dimension_numbers<[1], [0], [0], [1], [0, 0, 1, 1], [], []>} : vector<2x128xf32>, vector<128x128xf32>, vector<2x128xf32> -> vector<2x128xf32>
    %168 = arith.addf %164, %167 : vector<2x128xf32>
    %c5_80 = arith.constant 5 : index
    %c0_81 = arith.constant 0 : index
    %169 = vector.load %arg2[%c5_80, %c0_81] : memref<38x128xf32, #tpu.memory_space<vmem>>, vector<1x128xf32>
    %170 = vector.broadcast %169 : vector<1x128xf32> to vector<2x128xf32>
    %171 = arith.addf %168, %170 : vector<2x128xf32>
    %172 = arith.negf %171 : vector<2x128xf32>
    %173 = math.exp %172 : vector<2x128xf32>
    %cst_82 = arith.constant 1.000000e+00 : f32
    %174 = vector.broadcast %cst_82 : f32 to vector<2x128xf32>
    %175 = arith.addf %174, %173 : vector<2x128xf32>
    %176 = arith.divf %174, %175 : vector<2x128xf32>
    %177 = arith.mulf %176, %161 : vector<2x128xf32>
    %cst_83 = arith.constant 1.000000e+00 : f32
    %178 = vector.broadcast %cst_83 : f32 to vector<2x128xf32>
    %179 = arith.subf %178, %176 : vector<2x128xf32>
    %180 = arith.mulf %179, %123 : vector<2x128xf32>
    %181 = arith.addf %177, %180 : vector<2x128xf32>
    %182 = vector.shape_cast %158 : vector<2x128xf32> to vector<1x2x128xf32>
    %cst_84 = arith.constant dense<0.000000e+00> : vector<1xf32>
    %183 = vector.multi_reduction <add>, %182, %cst_84 [1, 2] : vector<1x2x128xf32> to vector<1xf32>
    %184 = vector.shape_cast %183 : vector<1xf32> to vector<1x1x1xf32>
    %185 = vector.extract %184[0, 0, 0] : f32 from vector<1x1x1xf32>
    %186 = vector.broadcast %185 : f32 to vector<1x1xf32>
    %cst_85 = arith.constant 7.812500e-03 : f32
    %187 = vector.broadcast %cst_85 : f32 to vector<1x1xf32>
    %188 = arith.mulf %186, %187 : vector<1x1xf32>
    %cst_86 = arith.constant 1.000000e-01 : f32
    %189 = vector.broadcast %cst_86 : f32 to vector<2x128xf32>
    %190 = arith.mulf %189, %181 : vector<2x128xf32>
    %cst_87 = arith.constant 1.000000e+00 : f32
    %191 = vector.broadcast %cst_87 : f32 to vector<2x128xf32>
    %192 = arith.cmpf oge, %190, %191 : vector<2x128xf32>
    %193 = arith.extui %192 : vector<2x128xi1> to vector<2x128xi32>
    %194 = arith.sitofp %193 : vector<2x128xi32> to vector<2x128xf32>
    %195 = vector.shape_cast %194 : vector<2x128xf32> to vector<1x2x128xf32>
    %cst_88 = arith.constant dense<0.000000e+00> : vector<1xf32>
    %196 = vector.multi_reduction <add>, %195, %cst_88 [1, 2] : vector<1x2x128xf32> to vector<1xf32>
    %197 = vector.shape_cast %196 : vector<1xf32> to vector<1x1x1xf32>
    %198 = vector.extract %197[0, 0, 0] : f32 from vector<1x1x1xf32>
    %199 = vector.broadcast %198 : f32 to vector<1x1xf32>
    %cst_89 = arith.constant 3.125000e-02 : f32
    %200 = vector.broadcast %cst_89 : f32 to vector<1x1xf32>
    %201 = arith.mulf %199, %200 : vector<1x1xf32>
    %c11 = arith.constant 11 : index
    %c0_90 = arith.constant 0 : index
    %c0_91 = arith.constant 0 : index
    %202 = vector.load %arg1[%c11, %c0_90, %c0_91] : memref<41x128x128xf32, #tpu.memory_space<vmem>>, vector<1x128x128xf32>
    %203 = vector.shape_cast %202 : vector<1x128x128xf32> to vector<128x128xf32>
    %cst_92 = arith.constant dense<0.000000e+00> : vector<2x128xf32>
    %204 = tpu.matmul %194, %203, %cst_92 {dimension_numbers = #tpu.dot_dimension_numbers<[1], [0], [0], [1], [0, 0, 1, 1], [], []>} : vector<2x128xf32>, vector<128x128xf32>, vector<2x128xf32> -> vector<2x128xf32>
    %c6_93 = arith.constant 6 : index
    %c0_94 = arith.constant 0 : index
    %205 = vector.load %arg2[%c6_93, %c0_94] : memref<38x128xf32, #tpu.memory_space<vmem>>, vector<1x128xf32>
    %206 = vector.broadcast %205 : vector<1x128xf32> to vector<2x128xf32>
    %207 = arith.addf %204, %206 : vector<2x128xf32>
    %cst_95 = arith.constant dense<0.000000e+00> : vector<128xf32>
    %208 = vector.multi_reduction <add>, %207, %cst_95 [0] : vector<2x128xf32> to vector<128xf32>
    %209 = vector.shape_cast %208 : vector<128xf32> to vector<1x128xf32>
    %cst_96 = arith.constant 2.000000e+00 : f32
    %210 = vector.broadcast %cst_96 : f32 to vector<1x128xf32>
    %211 = arith.divf %209, %210 : vector<1x128xf32>
    %212 = vector.broadcast %211 : vector<1x128xf32> to vector<2x128xf32>
    %213 = arith.subf %207, %212 : vector<2x128xf32>
    %214 = arith.mulf %213, %213 : vector<2x128xf32>
    %cst_97 = arith.constant dense<0.000000e+00> : vector<128xf32>
    %215 = vector.multi_reduction <add>, %214, %cst_97 [0] : vector<2x128xf32> to vector<128xf32>
    %216 = vector.shape_cast %215 : vector<128xf32> to vector<1x128xf32>
    %cst_98 = arith.constant 2.000000e+00 : f32
    %217 = vector.broadcast %cst_98 : f32 to vector<1x128xf32>
    %218 = arith.divf %216, %217 : vector<1x128xf32>
    %219 = vector.broadcast %211 : vector<1x128xf32> to vector<2x128xf32>
    %220 = arith.subf %207, %219 : vector<2x128xf32>
    %cst_99 = arith.constant 9.99999974E-6 : f32
    %221 = vector.broadcast %cst_99 : f32 to vector<1x128xf32>
    %222 = arith.addf %218, %221 : vector<1x128xf32>
    %223 = math.rsqrt %222 : vector<1x128xf32>
    %224 = vector.broadcast %223 : vector<1x128xf32> to vector<2x128xf32>
    %225 = arith.mulf %220, %224 : vector<2x128xf32>
    %cst_100 = arith.constant 0.000000e+00 : f32
    %226 = vector.broadcast %cst_100 : f32 to vector<2x128xf32>
    %227 = arith.maximumf %225, %226 : vector<2x128xf32>
    %c12 = arith.constant 12 : index
    %c0_101 = arith.constant 0 : index
    %c0_102 = arith.constant 0 : index
    %228 = vector.load %arg1[%c12, %c0_101, %c0_102] : memref<41x128x128xf32, #tpu.memory_space<vmem>>, vector<1x128x128xf32>
    %229 = vector.shape_cast %228 : vector<1x128x128xf32> to vector<128x128xf32>
    %cst_103 = arith.constant dense<0.000000e+00> : vector<2x128xf32>
    %230 = tpu.matmul %227, %229, %cst_103 {dimension_numbers = #tpu.dot_dimension_numbers<[1], [0], [0], [1], [0, 0, 1, 1], [], []>} : vector<2x128xf32>, vector<128x128xf32>, vector<2x128xf32> -> vector<2x128xf32>
    %c7_104 = arith.constant 7 : index
    %c0_105 = arith.constant 0 : index
    %231 = vector.load %arg2[%c7_104, %c0_105] : memref<38x128xf32, #tpu.memory_space<vmem>>, vector<1x128xf32>
    %232 = vector.broadcast %231 : vector<1x128xf32> to vector<2x128xf32>
    %233 = arith.addf %230, %232 : vector<2x128xf32>
    %c11_106 = arith.constant 11 : index
    %c0_107 = arith.constant 0 : index
    %234 = vector.load %arg2[%c11_106, %c0_107] : memref<38x128xf32, #tpu.memory_space<vmem>>, vector<1x128xf32>
    %235 = vector.broadcast %234 : vector<1x128xf32> to vector<2x128xf32>
    %236 = arith.mulf %233, %235 : vector<2x128xf32>
    %cst_108 = arith.constant dense<0.000000e+00> : vector<2xf32>
    %237 = vector.multi_reduction <add>, %236, %cst_108 [1] : vector<2x128xf32> to vector<2xf32>
    %238 = vector.shape_cast %237 : vector<2xf32> to vector<2x1xf32>
    %c12_109 = arith.constant 12 : index
    %c0_110 = arith.constant 0 : index
    %239 = vector.load %arg2[%c12_109, %c0_110] : memref<38x128xf32, #tpu.memory_space<vmem>>, vector<1x128xf32>
    %240 = vector.broadcast %238 : vector<2x1xf32> to vector<2x128xf32>
    %241 = vector.broadcast %239 : vector<1x128xf32> to vector<2x128xf32>
    %242 = arith.addf %240, %241 : vector<2x128xf32>
    %243 = arith.negf %242 : vector<2x128xf32>
    %244 = math.exp %243 : vector<2x128xf32>
    %cst_111 = arith.constant 1.000000e+00 : f32
    %245 = vector.broadcast %cst_111 : f32 to vector<2x128xf32>
    %246 = arith.addf %245, %244 : vector<2x128xf32>
    %247 = arith.divf %245, %246 : vector<2x128xf32>
    %248 = vector.shape_cast %247 : vector<2x128xf32> to vector<1x2x128xf32>
    %cst_112 = arith.constant dense<0.000000e+00> : vector<1xf32>
    %249 = vector.multi_reduction <add>, %248, %cst_112 [1, 2] : vector<1x2x128xf32> to vector<1xf32>
    %250 = vector.shape_cast %249 : vector<1xf32> to vector<1x1x1xf32>
    %251 = vector.extract %250[0, 0, 0] : f32 from vector<1x1x1xf32>
    %252 = vector.broadcast %251 : f32 to vector<1x1xf32>
    %cst_113 = arith.constant 3.906250e-03 : f32
    %253 = vector.broadcast %cst_113 : f32 to vector<1x1xf32>
    %254 = arith.mulf %252, %253 : vector<1x1xf32>
    %255 = arith.addf %194, %27 : vector<2x128xf32>
    %cst_114 = arith.constant 0.000000e+00 : f32
    %256 = vector.broadcast %cst_114 : f32 to vector<2x128xf32>
    %257 = arith.maximumf %255, %256 : vector<2x128xf32>
    %c26 = arith.constant 26 : index
    %c0_115 = arith.constant 0 : index
    %c0_116 = arith.constant 0 : index
    %258 = vector.load %arg1[%c26, %c0_115, %c0_116] : memref<41x128x128xf32, #tpu.memory_space<vmem>>, vector<1x128x128xf32>
    %259 = vector.shape_cast %258 : vector<1x128x128xf32> to vector<128x128xf32>
    %cst_117 = arith.constant dense<0.000000e+00> : vector<2x128xf32>
    %260 = tpu.matmul %257, %259, %cst_117 {dimension_numbers = #tpu.dot_dimension_numbers<[1], [0], [0], [1], [0, 0, 1, 1], [], []>} : vector<2x128xf32>, vector<128x128xf32>, vector<2x128xf32> -> vector<2x128xf32>
    %cst_118 = arith.constant dense<0.000000e+00> : vector<128xf32>
    %261 = vector.multi_reduction <add>, %260, %cst_118 [0] : vector<2x128xf32> to vector<128xf32>
    %262 = vector.shape_cast %261 : vector<128xf32> to vector<1x128xf32>
    %cst_119 = arith.constant 2.000000e+00 : f32
    %263 = vector.broadcast %cst_119 : f32 to vector<1x128xf32>
    %264 = arith.divf %262, %263 : vector<1x128xf32>
    %265 = vector.broadcast %264 : vector<1x128xf32> to vector<2x128xf32>
    %266 = arith.subf %260, %265 : vector<2x128xf32>
    %267 = arith.mulf %266, %266 : vector<2x128xf32>
    %cst_120 = arith.constant dense<0.000000e+00> : vector<128xf32>
    %268 = vector.multi_reduction <add>, %267, %cst_120 [0] : vector<2x128xf32> to vector<128xf32>
    %269 = vector.shape_cast %268 : vector<128xf32> to vector<1x128xf32>
    %cst_121 = arith.constant 2.000000e+00 : f32
    %270 = vector.broadcast %cst_121 : f32 to vector<1x128xf32>
    %271 = arith.divf %269, %270 : vector<1x128xf32>
    %272 = vector.broadcast %264 : vector<1x128xf32> to vector<2x128xf32>
    %273 = arith.subf %260, %272 : vector<2x128xf32>
    %cst_122 = arith.constant 9.99999974E-6 : f32
    %274 = vector.broadcast %cst_122 : f32 to vector<1x128xf32>
    %275 = arith.addf %271, %274 : vector<1x128xf32>
    %276 = math.rsqrt %275 : vector<1x128xf32>
    %277 = vector.broadcast %276 : vector<1x128xf32> to vector<2x128xf32>
    %278 = arith.mulf %273, %277 : vector<2x128xf32>
    %c14 = arith.constant 14 : index
    %c0_123 = arith.constant 0 : index
    %c0_124 = arith.constant 0 : index
    %279 = vector.load %arg1[%c14, %c0_123, %c0_124] : memref<41x128x128xf32, #tpu.memory_space<vmem>>, vector<1x128x128xf32>
    %280 = vector.shape_cast %279 : vector<1x128x128xf32> to vector<128x128xf32>
    %cst_125 = arith.constant dense<0.000000e+00> : vector<2x128xf32>
    %281 = tpu.matmul %257, %280, %cst_125 {dimension_numbers = #tpu.dot_dimension_numbers<[1], [0], [0], [1], [0, 0, 1, 1], [], []>} : vector<2x128xf32>, vector<128x128xf32>, vector<2x128xf32> -> vector<2x128xf32>
    %c13 = arith.constant 13 : index
    %c0_126 = arith.constant 0 : index
    %282 = vector.load %arg2[%c13, %c0_126] : memref<38x128xf32, #tpu.memory_space<vmem>>, vector<1x128xf32>
    %283 = vector.broadcast %282 : vector<1x128xf32> to vector<2x128xf32>
    %284 = arith.addf %281, %283 : vector<2x128xf32>
    %cst_127 = arith.constant dense<0.000000e+00> : vector<128xf32>
    %285 = vector.multi_reduction <add>, %284, %cst_127 [0] : vector<2x128xf32> to vector<128xf32>
    %286 = vector.shape_cast %285 : vector<128xf32> to vector<1x128xf32>
    %cst_128 = arith.constant 2.000000e+00 : f32
    %287 = vector.broadcast %cst_128 : f32 to vector<1x128xf32>
    %288 = arith.divf %286, %287 : vector<1x128xf32>
    %289 = vector.broadcast %288 : vector<1x128xf32> to vector<2x128xf32>
    %290 = arith.subf %284, %289 : vector<2x128xf32>
    %291 = arith.mulf %290, %290 : vector<2x128xf32>
    %cst_129 = arith.constant dense<0.000000e+00> : vector<128xf32>
    %292 = vector.multi_reduction <add>, %291, %cst_129 [0] : vector<2x128xf32> to vector<128xf32>
    %293 = vector.shape_cast %292 : vector<128xf32> to vector<1x128xf32>
    %cst_130 = arith.constant 2.000000e+00 : f32
    %294 = vector.broadcast %cst_130 : f32 to vector<1x128xf32>
    %295 = arith.divf %293, %294 : vector<1x128xf32>
    %296 = vector.broadcast %288 : vector<1x128xf32> to vector<2x128xf32>
    %297 = arith.subf %284, %296 : vector<2x128xf32>
    %cst_131 = arith.constant 9.99999974E-6 : f32
    %298 = vector.broadcast %cst_131 : f32 to vector<1x128xf32>
    %299 = arith.addf %295, %298 : vector<1x128xf32>
    %300 = math.rsqrt %299 : vector<1x128xf32>
    %301 = vector.broadcast %300 : vector<1x128xf32> to vector<2x128xf32>
    %302 = arith.mulf %297, %301 : vector<2x128xf32>
    %cst_132 = arith.constant 0.000000e+00 : f32
    %303 = vector.broadcast %cst_132 : f32 to vector<2x128xf32>
    %304 = arith.maximumf %302, %303 : vector<2x128xf32>
    %c15 = arith.constant 15 : index
    %c0_133 = arith.constant 0 : index
    %c0_134 = arith.constant 0 : index
    %305 = vector.load %arg1[%c15, %c0_133, %c0_134] : memref<41x128x128xf32, #tpu.memory_space<vmem>>, vector<1x128x128xf32>
    %306 = vector.shape_cast %305 : vector<1x128x128xf32> to vector<128x128xf32>
    %cst_135 = arith.constant dense<0.000000e+00> : vector<2x128xf32>
    %307 = tpu.matmul %304, %306, %cst_135 {dimension_numbers = #tpu.dot_dimension_numbers<[1], [0], [0], [1], [0, 0, 1, 1], [], []>} : vector<2x128xf32>, vector<128x128xf32>, vector<2x128xf32> -> vector<2x128xf32>
    %c14_136 = arith.constant 14 : index
    %c0_137 = arith.constant 0 : index
    %308 = vector.load %arg2[%c14_136, %c0_137] : memref<38x128xf32, #tpu.memory_space<vmem>>, vector<1x128xf32>
    %309 = vector.broadcast %308 : vector<1x128xf32> to vector<2x128xf32>
    %310 = arith.addf %307, %309 : vector<2x128xf32>
    %cst_138 = arith.constant dense<0.000000e+00> : vector<128xf32>
    %311 = vector.multi_reduction <add>, %310, %cst_138 [0] : vector<2x128xf32> to vector<128xf32>
    %312 = vector.shape_cast %311 : vector<128xf32> to vector<1x128xf32>
    %cst_139 = arith.constant 2.000000e+00 : f32
    %313 = vector.broadcast %cst_139 : f32 to vector<1x128xf32>
    %314 = arith.divf %312, %313 : vector<1x128xf32>
    %315 = vector.broadcast %314 : vector<1x128xf32> to vector<2x128xf32>
    %316 = arith.subf %310, %315 : vector<2x128xf32>
    %317 = arith.mulf %316, %316 : vector<2x128xf32>
    %cst_140 = arith.constant dense<0.000000e+00> : vector<128xf32>
    %318 = vector.multi_reduction <add>, %317, %cst_140 [0] : vector<2x128xf32> to vector<128xf32>
    %319 = vector.shape_cast %318 : vector<128xf32> to vector<1x128xf32>
    %cst_141 = arith.constant 2.000000e+00 : f32
    %320 = vector.broadcast %cst_141 : f32 to vector<1x128xf32>
    %321 = arith.divf %319, %320 : vector<1x128xf32>
    %322 = vector.broadcast %314 : vector<1x128xf32> to vector<2x128xf32>
    %323 = arith.subf %310, %322 : vector<2x128xf32>
    %cst_142 = arith.constant 9.99999974E-6 : f32
    %324 = vector.broadcast %cst_142 : f32 to vector<1x128xf32>
    %325 = arith.addf %321, %324 : vector<1x128xf32>
    %326 = math.rsqrt %325 : vector<1x128xf32>
    %327 = vector.broadcast %326 : vector<1x128xf32> to vector<2x128xf32>
    %328 = arith.mulf %323, %327 : vector<2x128xf32>
    %c16 = arith.constant 16 : index
    %c0_143 = arith.constant 0 : index
    %c0_144 = arith.constant 0 : index
    %329 = vector.load %arg1[%c16, %c0_143, %c0_144] : memref<41x128x128xf32, #tpu.memory_space<vmem>>, vector<1x128x128xf32>
    %330 = vector.shape_cast %329 : vector<1x128x128xf32> to vector<128x128xf32>
    %cst_145 = arith.constant dense<0.000000e+00> : vector<2x128xf32>
    %331 = tpu.matmul %328, %330, %cst_145 {dimension_numbers = #tpu.dot_dimension_numbers<[1], [0], [0], [1], [0, 0, 1, 1], [], []>} : vector<2x128xf32>, vector<128x128xf32>, vector<2x128xf32> -> vector<2x128xf32>
    %cst_146 = arith.constant 0.000000e+00 : f32
    %332 = vector.broadcast %cst_146 : f32 to vector<2x128xf32>
    %333 = arith.maximumf %331, %332 : vector<2x128xf32>
    %c17 = arith.constant 17 : index
    %c0_147 = arith.constant 0 : index
    %c0_148 = arith.constant 0 : index
    %334 = vector.load %arg1[%c17, %c0_147, %c0_148] : memref<41x128x128xf32, #tpu.memory_space<vmem>>, vector<1x128x128xf32>
    %335 = vector.shape_cast %334 : vector<1x128x128xf32> to vector<128x128xf32>
    %cst_149 = arith.constant dense<0.000000e+00> : vector<2x128xf32>
    %336 = tpu.matmul %333, %335, %cst_149 {dimension_numbers = #tpu.dot_dimension_numbers<[1], [0], [0], [1], [0, 0, 1, 1], [], []>} : vector<2x128xf32>, vector<128x128xf32>, vector<2x128xf32> -> vector<2x128xf32>
    %cst_150 = arith.constant 2.000000e+00 : f32
    %337 = vector.broadcast %cst_150 : f32 to vector<2x128xf32>
    %338 = arith.mulf %337, %336 : vector<2x128xf32>
    %339 = arith.negf %338 : vector<2x128xf32>
    %340 = math.exp %339 : vector<2x128xf32>
    %cst_151 = arith.constant 1.000000e+00 : f32
    %341 = vector.broadcast %cst_151 : f32 to vector<2x128xf32>
    %342 = arith.addf %341, %340 : vector<2x128xf32>
    %343 = arith.divf %341, %342 : vector<2x128xf32>
    %344 = arith.mulf %328, %343 : vector<2x128xf32>
    %c32_i32 = arith.constant 32 : i32
    %345 = vector.broadcast %c32_i32 : i32 to vector<1x128xi32>
    %346 = arith.cmpi slt, %0, %345 : vector<1x128xi32>
    %cst_152 = arith.constant dense<0.000000e+00> : vector<2xf32>
    %347 = vector.multi_reduction <add>, %344, %cst_152 [1] : vector<2x128xf32> to vector<2xf32>
    %348 = vector.shape_cast %347 : vector<2xf32> to vector<2x1xf32>
    %cst_153 = arith.constant 3.125000e-02 : f32
    %349 = vector.broadcast %cst_153 : f32 to vector<2x1xf32>
    %350 = arith.mulf %348, %349 : vector<2x1xf32>
    %cst_154 = arith.constant -1.000000e+30 : f32
    %351 = vector.shape_cast %346 : vector<1x128xi1> to vector<1x128xi1>
    %352 = vector.broadcast %351 : vector<1x128xi1> to vector<2x128xi1>
    %353 = vector.broadcast %cst_154 : f32 to vector<2x128xf32>
    %354 = arith.select %352, %344, %353 : vector<2x128xi1>, vector<2x128xf32>
    %cst_155 = arith.constant dense<0xFF800000> : vector<2xf32>
    %355 = vector.multi_reduction <maximumf>, %354, %cst_155 [1] : vector<2x128xf32> to vector<2xf32>
    %356 = vector.shape_cast %355 : vector<2xf32> to vector<2x1xf32>
    %c20 = arith.constant 20 : index
    %c0_156 = arith.constant 0 : index
    %357 = vector.load %arg2[%c20, %c0_156] : memref<38x128xf32, #tpu.memory_space<vmem>>, vector<1x128xf32>
    %358 = vector.broadcast %350 : vector<2x1xf32> to vector<2x128xf32>
    %359 = vector.broadcast %357 : vector<1x128xf32> to vector<2x128xf32>
    %360 = arith.mulf %358, %359 : vector<2x128xf32>
    %c21 = arith.constant 21 : index
    %c0_157 = arith.constant 0 : index
    %361 = vector.load %arg2[%c21, %c0_157] : memref<38x128xf32, #tpu.memory_space<vmem>>, vector<1x128xf32>
    %362 = vector.broadcast %356 : vector<2x1xf32> to vector<2x128xf32>
    %363 = vector.broadcast %361 : vector<1x128xf32> to vector<2x128xf32>
    %364 = arith.mulf %362, %363 : vector<2x128xf32>
    %365 = arith.addf %360, %364 : vector<2x128xf32>
    %c22 = arith.constant 22 : index
    %c0_158 = arith.constant 0 : index
    %366 = vector.load %arg2[%c22, %c0_158] : memref<38x128xf32, #tpu.memory_space<vmem>>, vector<1x128xf32>
    %367 = vector.broadcast %366 : vector<1x128xf32> to vector<2x128xf32>
    %368 = arith.addf %365, %367 : vector<2x128xf32>
    %369 = arith.negf %368 : vector<2x128xf32>
    %370 = math.exp %369 : vector<2x128xf32>
    %cst_159 = arith.constant 1.000000e+00 : f32
    %371 = vector.broadcast %cst_159 : f32 to vector<2x128xf32>
    %372 = arith.addf %371, %370 : vector<2x128xf32>
    %373 = arith.divf %371, %372 : vector<2x128xf32>
    %374 = arith.mulf %344, %373 : vector<2x128xf32>
    %c20_160 = arith.constant 20 : index
    %c0_161 = arith.constant 0 : index
    %c0_162 = arith.constant 0 : index
    %375 = vector.load %arg1[%c20_160, %c0_161, %c0_162] : memref<41x128x128xf32, #tpu.memory_space<vmem>>, vector<1x128x128xf32>
    %376 = vector.shape_cast %375 : vector<1x128x128xf32> to vector<128x128xf32>
    %cst_163 = arith.constant dense<0.000000e+00> : vector<2x128xf32>
    %377 = tpu.matmul %374, %376, %cst_163 {dimension_numbers = #tpu.dot_dimension_numbers<[1], [0], [0], [1], [0, 0, 1, 1], [], []>} : vector<2x128xf32>, vector<128x128xf32>, vector<2x128xf32> -> vector<2x128xf32>
    %c15_164 = arith.constant 15 : index
    %c0_165 = arith.constant 0 : index
    %378 = vector.load %arg2[%c15_164, %c0_165] : memref<38x128xf32, #tpu.memory_space<vmem>>, vector<1x128xf32>
    %379 = vector.broadcast %378 : vector<1x128xf32> to vector<2x128xf32>
    %380 = arith.addf %377, %379 : vector<2x128xf32>
    %cst_166 = arith.constant 0.000000e+00 : f32
    %381 = vector.broadcast %cst_166 : f32 to vector<2x128xf32>
    %382 = arith.maximumf %380, %381 : vector<2x128xf32>
    %c21_167 = arith.constant 21 : index
    %c0_168 = arith.constant 0 : index
    %c0_169 = arith.constant 0 : index
    %383 = vector.load %arg1[%c21_167, %c0_168, %c0_169] : memref<41x128x128xf32, #tpu.memory_space<vmem>>, vector<1x128x128xf32>
    %384 = vector.shape_cast %383 : vector<1x128x128xf32> to vector<128x128xf32>
    %cst_170 = arith.constant dense<0.000000e+00> : vector<2x128xf32>
    %385 = tpu.matmul %382, %384, %cst_170 {dimension_numbers = #tpu.dot_dimension_numbers<[1], [0], [0], [1], [0, 0, 1, 1], [], []>} : vector<2x128xf32>, vector<128x128xf32>, vector<2x128xf32> -> vector<2x128xf32>
    %c16_171 = arith.constant 16 : index
    %c0_172 = arith.constant 0 : index
    %386 = vector.load %arg2[%c16_171, %c0_172] : memref<38x128xf32, #tpu.memory_space<vmem>>, vector<1x128xf32>
    %387 = vector.broadcast %386 : vector<1x128xf32> to vector<2x128xf32>
    %388 = arith.addf %385, %387 : vector<2x128xf32>
    %c18 = arith.constant 18 : index
    %c0_173 = arith.constant 0 : index
    %c0_174 = arith.constant 0 : index
    %389 = vector.load %arg1[%c18, %c0_173, %c0_174] : memref<41x128x128xf32, #tpu.memory_space<vmem>>, vector<1x128x128xf32>
    %390 = vector.shape_cast %389 : vector<1x128x128xf32> to vector<128x128xf32>
    %cst_175 = arith.constant dense<0.000000e+00> : vector<2x128xf32>
    %391 = tpu.matmul %388, %390, %cst_175 {dimension_numbers = #tpu.dot_dimension_numbers<[1], [0], [0], [1], [0, 0, 1, 1], [], []>} : vector<2x128xf32>, vector<128x128xf32>, vector<2x128xf32> -> vector<2x128xf32>
    %cst_176 = arith.constant 0.176776692 : f32
    %392 = vector.broadcast %cst_176 : f32 to vector<2x128xf32>
    %393 = arith.mulf %391, %392 : vector<2x128xf32>
    %c64_i32_177 = arith.constant 64 : i32
    %394 = vector.broadcast %c64_i32_177 : i32 to vector<1x128xi32>
    %395 = arith.cmpi slt, %0, %394 : vector<1x128xi32>
    %cst_178 = arith.constant -1.000000e+30 : f32
    %396 = vector.shape_cast %395 : vector<1x128xi1> to vector<1x128xi1>
    %397 = vector.broadcast %396 : vector<1x128xi1> to vector<2x128xi1>
    %398 = vector.broadcast %cst_178 : f32 to vector<2x128xf32>
    %399 = arith.select %397, %393, %398 : vector<2x128xi1>, vector<2x128xf32>
    %cst_179 = arith.constant dense<0xFF800000> : vector<2xf32>
    %400 = vector.multi_reduction <maximumf>, %399, %cst_179 [1] : vector<2x128xf32> to vector<2xf32>
    %401 = vector.shape_cast %400 : vector<2xf32> to vector<2x1xf32>
    %402 = vector.broadcast %401 : vector<2x1xf32> to vector<2x128xf32>
    %403 = arith.subf %399, %402 : vector<2x128xf32>
    %404 = math.exp %403 : vector<2x128xf32>
    %cst_180 = arith.constant dense<0.000000e+00> : vector<2xf32>
    %405 = vector.multi_reduction <add>, %404, %cst_180 [1] : vector<2x128xf32> to vector<2xf32>
    %406 = vector.shape_cast %405 : vector<2xf32> to vector<2x1xf32>
    %407 = tpu.reciprocal %406 {approx = true} : vector<2x1xf32> -> vector<2x1xf32>
    %408 = vector.broadcast %407 : vector<2x1xf32> to vector<2x128xf32>
    %409 = arith.mulf %404, %408 : vector<2x128xf32>
    %c19 = arith.constant 19 : index
    %c0_181 = arith.constant 0 : index
    %c0_182 = arith.constant 0 : index
    %410 = vector.load %arg1[%c19, %c0_181, %c0_182] : memref<41x128x128xf32, #tpu.memory_space<vmem>>, vector<1x128x128xf32>
    %411 = vector.shape_cast %410 : vector<1x128x128xf32> to vector<128x128xf32>
    %cst_183 = arith.constant dense<0.000000e+00> : vector<2x128xf32>
    %412 = tpu.matmul %409, %411, %cst_183 {dimension_numbers = #tpu.dot_dimension_numbers<[1], [0], [0], [1], [0, 0, 1, 1], [], []>} : vector<2x128xf32>, vector<128x128xf32>, vector<2x128xf32> -> vector<2x128xf32>
    %c22_184 = arith.constant 22 : index
    %c0_185 = arith.constant 0 : index
    %c0_186 = arith.constant 0 : index
    %413 = vector.load %arg1[%c22_184, %c0_185, %c0_186] : memref<41x128x128xf32, #tpu.memory_space<vmem>>, vector<1x128x128xf32>
    %414 = vector.shape_cast %413 : vector<1x128x128xf32> to vector<128x128xf32>
    %cst_187 = arith.constant dense<0.000000e+00> : vector<2x128xf32>
    %415 = tpu.matmul %374, %414, %cst_187 {dimension_numbers = #tpu.dot_dimension_numbers<[1], [0], [0], [1], [0, 0, 1, 1], [], []>} : vector<2x128xf32>, vector<128x128xf32>, vector<2x128xf32> -> vector<2x128xf32>
    %c23 = arith.constant 23 : index
    %c0_188 = arith.constant 0 : index
    %c0_189 = arith.constant 0 : index
    %416 = vector.load %arg1[%c23, %c0_188, %c0_189] : memref<41x128x128xf32, #tpu.memory_space<vmem>>, vector<1x128x128xf32>
    %417 = vector.shape_cast %416 : vector<1x128x128xf32> to vector<128x128xf32>
    %cst_190 = arith.constant dense<0.000000e+00> : vector<2x128xf32>
    %418 = tpu.matmul %412, %417, %cst_190 {dimension_numbers = #tpu.dot_dimension_numbers<[1], [0], [0], [1], [0, 0, 1, 1], [], []>} : vector<2x128xf32>, vector<128x128xf32>, vector<2x128xf32> -> vector<2x128xf32>
    %419 = arith.addf %415, %418 : vector<2x128xf32>
    %c17_191 = arith.constant 17 : index
    %c0_192 = arith.constant 0 : index
    %420 = vector.load %arg2[%c17_191, %c0_192] : memref<38x128xf32, #tpu.memory_space<vmem>>, vector<1x128xf32>
    %421 = vector.broadcast %420 : vector<1x128xf32> to vector<2x128xf32>
    %422 = arith.addf %419, %421 : vector<2x128xf32>
    %423 = arith.negf %422 : vector<2x128xf32>
    %424 = math.exp %423 : vector<2x128xf32>
    %cst_193 = arith.constant 1.000000e+00 : f32
    %425 = vector.broadcast %cst_193 : f32 to vector<2x128xf32>
    %426 = arith.addf %425, %424 : vector<2x128xf32>
    %427 = arith.divf %425, %426 : vector<2x128xf32>
    %428 = arith.mulf %427, %412 : vector<2x128xf32>
    %cst_194 = arith.constant 1.000000e+00 : f32
    %429 = vector.broadcast %cst_194 : f32 to vector<2x128xf32>
    %430 = arith.subf %429, %427 : vector<2x128xf32>
    %431 = arith.mulf %430, %374 : vector<2x128xf32>
    %432 = arith.addf %428, %431 : vector<2x128xf32>
    %433 = vector.shape_cast %409 : vector<2x128xf32> to vector<1x2x128xf32>
    %cst_195 = arith.constant dense<0.000000e+00> : vector<1xf32>
    %434 = vector.multi_reduction <add>, %433, %cst_195 [1, 2] : vector<1x2x128xf32> to vector<1xf32>
    %435 = vector.shape_cast %434 : vector<1xf32> to vector<1x1x1xf32>
    %436 = vector.extract %435[0, 0, 0] : f32 from vector<1x1x1xf32>
    %437 = vector.broadcast %436 : f32 to vector<1x1xf32>
    %cst_196 = arith.constant 7.812500e-03 : f32
    %438 = vector.broadcast %cst_196 : f32 to vector<1x1xf32>
    %439 = arith.mulf %437, %438 : vector<1x1xf32>
    %cst_197 = arith.constant 1.000000e-01 : f32
    %440 = vector.broadcast %cst_197 : f32 to vector<2x128xf32>
    %441 = arith.mulf %440, %432 : vector<2x128xf32>
    %cst_198 = arith.constant 1.000000e+00 : f32
    %442 = vector.broadcast %cst_198 : f32 to vector<2x128xf32>
    %443 = arith.cmpf oge, %441, %442 : vector<2x128xf32>
    %444 = arith.extui %443 : vector<2x128xi1> to vector<2x128xi32>
    %445 = arith.sitofp %444 : vector<2x128xi32> to vector<2x128xf32>
    %446 = vector.shape_cast %445 : vector<2x128xf32> to vector<1x2x128xf32>
    %cst_199 = arith.constant dense<0.000000e+00> : vector<1xf32>
    %447 = vector.multi_reduction <add>, %446, %cst_199 [1, 2] : vector<1x2x128xf32> to vector<1xf32>
    %448 = vector.shape_cast %447 : vector<1xf32> to vector<1x1x1xf32>
    %449 = vector.extract %448[0, 0, 0] : f32 from vector<1x1x1xf32>
    %450 = vector.broadcast %449 : f32 to vector<1x1xf32>
    %cst_200 = arith.constant 1.562500e-02 : f32
    %451 = vector.broadcast %cst_200 : f32 to vector<1x1xf32>
    %452 = arith.mulf %450, %451 : vector<1x1xf32>
    %c24 = arith.constant 24 : index
    %c0_201 = arith.constant 0 : index
    %c0_202 = arith.constant 0 : index
    %453 = vector.load %arg1[%c24, %c0_201, %c0_202] : memref<41x128x128xf32, #tpu.memory_space<vmem>>, vector<1x128x128xf32>
    %454 = vector.shape_cast %453 : vector<1x128x128xf32> to vector<128x128xf32>
    %cst_203 = arith.constant dense<0.000000e+00> : vector<2x128xf32>
    %455 = tpu.matmul %445, %454, %cst_203 {dimension_numbers = #tpu.dot_dimension_numbers<[1], [0], [0], [1], [0, 0, 1, 1], [], []>} : vector<2x128xf32>, vector<128x128xf32>, vector<2x128xf32> -> vector<2x128xf32>
    %c18_204 = arith.constant 18 : index
    %c0_205 = arith.constant 0 : index
    %456 = vector.load %arg2[%c18_204, %c0_205] : memref<38x128xf32, #tpu.memory_space<vmem>>, vector<1x128xf32>
    %457 = vector.broadcast %456 : vector<1x128xf32> to vector<2x128xf32>
    %458 = arith.addf %455, %457 : vector<2x128xf32>
    %cst_206 = arith.constant dense<0.000000e+00> : vector<128xf32>
    %459 = vector.multi_reduction <add>, %458, %cst_206 [0] : vector<2x128xf32> to vector<128xf32>
    %460 = vector.shape_cast %459 : vector<128xf32> to vector<1x128xf32>
    %cst_207 = arith.constant 2.000000e+00 : f32
    %461 = vector.broadcast %cst_207 : f32 to vector<1x128xf32>
    %462 = arith.divf %460, %461 : vector<1x128xf32>
    %463 = vector.broadcast %462 : vector<1x128xf32> to vector<2x128xf32>
    %464 = arith.subf %458, %463 : vector<2x128xf32>
    %465 = arith.mulf %464, %464 : vector<2x128xf32>
    %cst_208 = arith.constant dense<0.000000e+00> : vector<128xf32>
    %466 = vector.multi_reduction <add>, %465, %cst_208 [0] : vector<2x128xf32> to vector<128xf32>
    %467 = vector.shape_cast %466 : vector<128xf32> to vector<1x128xf32>
    %cst_209 = arith.constant 2.000000e+00 : f32
    %468 = vector.broadcast %cst_209 : f32 to vector<1x128xf32>
    %469 = arith.divf %467, %468 : vector<1x128xf32>
    %470 = vector.broadcast %462 : vector<1x128xf32> to vector<2x128xf32>
    %471 = arith.subf %458, %470 : vector<2x128xf32>
    %cst_210 = arith.constant 9.99999974E-6 : f32
    %472 = vector.broadcast %cst_210 : f32 to vector<1x128xf32>
    %473 = arith.addf %469, %472 : vector<1x128xf32>
    %474 = math.rsqrt %473 : vector<1x128xf32>
    %475 = vector.broadcast %474 : vector<1x128xf32> to vector<2x128xf32>
    %476 = arith.mulf %471, %475 : vector<2x128xf32>
    %cst_211 = arith.constant 0.000000e+00 : f32
    %477 = vector.broadcast %cst_211 : f32 to vector<2x128xf32>
    %478 = arith.maximumf %476, %477 : vector<2x128xf32>
    %c25 = arith.constant 25 : index
    %c0_212 = arith.constant 0 : index
    %c0_213 = arith.constant 0 : index
    %479 = vector.load %arg1[%c25, %c0_212, %c0_213] : memref<41x128x128xf32, #tpu.memory_space<vmem>>, vector<1x128x128xf32>
    %480 = vector.shape_cast %479 : vector<1x128x128xf32> to vector<128x128xf32>
    %cst_214 = arith.constant dense<0.000000e+00> : vector<2x128xf32>
    %481 = tpu.matmul %478, %480, %cst_214 {dimension_numbers = #tpu.dot_dimension_numbers<[1], [0], [0], [1], [0, 0, 1, 1], [], []>} : vector<2x128xf32>, vector<128x128xf32>, vector<2x128xf32> -> vector<2x128xf32>
    %c19_215 = arith.constant 19 : index
    %c0_216 = arith.constant 0 : index
    %482 = vector.load %arg2[%c19_215, %c0_216] : memref<38x128xf32, #tpu.memory_space<vmem>>, vector<1x128xf32>
    %483 = vector.broadcast %482 : vector<1x128xf32> to vector<2x128xf32>
    %484 = arith.addf %481, %483 : vector<2x128xf32>
    %c23_217 = arith.constant 23 : index
    %c0_218 = arith.constant 0 : index
    %485 = vector.load %arg2[%c23_217, %c0_218] : memref<38x128xf32, #tpu.memory_space<vmem>>, vector<1x128xf32>
    %486 = vector.broadcast %485 : vector<1x128xf32> to vector<2x128xf32>
    %487 = arith.mulf %484, %486 : vector<2x128xf32>
    %cst_219 = arith.constant dense<0.000000e+00> : vector<2xf32>
    %488 = vector.multi_reduction <add>, %487, %cst_219 [1] : vector<2x128xf32> to vector<2xf32>
    %489 = vector.shape_cast %488 : vector<2xf32> to vector<2x1xf32>
    %c24_220 = arith.constant 24 : index
    %c0_221 = arith.constant 0 : index
    %490 = vector.load %arg2[%c24_220, %c0_221] : memref<38x128xf32, #tpu.memory_space<vmem>>, vector<1x128xf32>
    %491 = vector.broadcast %489 : vector<2x1xf32> to vector<2x128xf32>
    %492 = vector.broadcast %490 : vector<1x128xf32> to vector<2x128xf32>
    %493 = arith.addf %491, %492 : vector<2x128xf32>
    %494 = arith.negf %493 : vector<2x128xf32>
    %495 = math.exp %494 : vector<2x128xf32>
    %cst_222 = arith.constant 1.000000e+00 : f32
    %496 = vector.broadcast %cst_222 : f32 to vector<2x128xf32>
    %497 = arith.addf %496, %495 : vector<2x128xf32>
    %498 = arith.divf %496, %497 : vector<2x128xf32>
    %499 = vector.shape_cast %498 : vector<2x128xf32> to vector<1x2x128xf32>
    %cst_223 = arith.constant dense<0.000000e+00> : vector<1xf32>
    %500 = vector.multi_reduction <add>, %499, %cst_223 [1, 2] : vector<1x2x128xf32> to vector<1xf32>
    %501 = vector.shape_cast %500 : vector<1xf32> to vector<1x1x1xf32>
    %502 = vector.extract %501[0, 0, 0] : f32 from vector<1x1x1xf32>
    %503 = vector.broadcast %502 : f32 to vector<1x1xf32>
    %cst_224 = arith.constant 3.906250e-03 : f32
    %504 = vector.broadcast %cst_224 : f32 to vector<1x1xf32>
    %505 = arith.mulf %503, %504 : vector<1x1xf32>
    %506 = arith.addf %445, %278 : vector<2x128xf32>
    %cst_225 = arith.constant 0.000000e+00 : f32
    %507 = vector.broadcast %cst_225 : f32 to vector<2x128xf32>
    %508 = arith.maximumf %506, %507 : vector<2x128xf32>
    %c39 = arith.constant 39 : index
    %c0_226 = arith.constant 0 : index
    %c0_227 = arith.constant 0 : index
    %509 = vector.load %arg1[%c39, %c0_226, %c0_227] : memref<41x128x128xf32, #tpu.memory_space<vmem>>, vector<1x128x128xf32>
    %510 = vector.shape_cast %509 : vector<1x128x128xf32> to vector<128x128xf32>
    %cst_228 = arith.constant dense<0.000000e+00> : vector<2x128xf32>
    %511 = tpu.matmul %508, %510, %cst_228 {dimension_numbers = #tpu.dot_dimension_numbers<[1], [0], [0], [1], [0, 0, 1, 1], [], []>} : vector<2x128xf32>, vector<128x128xf32>, vector<2x128xf32> -> vector<2x128xf32>
    %cst_229 = arith.constant dense<0.000000e+00> : vector<128xf32>
    %512 = vector.multi_reduction <add>, %511, %cst_229 [0] : vector<2x128xf32> to vector<128xf32>
    %513 = vector.shape_cast %512 : vector<128xf32> to vector<1x128xf32>
    %cst_230 = arith.constant 2.000000e+00 : f32
    %514 = vector.broadcast %cst_230 : f32 to vector<1x128xf32>
    %515 = arith.divf %513, %514 : vector<1x128xf32>
    %516 = vector.broadcast %515 : vector<1x128xf32> to vector<2x128xf32>
    %517 = arith.subf %511, %516 : vector<2x128xf32>
    %518 = arith.mulf %517, %517 : vector<2x128xf32>
    %cst_231 = arith.constant dense<0.000000e+00> : vector<128xf32>
    %519 = vector.multi_reduction <add>, %518, %cst_231 [0] : vector<2x128xf32> to vector<128xf32>
    %520 = vector.shape_cast %519 : vector<128xf32> to vector<1x128xf32>
    %cst_232 = arith.constant 2.000000e+00 : f32
    %521 = vector.broadcast %cst_232 : f32 to vector<1x128xf32>
    %522 = arith.divf %520, %521 : vector<1x128xf32>
    %523 = vector.broadcast %515 : vector<1x128xf32> to vector<2x128xf32>
    %524 = arith.subf %511, %523 : vector<2x128xf32>
    %cst_233 = arith.constant 9.99999974E-6 : f32
    %525 = vector.broadcast %cst_233 : f32 to vector<1x128xf32>
    %526 = arith.addf %522, %525 : vector<1x128xf32>
    %527 = math.rsqrt %526 : vector<1x128xf32>
    %528 = vector.broadcast %527 : vector<1x128xf32> to vector<2x128xf32>
    %529 = arith.mulf %524, %528 : vector<2x128xf32>
    %c27 = arith.constant 27 : index
    %c0_234 = arith.constant 0 : index
    %c0_235 = arith.constant 0 : index
    %530 = vector.load %arg1[%c27, %c0_234, %c0_235] : memref<41x128x128xf32, #tpu.memory_space<vmem>>, vector<1x128x128xf32>
    %531 = vector.shape_cast %530 : vector<1x128x128xf32> to vector<128x128xf32>
    %cst_236 = arith.constant dense<0.000000e+00> : vector<2x128xf32>
    %532 = tpu.matmul %508, %531, %cst_236 {dimension_numbers = #tpu.dot_dimension_numbers<[1], [0], [0], [1], [0, 0, 1, 1], [], []>} : vector<2x128xf32>, vector<128x128xf32>, vector<2x128xf32> -> vector<2x128xf32>
    %c25_237 = arith.constant 25 : index
    %c0_238 = arith.constant 0 : index
    %533 = vector.load %arg2[%c25_237, %c0_238] : memref<38x128xf32, #tpu.memory_space<vmem>>, vector<1x128xf32>
    %534 = vector.broadcast %533 : vector<1x128xf32> to vector<2x128xf32>
    %535 = arith.addf %532, %534 : vector<2x128xf32>
    %cst_239 = arith.constant dense<0.000000e+00> : vector<128xf32>
    %536 = vector.multi_reduction <add>, %535, %cst_239 [0] : vector<2x128xf32> to vector<128xf32>
    %537 = vector.shape_cast %536 : vector<128xf32> to vector<1x128xf32>
    %cst_240 = arith.constant 2.000000e+00 : f32
    %538 = vector.broadcast %cst_240 : f32 to vector<1x128xf32>
    %539 = arith.divf %537, %538 : vector<1x128xf32>
    %540 = vector.broadcast %539 : vector<1x128xf32> to vector<2x128xf32>
    %541 = arith.subf %535, %540 : vector<2x128xf32>
    %542 = arith.mulf %541, %541 : vector<2x128xf32>
    %cst_241 = arith.constant dense<0.000000e+00> : vector<128xf32>
    %543 = vector.multi_reduction <add>, %542, %cst_241 [0] : vector<2x128xf32> to vector<128xf32>
    %544 = vector.shape_cast %543 : vector<128xf32> to vector<1x128xf32>
    %cst_242 = arith.constant 2.000000e+00 : f32
    %545 = vector.broadcast %cst_242 : f32 to vector<1x128xf32>
    %546 = arith.divf %544, %545 : vector<1x128xf32>
    %547 = vector.broadcast %539 : vector<1x128xf32> to vector<2x128xf32>
    %548 = arith.subf %535, %547 : vector<2x128xf32>
    %cst_243 = arith.constant 9.99999974E-6 : f32
    %549 = vector.broadcast %cst_243 : f32 to vector<1x128xf32>
    %550 = arith.addf %546, %549 : vector<1x128xf32>
    %551 = math.rsqrt %550 : vector<1x128xf32>
    %552 = vector.broadcast %551 : vector<1x128xf32> to vector<2x128xf32>
    %553 = arith.mulf %548, %552 : vector<2x128xf32>
    %cst_244 = arith.constant 0.000000e+00 : f32
    %554 = vector.broadcast %cst_244 : f32 to vector<2x128xf32>
    %555 = arith.maximumf %553, %554 : vector<2x128xf32>
    %c28 = arith.constant 28 : index
    %c0_245 = arith.constant 0 : index
    %c0_246 = arith.constant 0 : index
    %556 = vector.load %arg1[%c28, %c0_245, %c0_246] : memref<41x128x128xf32, #tpu.memory_space<vmem>>, vector<1x128x128xf32>
    %557 = vector.shape_cast %556 : vector<1x128x128xf32> to vector<128x128xf32>
    %cst_247 = arith.constant dense<0.000000e+00> : vector<2x128xf32>
    %558 = tpu.matmul %555, %557, %cst_247 {dimension_numbers = #tpu.dot_dimension_numbers<[1], [0], [0], [1], [0, 0, 1, 1], [], []>} : vector<2x128xf32>, vector<128x128xf32>, vector<2x128xf32> -> vector<2x128xf32>
    %c26_248 = arith.constant 26 : index
    %c0_249 = arith.constant 0 : index
    %559 = vector.load %arg2[%c26_248, %c0_249] : memref<38x128xf32, #tpu.memory_space<vmem>>, vector<1x128xf32>
    %560 = vector.broadcast %559 : vector<1x128xf32> to vector<2x128xf32>
    %561 = arith.addf %558, %560 : vector<2x128xf32>
    %cst_250 = arith.constant dense<0.000000e+00> : vector<128xf32>
    %562 = vector.multi_reduction <add>, %561, %cst_250 [0] : vector<2x128xf32> to vector<128xf32>
    %563 = vector.shape_cast %562 : vector<128xf32> to vector<1x128xf32>
    %cst_251 = arith.constant 2.000000e+00 : f32
    %564 = vector.broadcast %cst_251 : f32 to vector<1x128xf32>
    %565 = arith.divf %563, %564 : vector<1x128xf32>
    %566 = vector.broadcast %565 : vector<1x128xf32> to vector<2x128xf32>
    %567 = arith.subf %561, %566 : vector<2x128xf32>
    %568 = arith.mulf %567, %567 : vector<2x128xf32>
    %cst_252 = arith.constant dense<0.000000e+00> : vector<128xf32>
    %569 = vector.multi_reduction <add>, %568, %cst_252 [0] : vector<2x128xf32> to vector<128xf32>
    %570 = vector.shape_cast %569 : vector<128xf32> to vector<1x128xf32>
    %cst_253 = arith.constant 2.000000e+00 : f32
    %571 = vector.broadcast %cst_253 : f32 to vector<1x128xf32>
    %572 = arith.divf %570, %571 : vector<1x128xf32>
    %573 = vector.broadcast %565 : vector<1x128xf32> to vector<2x128xf32>
    %574 = arith.subf %561, %573 : vector<2x128xf32>
    %cst_254 = arith.constant 9.99999974E-6 : f32
    %575 = vector.broadcast %cst_254 : f32 to vector<1x128xf32>
    %576 = arith.addf %572, %575 : vector<1x128xf32>
    %577 = math.rsqrt %576 : vector<1x128xf32>
    %578 = vector.broadcast %577 : vector<1x128xf32> to vector<2x128xf32>
    %579 = arith.mulf %574, %578 : vector<2x128xf32>
    %c29 = arith.constant 29 : index
    %c0_255 = arith.constant 0 : index
    %c0_256 = arith.constant 0 : index
    %580 = vector.load %arg1[%c29, %c0_255, %c0_256] : memref<41x128x128xf32, #tpu.memory_space<vmem>>, vector<1x128x128xf32>
    %581 = vector.shape_cast %580 : vector<1x128x128xf32> to vector<128x128xf32>
    %cst_257 = arith.constant dense<0.000000e+00> : vector<2x128xf32>
    %582 = tpu.matmul %579, %581, %cst_257 {dimension_numbers = #tpu.dot_dimension_numbers<[1], [0], [0], [1], [0, 0, 1, 1], [], []>} : vector<2x128xf32>, vector<128x128xf32>, vector<2x128xf32> -> vector<2x128xf32>
    %cst_258 = arith.constant 0.000000e+00 : f32
    %583 = vector.broadcast %cst_258 : f32 to vector<2x128xf32>
    %584 = arith.maximumf %582, %583 : vector<2x128xf32>
    %c30 = arith.constant 30 : index
    %c0_259 = arith.constant 0 : index
    %c0_260 = arith.constant 0 : index
    %585 = vector.load %arg1[%c30, %c0_259, %c0_260] : memref<41x128x128xf32, #tpu.memory_space<vmem>>, vector<1x128x128xf32>
    %586 = vector.shape_cast %585 : vector<1x128x128xf32> to vector<128x128xf32>
    %cst_261 = arith.constant dense<0.000000e+00> : vector<2x128xf32>
    %587 = tpu.matmul %584, %586, %cst_261 {dimension_numbers = #tpu.dot_dimension_numbers<[1], [0], [0], [1], [0, 0, 1, 1], [], []>} : vector<2x128xf32>, vector<128x128xf32>, vector<2x128xf32> -> vector<2x128xf32>
    %cst_262 = arith.constant 2.000000e+00 : f32
    %588 = vector.broadcast %cst_262 : f32 to vector<2x128xf32>
    %589 = arith.mulf %588, %587 : vector<2x128xf32>
    %590 = arith.negf %589 : vector<2x128xf32>
    %591 = math.exp %590 : vector<2x128xf32>
    %cst_263 = arith.constant 1.000000e+00 : f32
    %592 = vector.broadcast %cst_263 : f32 to vector<2x128xf32>
    %593 = arith.addf %592, %591 : vector<2x128xf32>
    %594 = arith.divf %592, %593 : vector<2x128xf32>
    %595 = arith.mulf %579, %594 : vector<2x128xf32>
    %c64_i32_264 = arith.constant 64 : i32
    %596 = vector.broadcast %c64_i32_264 : i32 to vector<1x128xi32>
    %597 = arith.cmpi slt, %0, %596 : vector<1x128xi32>
    %cst_265 = arith.constant dense<0.000000e+00> : vector<2xf32>
    %598 = vector.multi_reduction <add>, %595, %cst_265 [1] : vector<2x128xf32> to vector<2xf32>
    %599 = vector.shape_cast %598 : vector<2xf32> to vector<2x1xf32>
    %cst_266 = arith.constant 1.562500e-02 : f32
    %600 = vector.broadcast %cst_266 : f32 to vector<2x1xf32>
    %601 = arith.mulf %599, %600 : vector<2x1xf32>
    %cst_267 = arith.constant -1.000000e+30 : f32
    %602 = vector.shape_cast %597 : vector<1x128xi1> to vector<1x128xi1>
    %603 = vector.broadcast %602 : vector<1x128xi1> to vector<2x128xi1>
    %604 = vector.broadcast %cst_267 : f32 to vector<2x128xf32>
    %605 = arith.select %603, %595, %604 : vector<2x128xi1>, vector<2x128xf32>
    %cst_268 = arith.constant dense<0xFF800000> : vector<2xf32>
    %606 = vector.multi_reduction <maximumf>, %605, %cst_268 [1] : vector<2x128xf32> to vector<2xf32>
    %607 = vector.shape_cast %606 : vector<2xf32> to vector<2x1xf32>
    %c32 = arith.constant 32 : index
    %c0_269 = arith.constant 0 : index
    %608 = vector.load %arg2[%c32, %c0_269] : memref<38x128xf32, #tpu.memory_space<vmem>>, vector<1x128xf32>
    %609 = vector.broadcast %601 : vector<2x1xf32> to vector<2x128xf32>
    %610 = vector.broadcast %608 : vector<1x128xf32> to vector<2x128xf32>
    %611 = arith.mulf %609, %610 : vector<2x128xf32>
    %c33 = arith.constant 33 : index
    %c0_270 = arith.constant 0 : index
    %612 = vector.load %arg2[%c33, %c0_270] : memref<38x128xf32, #tpu.memory_space<vmem>>, vector<1x128xf32>
    %613 = vector.broadcast %607 : vector<2x1xf32> to vector<2x128xf32>
    %614 = vector.broadcast %612 : vector<1x128xf32> to vector<2x128xf32>
    %615 = arith.mulf %613, %614 : vector<2x128xf32>
    %616 = arith.addf %611, %615 : vector<2x128xf32>
    %c34 = arith.constant 34 : index
    %c0_271 = arith.constant 0 : index
    %617 = vector.load %arg2[%c34, %c0_271] : memref<38x128xf32, #tpu.memory_space<vmem>>, vector<1x128xf32>
    %618 = vector.broadcast %617 : vector<1x128xf32> to vector<2x128xf32>
    %619 = arith.addf %616, %618 : vector<2x128xf32>
    %620 = arith.negf %619 : vector<2x128xf32>
    %621 = math.exp %620 : vector<2x128xf32>
    %cst_272 = arith.constant 1.000000e+00 : f32
    %622 = vector.broadcast %cst_272 : f32 to vector<2x128xf32>
    %623 = arith.addf %622, %621 : vector<2x128xf32>
    %624 = arith.divf %622, %623 : vector<2x128xf32>
    %625 = arith.mulf %595, %624 : vector<2x128xf32>
    %c33_273 = arith.constant 33 : index
    %c0_274 = arith.constant 0 : index
    %c0_275 = arith.constant 0 : index
    %626 = vector.load %arg1[%c33_273, %c0_274, %c0_275] : memref<41x128x128xf32, #tpu.memory_space<vmem>>, vector<1x128x128xf32>
    %627 = vector.shape_cast %626 : vector<1x128x128xf32> to vector<128x128xf32>
    %cst_276 = arith.constant dense<0.000000e+00> : vector<2x128xf32>
    %628 = tpu.matmul %625, %627, %cst_276 {dimension_numbers = #tpu.dot_dimension_numbers<[1], [0], [0], [1], [0, 0, 1, 1], [], []>} : vector<2x128xf32>, vector<128x128xf32>, vector<2x128xf32> -> vector<2x128xf32>
    %c27_277 = arith.constant 27 : index
    %c0_278 = arith.constant 0 : index
    %629 = vector.load %arg2[%c27_277, %c0_278] : memref<38x128xf32, #tpu.memory_space<vmem>>, vector<1x128xf32>
    %630 = vector.broadcast %629 : vector<1x128xf32> to vector<2x128xf32>
    %631 = arith.addf %628, %630 : vector<2x128xf32>
    %cst_279 = arith.constant 0.000000e+00 : f32
    %632 = vector.broadcast %cst_279 : f32 to vector<2x128xf32>
    %633 = arith.maximumf %631, %632 : vector<2x128xf32>
    %c34_280 = arith.constant 34 : index
    %c0_281 = arith.constant 0 : index
    %c0_282 = arith.constant 0 : index
    %634 = vector.load %arg1[%c34_280, %c0_281, %c0_282] : memref<41x128x128xf32, #tpu.memory_space<vmem>>, vector<1x128x128xf32>
    %635 = vector.shape_cast %634 : vector<1x128x128xf32> to vector<128x128xf32>
    %cst_283 = arith.constant dense<0.000000e+00> : vector<2x128xf32>
    %636 = tpu.matmul %633, %635, %cst_283 {dimension_numbers = #tpu.dot_dimension_numbers<[1], [0], [0], [1], [0, 0, 1, 1], [], []>} : vector<2x128xf32>, vector<128x128xf32>, vector<2x128xf32> -> vector<2x128xf32>
    %c28_284 = arith.constant 28 : index
    %c0_285 = arith.constant 0 : index
    %637 = vector.load %arg2[%c28_284, %c0_285] : memref<38x128xf32, #tpu.memory_space<vmem>>, vector<1x128xf32>
    %638 = vector.broadcast %637 : vector<1x128xf32> to vector<2x128xf32>
    %639 = arith.addf %636, %638 : vector<2x128xf32>
    %c31 = arith.constant 31 : index
    %c0_286 = arith.constant 0 : index
    %c0_287 = arith.constant 0 : index
    %640 = vector.load %arg1[%c31, %c0_286, %c0_287] : memref<41x128x128xf32, #tpu.memory_space<vmem>>, vector<1x128x128xf32>
    %641 = vector.shape_cast %640 : vector<1x128x128xf32> to vector<128x128xf32>
    %cst_288 = arith.constant dense<0.000000e+00> : vector<2x128xf32>
    %642 = tpu.matmul %639, %641, %cst_288 {dimension_numbers = #tpu.dot_dimension_numbers<[1], [0], [0], [1], [0, 0, 1, 1], [], []>} : vector<2x128xf32>, vector<128x128xf32>, vector<2x128xf32> -> vector<2x128xf32>
    %cst_289 = arith.constant 1.250000e-01 : f32
    %643 = vector.broadcast %cst_289 : f32 to vector<2x128xf32>
    %644 = arith.mulf %642, %643 : vector<2x128xf32>
    %c64_i32_290 = arith.constant 64 : i32
    %645 = vector.broadcast %c64_i32_290 : i32 to vector<1x128xi32>
    %646 = arith.cmpi slt, %0, %645 : vector<1x128xi32>
    %cst_291 = arith.constant -1.000000e+30 : f32
    %647 = vector.shape_cast %646 : vector<1x128xi1> to vector<1x128xi1>
    %648 = vector.broadcast %647 : vector<1x128xi1> to vector<2x128xi1>
    %649 = vector.broadcast %cst_291 : f32 to vector<2x128xf32>
    %650 = arith.select %648, %644, %649 : vector<2x128xi1>, vector<2x128xf32>
    %cst_292 = arith.constant dense<0xFF800000> : vector<2xf32>
    %651 = vector.multi_reduction <maximumf>, %650, %cst_292 [1] : vector<2x128xf32> to vector<2xf32>
    %652 = vector.shape_cast %651 : vector<2xf32> to vector<2x1xf32>
    %653 = vector.broadcast %652 : vector<2x1xf32> to vector<2x128xf32>
    %654 = arith.subf %650, %653 : vector<2x128xf32>
    %655 = math.exp %654 : vector<2x128xf32>
    %cst_293 = arith.constant dense<0.000000e+00> : vector<2xf32>
    %656 = vector.multi_reduction <add>, %655, %cst_293 [1] : vector<2x128xf32> to vector<2xf32>
    %657 = vector.shape_cast %656 : vector<2xf32> to vector<2x1xf32>
    %658 = tpu.reciprocal %657 {approx = true} : vector<2x1xf32> -> vector<2x1xf32>
    %659 = vector.broadcast %658 : vector<2x1xf32> to vector<2x128xf32>
    %660 = arith.mulf %655, %659 : vector<2x128xf32>
    %c32_294 = arith.constant 32 : index
    %c0_295 = arith.constant 0 : index
    %c0_296 = arith.constant 0 : index
    %661 = vector.load %arg1[%c32_294, %c0_295, %c0_296] : memref<41x128x128xf32, #tpu.memory_space<vmem>>, vector<1x128x128xf32>
    %662 = vector.shape_cast %661 : vector<1x128x128xf32> to vector<128x128xf32>
    %cst_297 = arith.constant dense<0.000000e+00> : vector<2x128xf32>
    %663 = tpu.matmul %660, %662, %cst_297 {dimension_numbers = #tpu.dot_dimension_numbers<[1], [0], [0], [1], [0, 0, 1, 1], [], []>} : vector<2x128xf32>, vector<128x128xf32>, vector<2x128xf32> -> vector<2x128xf32>
    %c35 = arith.constant 35 : index
    %c0_298 = arith.constant 0 : index
    %c0_299 = arith.constant 0 : index
    %664 = vector.load %arg1[%c35, %c0_298, %c0_299] : memref<41x128x128xf32, #tpu.memory_space<vmem>>, vector<1x128x128xf32>
    %665 = vector.shape_cast %664 : vector<1x128x128xf32> to vector<128x128xf32>
    %cst_300 = arith.constant dense<0.000000e+00> : vector<2x128xf32>
    %666 = tpu.matmul %625, %665, %cst_300 {dimension_numbers = #tpu.dot_dimension_numbers<[1], [0], [0], [1], [0, 0, 1, 1], [], []>} : vector<2x128xf32>, vector<128x128xf32>, vector<2x128xf32> -> vector<2x128xf32>
    %c36 = arith.constant 36 : index
    %c0_301 = arith.constant 0 : index
    %c0_302 = arith.constant 0 : index
    %667 = vector.load %arg1[%c36, %c0_301, %c0_302] : memref<41x128x128xf32, #tpu.memory_space<vmem>>, vector<1x128x128xf32>
    %668 = vector.shape_cast %667 : vector<1x128x128xf32> to vector<128x128xf32>
    %cst_303 = arith.constant dense<0.000000e+00> : vector<2x128xf32>
    %669 = tpu.matmul %663, %668, %cst_303 {dimension_numbers = #tpu.dot_dimension_numbers<[1], [0], [0], [1], [0, 0, 1, 1], [], []>} : vector<2x128xf32>, vector<128x128xf32>, vector<2x128xf32> -> vector<2x128xf32>
    %670 = arith.addf %666, %669 : vector<2x128xf32>
    %c29_304 = arith.constant 29 : index
    %c0_305 = arith.constant 0 : index
    %671 = vector.load %arg2[%c29_304, %c0_305] : memref<38x128xf32, #tpu.memory_space<vmem>>, vector<1x128xf32>
    %672 = vector.broadcast %671 : vector<1x128xf32> to vector<2x128xf32>
    %673 = arith.addf %670, %672 : vector<2x128xf32>
    %674 = arith.negf %673 : vector<2x128xf32>
    %675 = math.exp %674 : vector<2x128xf32>
    %cst_306 = arith.constant 1.000000e+00 : f32
    %676 = vector.broadcast %cst_306 : f32 to vector<2x128xf32>
    %677 = arith.addf %676, %675 : vector<2x128xf32>
    %678 = arith.divf %676, %677 : vector<2x128xf32>
    %679 = arith.mulf %678, %663 : vector<2x128xf32>
    %cst_307 = arith.constant 1.000000e+00 : f32
    %680 = vector.broadcast %cst_307 : f32 to vector<2x128xf32>
    %681 = arith.subf %680, %678 : vector<2x128xf32>
    %682 = arith.mulf %681, %625 : vector<2x128xf32>
    %683 = arith.addf %679, %682 : vector<2x128xf32>
    %684 = vector.shape_cast %660 : vector<2x128xf32> to vector<1x2x128xf32>
    %cst_308 = arith.constant dense<0.000000e+00> : vector<1xf32>
    %685 = vector.multi_reduction <add>, %684, %cst_308 [1, 2] : vector<1x2x128xf32> to vector<1xf32>
    %686 = vector.shape_cast %685 : vector<1xf32> to vector<1x1x1xf32>
    %687 = vector.extract %686[0, 0, 0] : f32 from vector<1x1x1xf32>
    %688 = vector.broadcast %687 : f32 to vector<1x1xf32>
    %cst_309 = arith.constant 7.812500e-03 : f32
    %689 = vector.broadcast %cst_309 : f32 to vector<1x1xf32>
    %690 = arith.mulf %688, %689 : vector<1x1xf32>
    %cst_310 = arith.constant 1.000000e-01 : f32
    %691 = vector.broadcast %cst_310 : f32 to vector<2x128xf32>
    %692 = arith.mulf %691, %683 : vector<2x128xf32>
    %cst_311 = arith.constant 1.000000e+00 : f32
    %693 = vector.broadcast %cst_311 : f32 to vector<2x128xf32>
    %694 = arith.cmpf oge, %692, %693 : vector<2x128xf32>
    %695 = arith.extui %694 : vector<2x128xi1> to vector<2x128xi32>
    %696 = arith.sitofp %695 : vector<2x128xi32> to vector<2x128xf32>
    %697 = vector.shape_cast %696 : vector<2x128xf32> to vector<1x2x128xf32>
    %cst_312 = arith.constant dense<0.000000e+00> : vector<1xf32>
    %698 = vector.multi_reduction <add>, %697, %cst_312 [1, 2] : vector<1x2x128xf32> to vector<1xf32>
    %699 = vector.shape_cast %698 : vector<1xf32> to vector<1x1x1xf32>
    %700 = vector.extract %699[0, 0, 0] : f32 from vector<1x1x1xf32>
    %701 = vector.broadcast %700 : f32 to vector<1x1xf32>
    %cst_313 = arith.constant 7.812500e-03 : f32
    %702 = vector.broadcast %cst_313 : f32 to vector<1x1xf32>
    %703 = arith.mulf %701, %702 : vector<1x1xf32>
    %c37 = arith.constant 37 : index
    %c0_314 = arith.constant 0 : index
    %c0_315 = arith.constant 0 : index
    %704 = vector.load %arg1[%c37, %c0_314, %c0_315] : memref<41x128x128xf32, #tpu.memory_space<vmem>>, vector<1x128x128xf32>
    %705 = vector.shape_cast %704 : vector<1x128x128xf32> to vector<128x128xf32>
    %cst_316 = arith.constant dense<0.000000e+00> : vector<2x128xf32>
    %706 = tpu.matmul %696, %705, %cst_316 {dimension_numbers = #tpu.dot_dimension_numbers<[1], [0], [0], [1], [0, 0, 1, 1], [], []>} : vector<2x128xf32>, vector<128x128xf32>, vector<2x128xf32> -> vector<2x128xf32>
    %c30_317 = arith.constant 30 : index
    %c0_318 = arith.constant 0 : index
    %707 = vector.load %arg2[%c30_317, %c0_318] : memref<38x128xf32, #tpu.memory_space<vmem>>, vector<1x128xf32>
    %708 = vector.broadcast %707 : vector<1x128xf32> to vector<2x128xf32>
    %709 = arith.addf %706, %708 : vector<2x128xf32>
    %cst_319 = arith.constant dense<0.000000e+00> : vector<128xf32>
    %710 = vector.multi_reduction <add>, %709, %cst_319 [0] : vector<2x128xf32> to vector<128xf32>
    %711 = vector.shape_cast %710 : vector<128xf32> to vector<1x128xf32>
    %cst_320 = arith.constant 2.000000e+00 : f32
    %712 = vector.broadcast %cst_320 : f32 to vector<1x128xf32>
    %713 = arith.divf %711, %712 : vector<1x128xf32>
    %714 = vector.broadcast %713 : vector<1x128xf32> to vector<2x128xf32>
    %715 = arith.subf %709, %714 : vector<2x128xf32>
    %716 = arith.mulf %715, %715 : vector<2x128xf32>
    %cst_321 = arith.constant dense<0.000000e+00> : vector<128xf32>
    %717 = vector.multi_reduction <add>, %716, %cst_321 [0] : vector<2x128xf32> to vector<128xf32>
    %718 = vector.shape_cast %717 : vector<128xf32> to vector<1x128xf32>
    %cst_322 = arith.constant 2.000000e+00 : f32
    %719 = vector.broadcast %cst_322 : f32 to vector<1x128xf32>
    %720 = arith.divf %718, %719 : vector<1x128xf32>
    %721 = vector.broadcast %713 : vector<1x128xf32> to vector<2x128xf32>
    %722 = arith.subf %709, %721 : vector<2x128xf32>
    %cst_323 = arith.constant 9.99999974E-6 : f32
    %723 = vector.broadcast %cst_323 : f32 to vector<1x128xf32>
    %724 = arith.addf %720, %723 : vector<1x128xf32>
    %725 = math.rsqrt %724 : vector<1x128xf32>
    %726 = vector.broadcast %725 : vector<1x128xf32> to vector<2x128xf32>
    %727 = arith.mulf %722, %726 : vector<2x128xf32>
    %cst_324 = arith.constant 0.000000e+00 : f32
    %728 = vector.broadcast %cst_324 : f32 to vector<2x128xf32>
    %729 = arith.maximumf %727, %728 : vector<2x128xf32>
    %c38 = arith.constant 38 : index
    %c0_325 = arith.constant 0 : index
    %c0_326 = arith.constant 0 : index
    %730 = vector.load %arg1[%c38, %c0_325, %c0_326] : memref<41x128x128xf32, #tpu.memory_space<vmem>>, vector<1x128x128xf32>
    %731 = vector.shape_cast %730 : vector<1x128x128xf32> to vector<128x128xf32>
    %cst_327 = arith.constant dense<0.000000e+00> : vector<2x128xf32>
    %732 = tpu.matmul %729, %731, %cst_327 {dimension_numbers = #tpu.dot_dimension_numbers<[1], [0], [0], [1], [0, 0, 1, 1], [], []>} : vector<2x128xf32>, vector<128x128xf32>, vector<2x128xf32> -> vector<2x128xf32>
    %c31_328 = arith.constant 31 : index
    %c0_329 = arith.constant 0 : index
    %733 = vector.load %arg2[%c31_328, %c0_329] : memref<38x128xf32, #tpu.memory_space<vmem>>, vector<1x128xf32>
    %734 = vector.broadcast %733 : vector<1x128xf32> to vector<2x128xf32>
    %735 = arith.addf %732, %734 : vector<2x128xf32>
    %c35_330 = arith.constant 35 : index
    %c0_331 = arith.constant 0 : index
    %736 = vector.load %arg2[%c35_330, %c0_331] : memref<38x128xf32, #tpu.memory_space<vmem>>, vector<1x128xf32>
    %737 = vector.broadcast %736 : vector<1x128xf32> to vector<2x128xf32>
    %738 = arith.mulf %735, %737 : vector<2x128xf32>
    %cst_332 = arith.constant dense<0.000000e+00> : vector<2xf32>
    %739 = vector.multi_reduction <add>, %738, %cst_332 [1] : vector<2x128xf32> to vector<2xf32>
    %740 = vector.shape_cast %739 : vector<2xf32> to vector<2x1xf32>
    %c36_333 = arith.constant 36 : index
    %c0_334 = arith.constant 0 : index
    %741 = vector.load %arg2[%c36_333, %c0_334] : memref<38x128xf32, #tpu.memory_space<vmem>>, vector<1x128xf32>
    %742 = vector.broadcast %740 : vector<2x1xf32> to vector<2x128xf32>
    %743 = vector.broadcast %741 : vector<1x128xf32> to vector<2x128xf32>
    %744 = arith.addf %742, %743 : vector<2x128xf32>
    %745 = arith.negf %744 : vector<2x128xf32>
    %746 = math.exp %745 : vector<2x128xf32>
    %cst_335 = arith.constant 1.000000e+00 : f32
    %747 = vector.broadcast %cst_335 : f32 to vector<2x128xf32>
    %748 = arith.addf %747, %746 : vector<2x128xf32>
    %749 = arith.divf %747, %748 : vector<2x128xf32>
    %750 = vector.shape_cast %749 : vector<2x128xf32> to vector<1x2x128xf32>
    %cst_336 = arith.constant dense<0.000000e+00> : vector<1xf32>
    %751 = vector.multi_reduction <add>, %750, %cst_336 [1, 2] : vector<1x2x128xf32> to vector<1xf32>
    %752 = vector.shape_cast %751 : vector<1xf32> to vector<1x1x1xf32>
    %753 = vector.extract %752[0, 0, 0] : f32 from vector<1x1x1xf32>
    %754 = vector.broadcast %753 : f32 to vector<1x1xf32>
    %cst_337 = arith.constant 3.906250e-03 : f32
    %755 = vector.broadcast %cst_337 : f32 to vector<1x1xf32>
    %756 = arith.mulf %754, %755 : vector<1x1xf32>
    %757 = arith.addf %696, %529 : vector<2x128xf32>
    %cst_338 = arith.constant 0.000000e+00 : f32
    %758 = vector.broadcast %cst_338 : f32 to vector<2x128xf32>
    %759 = arith.maximumf %757, %758 : vector<2x128xf32>
    %c40 = arith.constant 40 : index
    %c0_339 = arith.constant 0 : index
    %c0_340 = arith.constant 0 : index
    %760 = vector.load %arg1[%c40, %c0_339, %c0_340] : memref<41x128x128xf32, #tpu.memory_space<vmem>>, vector<1x128x128xf32>
    %761 = vector.shape_cast %760 : vector<1x128x128xf32> to vector<128x128xf32>
    %cst_341 = arith.constant dense<0.000000e+00> : vector<2x128xf32>
    %762 = tpu.matmul %759, %761, %cst_341 {dimension_numbers = #tpu.dot_dimension_numbers<[1], [0], [0], [1], [0, 0, 1, 1], [], []>} : vector<2x128xf32>, vector<128x128xf32>, vector<2x128xf32> -> vector<2x128xf32>
    %c37_342 = arith.constant 37 : index
    %c0_343 = arith.constant 0 : index
    %763 = vector.load %arg2[%c37_342, %c0_343] : memref<38x128xf32, #tpu.memory_space<vmem>>, vector<1x128xf32>
    %764 = vector.broadcast %763 : vector<1x128xf32> to vector<2x128xf32>
    %765 = arith.addf %762, %764 : vector<2x128xf32>
    %c0_344 = arith.constant 0 : index
    %c0_345 = arith.constant 0 : index
    %766 = vector.load %arg3[%c0_344, %c0_345] : memref<2x128xf32, #tpu.memory_space<vmem>>, vector<2x128xf32>
    tpu.vector_store %arg3[%c0_344, %c0_345], %765 {strides = array<i32>} : memref<2x128xf32, #tpu.memory_space<vmem>>, vector<2x128xf32>,
    %cst_346 = arith.constant 0.000000e+00 : f32
    %767 = vector.broadcast %cst_346 : f32 to vector<1x128xf32>
    %c0_i32 = arith.constant 0 : i32
    %768 = vector.broadcast %c0_i32 : i32 to vector<1x128xi32>
    %769 = arith.cmpi eq, %0, %768 : vector<1x128xi32>
    %770 = vector.shape_cast %188 : vector<1x1xf32> to vector<1x1xf32>
    %771 = vector.broadcast %770 : vector<1x1xf32> to vector<1x128xf32>
    %772 = arith.select %769, %771, %767 : vector<1x128xi1>, vector<1x128xf32>
    %c1_i32 = arith.constant 1 : i32
    %773 = vector.broadcast %c1_i32 : i32 to vector<1x128xi32>
    %774 = arith.cmpi eq, %0, %773 : vector<1x128xi32>
    %775 = vector.shape_cast %201 : vector<1x1xf32> to vector<1x1xf32>
    %776 = vector.broadcast %775 : vector<1x1xf32> to vector<1x128xf32>
    %777 = arith.select %774, %776, %772 : vector<1x128xi1>, vector<1x128xf32>
    %c2_i32 = arith.constant 2 : i32
    %778 = vector.broadcast %c2_i32 : i32 to vector<1x128xi32>
    %779 = arith.cmpi eq, %0, %778 : vector<1x128xi32>
    %780 = vector.shape_cast %254 : vector<1x1xf32> to vector<1x1xf32>
    %781 = vector.broadcast %780 : vector<1x1xf32> to vector<1x128xf32>
    %782 = arith.select %779, %781, %777 : vector<1x128xi1>, vector<1x128xf32>
    %c3_i32 = arith.constant 3 : i32
    %783 = vector.broadcast %c3_i32 : i32 to vector<1x128xi32>
    %784 = arith.cmpi eq, %0, %783 : vector<1x128xi32>
    %785 = vector.shape_cast %439 : vector<1x1xf32> to vector<1x1xf32>
    %786 = vector.broadcast %785 : vector<1x1xf32> to vector<1x128xf32>
    %787 = arith.select %784, %786, %782 : vector<1x128xi1>, vector<1x128xf32>
    %c4_i32 = arith.constant 4 : i32
    %788 = vector.broadcast %c4_i32 : i32 to vector<1x128xi32>
    %789 = arith.cmpi eq, %0, %788 : vector<1x128xi32>
    %790 = vector.shape_cast %452 : vector<1x1xf32> to vector<1x1xf32>
    %791 = vector.broadcast %790 : vector<1x1xf32> to vector<1x128xf32>
    %792 = arith.select %789, %791, %787 : vector<1x128xi1>, vector<1x128xf32>
    %c5_i32 = arith.constant 5 : i32
    %793 = vector.broadcast %c5_i32 : i32 to vector<1x128xi32>
    %794 = arith.cmpi eq, %0, %793 : vector<1x128xi32>
    %795 = vector.shape_cast %505 : vector<1x1xf32> to vector<1x1xf32>
    %796 = vector.broadcast %795 : vector<1x1xf32> to vector<1x128xf32>
    %797 = arith.select %794, %796, %792 : vector<1x128xi1>, vector<1x128xf32>
    %c6_i32 = arith.constant 6 : i32
    %798 = vector.broadcast %c6_i32 : i32 to vector<1x128xi32>
    %799 = arith.cmpi eq, %0, %798 : vector<1x128xi32>
    %800 = vector.shape_cast %690 : vector<1x1xf32> to vector<1x1xf32>
    %801 = vector.broadcast %800 : vector<1x1xf32> to vector<1x128xf32>
    %802 = arith.select %799, %801, %797 : vector<1x128xi1>, vector<1x128xf32>
    %c7_i32 = arith.constant 7 : i32
    %803 = vector.broadcast %c7_i32 : i32 to vector<1x128xi32>
    %804 = arith.cmpi eq, %0, %803 : vector<1x128xi32>
    %805 = vector.shape_cast %703 : vector<1x1xf32> to vector<1x1xf32>
    %806 = vector.broadcast %805 : vector<1x1xf32> to vector<1x128xf32>
    %807 = arith.select %804, %806, %802 : vector<1x128xi1>, vector<1x128xf32>
    %c8_i32 = arith.constant 8 : i32
    %808 = vector.broadcast %c8_i32 : i32 to vector<1x128xi32>
    %809 = arith.cmpi eq, %0, %808 : vector<1x128xi32>
    %810 = vector.shape_cast %756 : vector<1x1xf32> to vector<1x1xf32>
    %811 = vector.broadcast %810 : vector<1x1xf32> to vector<1x128xf32>
    %812 = arith.select %809, %811, %807 : vector<1x128xi1>, vector<1x128xf32>
    %c0_347 = arith.constant 0 : index
    %c0_348 = arith.constant 0 : index
    %813 = vector.load %arg4[%c0_347, %c0_348] : memref<1x128xf32, #tpu.memory_space<vmem>>, vector<1x128xf32>
    tpu.vector_store %arg4[%c0_347, %c0_348], %812 {strides = array<i32>} : memref<1x128xf32, #tpu.memory_space<vmem>>, vector<1x128xf32>,
    return
  }
}

</mosaic_0001>

<llo_original>
// kernel: forward.1
$region0: #{forward.1}
  #allocation0 [shape = 'u32[]', space=smem, size = 0x4, offset = 0x4, fixed_abs, tag = 'smem constant byte address 0x4 - core index']
  #allocation1 [shape = 'u32[144,128]{1,0:T(1,128)}', space=vmem, size = 0x12000, scoped, tag = 'internal scratch']
  %s0 = inlined_call_operand.vmem [shape: f32[2,128], index: 0, kind: input, shape index: {}]
  %s1 = inlined_call_operand.hbm [shape: f32[41,128,128], index: 1, kind: input, shape index: {}]
  %s2 = inlined_call_operand.hbm [shape: f32[38,128], index: 2, kind: input, shape index: {}]
  %s3 = inlined_call_operand.hbm [shape: f32[2,128], index: 3, kind: output, shape index: {0}]
  %s4 = inlined_call_operand.vmem [shape: f32[1,128], index: 4, kind: output, shape index: {1}]
  %5 = xla_tuple %s3, %s4
  %s6 = sld [smem:[#allocation0]]
  $region38: #{forward.1} parent=0
    _
  %s8 = ssub.s32 1, %s6
  %s9 = scalar_select 0, %s8, %s6
  $region1: #{forward.1} parent=0
    #allocation2 [shape = 'u8[2686976]{0}', space=vmem, size = 0x290000, scoped, tag = 'input window, operand 1, single buffered']
    #allocation3 [shape = 's32[1]{0}', space=sflag, size = 0x4, scoped, tag = 'scoped memory for forward.1']
    #allocation4 [shape = 's32[1]{0}', space=sflag, size = 0x4, scoped, tag = 'scoped memory for forward.1']
    #allocation5 [shape = 'u8[20480]{0}', space=vmem, size = 0x5000, scoped, tag = 'input window, operand 2, single buffered']
    #allocation6 [shape = 's32[1]{0}', space=sflag, size = 0x4, scoped, tag = 'scoped memory for forward.1']
    #allocation7 [shape = 'u8[1024]{0}', space=vmem, size = 0x400, scoped, tag = 'output window, operand 0, single buffered']
    %10 = vsyncpa [#allocation3], 0
    %11 = vsyncpa [#allocation6], 0
    %12 = vsyncpa [#allocation4], 0
    // Predicated region
    $region2: #{forward.1} parent=1 // pred_check
      _
    $region3: #{forward.1} parent=1 // pred_check_branch
      %14 = sbr.rel (0) target = $region5
    $region4: #{forward.1} parent=1 // pred_region
      _
    $region5: #{forward.1} parent=1 // pred_fallthru
      _
    // Predicated region
    $region6: #{forward.1} parent=1 // pred_check
      _
    $region7: #{forward.1} parent=1 // pred_check_branch
      %16 = sbr.rel (0) target = $region9
    $region8: #{forward.1} parent=1 // pred_region
      %s18 = ssub.s32 83968, 83968
      %19 = vsyncadd [#allocation3], %s18
      %s20 = sshll.u32 [#allocation2], 4
      %s21 = int_to_ptr.vmem [resolvable:$true] %s20
      %26 = dma.hbm_to_vmem [thread:$0]  %s1, 83968, %s21, [#allocation3], 128, 128, 8
    $region9: #{forward.1} parent=1 // pred_fallthru
      _
    // Predicated region
    $region10: #{forward.1} parent=1 // pred_check
      _
    $region11: #{forward.1} parent=1 // pred_check_branch
      %28 = sbr.rel (0) target = $region13
    $region12: #{forward.1} parent=1 // pred_region
      %s30 = ssub.s32 640, 640
      %31 = vsyncadd [#allocation6], %s30
      %s32 = sshll.u32 [#allocation5], 4
      %s33 = int_to_ptr.vmem [resolvable:$true] %s32
      %38 = dma.hbm_to_vmem [thread:$0]  %s2, 640, %s33, [#allocation6], 128, 128, 8
    $region13: #{forward.1} parent=1 // pred_fallthru
      _
    // Predicated region
    $region14: #{forward.1} parent=1 // pred_check
      _
    $region15: #{forward.1} parent=1 // pred_check_branch
      %40 = sbr.rel (0) target = $region17
    $region16: #{forward.1} parent=1 // pred_region
      %41 = dma.done [#allocation3], 83968
    $region17: #{forward.1} parent=1 // pred_fallthru
      _
    // Predicated region
    $region18: #{forward.1} parent=1 // pred_check
      _
    $region19: #{forward.1} parent=1 // pred_check_branch
      %43 = sbr.rel (0) target = $region21
    $region20: #{forward.1} parent=1 // pred_region
      %44 = dma.done [#allocation6], 640
    $region21: #{forward.1} parent=1 // pred_fallthru
      _
    %v45 = vlaneseq
    %v46 = vand.u32 %v45, 127
    %v47 = vld [vmem:[%s0] sm:$0x3]
    %v48 = vld [vmem:[#allocation2] sm:$0xff]
    %v49 = vld [vmem:[#allocation2 + $0x8] sm:$0xff]
    %v50 = vld [vmem:[#allocation2 + $0x10] sm:$0xff]
    %v51 = vld [vmem:[#allocation2 + $0x18] sm:$0xff]
    %v52 = vld [vmem:[#allocation2 + $0x20] sm:$0xff]
    %v53 = vld [vmem:[#allocation2 + $0x28] sm:$0xff]
    %v54 = vld [vmem:[#allocation2 + $0x30] sm:$0xff]
    %v55 = vld [vmem:[#allocation2 + $0x38] sm:$0xff]
    %v56 = vld [vmem:[#allocation2 + $0x40] sm:$0xff]
    %v57 = vld [vmem:[#allocation2 + $0x48] sm:$0xff]
    %v58 = vld [vmem:[#allocation2 + $0x50] sm:$0xff]
    %v59 = vld [vmem:[#allocation2 + $0x58] sm:$0xff]
    %v60 = vld [vmem:[#allocation2 + $0x60] sm:$0xff]
    %v61 = vld [vmem:[#allocation2 + $0x68] sm:$0xff]
    %v62 = vld [vmem:[#allocation2 + $0x70] sm:$0xff]
    %v63 = vld [vmem:[#allocation2 + $0x78] sm:$0xff]
    %v64 = vld [vmem:[#allocation5] sm:$0x1]
    %v65 = vlaneseq
    %v66 = vshrl.u32 %v65, 7
    %v67 = vsub.s32 0, %v66
    %v68 = vrot.slane %v64, %v67
    %69 = vmatprep.subr.mxu0 0.0
    %70 = vmatpush1.msra.mxu0 %v63
    %71 = vmatprep.subr.mxu0 0.0
    %72 = vmatpush1.msra.mxu0 %v62
    %73 = vmatprep.subr.mxu0 0.0
    %74 = vmatpush1.msra.mxu0 %v61
    %75 = vmatprep.subr.mxu0 0.0
    %76 = vmatpush1.msra.mxu0 %v60
    %77 = vmatprep.subr.mxu0 0.0
    %78 = vmatpush1.msra.mxu0 %v59
    %79 = vmatprep.subr.mxu0 0.0
    %80 = vmatpush1.msra.mxu0 %v58
    %81 = vmatprep.subr.mxu0 0.0
    %82 = vmatpush1.msra.mxu0 %v57
    %83 = vmatprep.subr.mxu0 0.0
    %84 = vmatpush1.msra.mxu0 %v56
    %85 = vmatprep.subr.mxu0 0.0
    %86 = vmatpush1.msra.mxu0 %v55
    %87 = vmatprep.subr.mxu0 0.0
    %88 = vmatpush1.msra.mxu0 %v54
    %89 = vmatprep.subr.mxu0 0.0
    %90 = vmatpush1.msra.mxu0 %v53
    %91 = vmatprep.subr.mxu0 0.0
    %92 = vmatpush1.msra.mxu0 %v52
    %93 = vmatprep.subr.mxu0 0.0
    %94 = vmatpush1.msra.mxu0 %v51
    %95 = vmatprep.subr.mxu0 0.0
    %96 = vmatpush1.msra.mxu0 %v50
    %97 = vmatprep.subr.mxu0 0.0
    %98 = vmatpush1.msra.mxu0 %v49
    %99 = vmatprep.subr.mxu0 0.0
    %100 = vmatpush1.msra.mxu0 %v48
    %101 = vmatprep.subr.mxu0 0.0
    %102 = vmatpush2.msra.mxu0 0.0
    %103 = vmatprep.subr.mxu0 0.0
    %104 = vmatpush2.msra.mxu0 0.0
    %105 = vmatprep.subr.mxu0 0.0
    %106 = vmatpush2.msra.mxu0 0.0
    %107 = vmatprep.subr.mxu0 0.0
    %108 = vmatpush2.msra.mxu0 0.0
    %109 = vmatprep.subr.mxu0 0.0
    %110 = vmatpush2.msra.mxu0 0.0
    %111 = vmatprep.subr.mxu0 0.0
    %112 = vmatpush2.msra.mxu0 0.0
    %113 = vmatprep.subr.mxu0 0.0
    %114 = vmatpush2.msra.mxu0 0.0
    %115 = vmatprep.subr.mxu0 0.0
    %116 = vmatpush2.msra.mxu0 0.0
    %117 = vmatprep.subr.mxu0 0.0
    %118 = vmatpush2.msra.mxu0 0.0
    %119 = vmatprep.subr.mxu0 0.0
    %120 = vmatpush2.msra.mxu0 0.0
    %121 = vmatprep.subr.mxu0 0.0
    %122 = vmatpush2.msra.mxu0 0.0
    %123 = vmatprep.subr.mxu0 0.0
    %124 = vmatpush2.msra.mxu0 0.0
    %125 = vmatprep.subr.mxu0 0.0
    %126 = vmatpush2.msra.mxu0 0.0
    %127 = vmatprep.subr.mxu0 0.0
    %128 = vmatpush2.msra.mxu0 0.0
    %129 = vmatprep.subr.mxu0 0.0
    %130 = vmatpush2.msra.mxu0 0.0
    %131 = vmatprep.subr.mxu0 0.0
    %132 = vmatpush2.msra.mxu0 0.0
    %133 = vmatprep.mubr.f32.mxu0 0.0
    %134 = vmatmul.mubr.f32.gmra.mxu0 %v47
    %v135 = vpop.f32.mrf.mxu0
    %v136 = vadd.f32 %v68, %v135
    %v137 = vpop.f32.mrf.mxu0
    %138 = vdwg.mxu0
    %vm139 = vcmask 1041408
    %v140 = vsel %vm139, %v136, 0.0
    %v141 = vrot.slane %v140, 4
    %v142 = vadd.f32 %v140, %v141
    %v143 = vrot.slane %v142, 2
    %v144 = vadd.f32 %v142, %v143
    %v145 = vrot.slane %v144, 1
    %v146 = vadd.f32 %v144, %v145
    %v147 = vrcp.pop 2.0
    %v148 = vmul.f32 %v146, %v147
    %v149 = vsub.f32 %v136, %v148
    %v150 = vmul.f32 %v149, %v149
    %v151 = vsel %vm139, %v150, 0.0
    %v152 = vrot.slane %v151, 4
    %v153 = vadd.f32 %v151, %v152
    %v154 = vrot.slane %v153, 2
    %v155 = vadd.f32 %v153, %v154
    %v156 = vrot.slane %v155, 1
    %v157 = vadd.f32 %v155, %v156
    %v158 = vmul.f32 %v157, %v147
    %v159 = vadd.f32 %v158, 1e-05
    %v160 = vrsqrt.pop %v159
    %v161 = vmul.f32 %v149, %v160
    %v162 = vmax.f32 %v161, 0.0
    %s163 = scalar_lea.vmem [#allocation2], 128
    %v164 = vld [vmem:[%s163] sm:$0xff]
    %v165 = vld [vmem:[%s163 + $0x8] sm:$0xff]
    %v166 = vld [vmem:[%s163 + $0x10] sm:$0xff]
    %v167 = vld [vmem:[%s163 + $0x18] sm:$0xff]
    %v168 = vld [vmem:[%s163 + $0x20] sm:$0xff]
    %v169 = vld [vmem:[%s163 + $0x28] sm:$0xff]
    %v170 = vld [vmem:[%s163 + $0x30] sm:$0xff]
    %v171 = vld [vmem:[%s163 + $0x38] sm:$0xff]
    %v172 = vld [vmem:[%s163 + $0x40] sm:$0xff]
    %v173 = vld [vmem:[%s163 + $0x48] sm:$0xff]
    %v174 = vld [vmem:[%s163 + $0x50] sm:$0xff]
    %v175 = vld [vmem:[%s163 + $0x58] sm:$0xff]
    %v176 = vld [vmem:[%s163 + $0x60] sm:$0xff]
    %v177 = vld [vmem:[%s163 + $0x68] sm:$0xff]
    %v178 = vld [vmem:[%s163 + $0x70] sm:$0xff]
    %v179 = vld [vmem:[%s163 + $0x78] sm:$0xff]
    %v180 = vld [vmem:[#allocation5 + $0x1] sm:$0x1]
    %v181 = vlaneseq
    %v182 = vshrl.u32 %v181, 7
    %v183 = vsub.s32 0, %v182
    %v184 = vrot.slane %v180, %v183
    %185 = vmatprep.subr.mxu0 0.0
    %186 = vmatpush1.msra.mxu0 %v179
    %187 = vmatprep.subr.mxu0 0.0
    %188 = vmatpush1.msra.mxu0 %v178
    %189 = vmatprep.subr.mxu0 0.0
    %190 = vmatpush1.msra.mxu0 %v177
    %191 = vmatprep.subr.mxu0 0.0
    %192 = vmatpush1.msra.mxu0 %v176
    %193 = vmatprep.subr.mxu0 0.0
    %194 = vmatpush1.msra.mxu0 %v175
    %195 = vmatprep.subr.mxu0 0.0
    %196 = vmatpush1.msra.mxu0 %v174
    %197 = vmatprep.subr.mxu0 0.0
    %198 = vmatpush1.msra.mxu0 %v173
    %199 = vmatprep.subr.mxu0 0.0
    %200 = vmatpush1.msra.mxu0 %v172
    %201 = vmatprep.subr.mxu0 0.0
    %202 = vmatpush1.msra.mxu0 %v171
    %203 = vmatprep.subr.mxu0 0.0
    %204 = vmatpush1.msra.mxu0 %v170
    %205 = vmatprep.subr.mxu0 0.0
    %206 = vmatpush1.msra.mxu0 %v169
    %207 = vmatprep.subr.mxu0 0.0
    %208 = vmatpush1.msra.mxu0 %v168
    %209 = vmatprep.subr.mxu0 0.0
    %210 = vmatpush1.msra.mxu0 %v167
    %211 = vmatprep.subr.mxu0 0.0
    %212 = vmatpush1.msra.mxu0 %v166
    %213 = vmatprep.subr.mxu0 0.0
    %214 = vmatpush1.msra.mxu0 %v165
    %215 = vmatprep.subr.mxu0 0.0
    %216 = vmatpush1.msra.mxu0 %v164
    %217 = vmatprep.subr.mxu0 0.0
    %218 = vmatpush2.msra.mxu0 0.0
    %219 = vmatprep.subr.mxu0 0.0
    %220 = vmatpush2.msra.mxu0 0.0
    %221 = vmatprep.subr.mxu0 0.0
    %222 = vmatpush2.msra.mxu0 0.0
    %223 = vmatprep.subr.mxu0 0.0
    %224 = vmatpush2.msra.mxu0 0.0
    %225 = vmatprep.subr.mxu0 0.0
    %226 = vmatpush2.msra.mxu0 0.0
    %227 = vmatprep.subr.mxu0 0.0
    %228 = vmatpush2.msra.mxu0 0.0
    %229 = vmatprep.subr.mxu0 0.0
    %230 = vmatpush2.msra.mxu0 0.0
    %231 = vmatprep.subr.mxu0 0.0
    %232 = vmatpush2.msra.mxu0 0.0
    %233 = vmatprep.subr.mxu0 0.0
    %234 = vmatpush2.msra.mxu0 0.0
    %235 = vmatprep.subr.mxu0 0.0
    %236 = vmatpush2.msra.mxu0 0.0
    %237 = vmatprep.subr.mxu0 0.0
    %238 = vmatpush2.msra.mxu0 0.0
    %239 = vmatprep.subr.mxu0 0.0
    %240 = vmatpush2.msra.mxu0 0.0
    %241 = vmatprep.subr.mxu0 0.0
    %242 = vmatpush2.msra.mxu0 0.0
    %243 = vmatprep.subr.mxu0 0.0
    %244 = vmatpush2.msra.mxu0 0.0
    %245 = vmatprep.subr.mxu0 0.0
    %246 = vmatpush2.msra.mxu0 0.0
    %247 = vmatprep.subr.mxu0 0.0
    %248 = vmatpush2.msra.mxu0 0.0
    %249 = vmatprep.mubr.f32.mxu0 0.0
    %250 = vmatmul.mubr.f32.gmra.mxu0 %v162
    %v251 = vpop.f32.mrf.mxu0
    %v252 = vadd.f32 %v184, %v251
    %v253 = vpop.f32.mrf.mxu0
    %254 = vdwg.mxu0
    %v255 = vsel %vm139, %v252, 0.0
    %v256 = vrot.slane %v255, 4
    %v257 = vadd.f32 %v255, %v256
    %v258 = vrot.slane %v257, 2
    %v259 = vadd.f32 %v257, %v258
    %v260 = vrot.slane %v259, 1
    %v261 = vadd.f32 %v259, %v260
    %v262 = vmul.f32 %v261, %v147
    %v263 = vsub.f32 %v252, %v262
    %v264 = vmul.f32 %v263, %v263
    %v265 = vsel %vm139, %v264, 0.0
    %v266 = vrot.slane %v265, 4
    %v267 = vadd.f32 %v265, %v266
    %v268 = vrot.slane %v267, 2
    %v269 = vadd.f32 %v267, %v268
    %v270 = vrot.slane %v269, 1
    %v271 = vadd.f32 %v269, %v270
    %v272 = vmul.f32 %v271, %v147
    %v273 = vadd.f32 %v272, 1e-05
    %v274 = vrsqrt.pop %v273
    %v275 = vmul.f32 %v263, %v274
    %v276 = vmax.f32 %v275, 0.0
    %s277 = scalar_lea.vmem [#allocation2], 256
    %v278 = vld [vmem:[%s277] sm:$0xff]
    %v279 = vld [vmem:[%s277 + $0x8] sm:$0xff]
    %v280 = vld [vmem:[%s277 + $0x10] sm:$0xff]
    %v281 = vld [vmem:[%s277 + $0x18] sm:$0xff]
    %v282 = vld [vmem:[%s277 + $0x20] sm:$0xff]
    %v283 = vld [vmem:[%s277 + $0x28] sm:$0xff]
    %v284 = vld [vmem:[%s277 + $0x30] sm:$0xff]
    %v285 = vld [vmem:[%s277 + $0x38] sm:$0xff]
    %v286 = vld [vmem:[%s277 + $0x40] sm:$0xff]
    %v287 = vld [vmem:[%s277 + $0x48] sm:$0xff]
    %v288 = vld [vmem:[%s277 + $0x50] sm:$0xff]
    %v289 = vld [vmem:[%s277 + $0x58] sm:$0xff]
    %v290 = vld [vmem:[%s277 + $0x60] sm:$0xff]
    %v291 = vld [vmem:[%s277 + $0x68] sm:$0xff]
    %v292 = vld [vmem:[%s277 + $0x70] sm:$0xff]
    %v293 = vld [vmem:[%s277 + $0x78] sm:$0xff]
    %v294 = vld [vmem:[#allocation5 + $0x2] sm:$0x1]
    %v295 = vlaneseq
    %v296 = vshrl.u32 %v295, 7
    %v297 = vsub.s32 0, %v296
    %v298 = vrot.slane %v294, %v297
    %299 = vmatprep.subr.mxu0 0.0
    %300 = vmatpush1.msra.mxu0 %v293
    %301 = vmatprep.subr.mxu0 0.0
    %302 = vmatpush1.msra.mxu0 %v292
    %303 = vmatprep.subr.mxu0 0.0
    %304 = vmatpush1.msra.mxu0 %v291
    %305 = vmatprep.subr.mxu0 0.0
    %306 = vmatpush1.msra.mxu0 %v290
    %307 = vmatprep.subr.mxu0 0.0
    %308 = vmatpush1.msra.mxu0 %v289
    %309 = vmatprep.subr.mxu0 0.0
    %310 = vmatpush1.msra.mxu0 %v288
    %311 = vmatprep.subr.mxu0 0.0
    %312 = vmatpush1.msra.mxu0 %v287
    %313 = vmatprep.subr.mxu0 0.0
    %314 = vmatpush1.msra.mxu0 %v286
    %315 = vmatprep.subr.mxu0 0.0
    %316 = vmatpush1.msra.mxu0 %v285
    %317 = vmatprep.subr.mxu0 0.0
    %318 = vmatpush1.msra.mxu0 %v284
    %319 = vmatprep.subr.mxu0 0.0
    %320 = vmatpush1.msra.mxu0 %v283
    %321 = vmatprep.subr.mxu0 0.0
    %322 = vmatpush1.msra.mxu0 %v282
    %323 = vmatprep.subr.mxu0 0.0
    %324 = vmatpush1.msra.mxu0 %v281
    %325 = vmatprep.subr.mxu0 0.0
    %326 = vmatpush1.msra.mxu0 %v280
    %327 = vmatprep.subr.mxu0 0.0
    %328 = vmatpush1.msra.mxu0 %v279
    %329 = vmatprep.subr.mxu0 0.0
    %330 = vmatpush1.msra.mxu0 %v278
    %331 = vmatprep.subr.mxu0 0.0
    %332 = vmatpush2.msra.mxu0 0.0
    %333 = vmatprep.subr.mxu0 0.0
    %334 = vmatpush2.msra.mxu0 0.0
    %335 = vmatprep.subr.mxu0 0.0
    %336 = vmatpush2.msra.mxu0 0.0
    %337 = vmatprep.subr.mxu0 0.0
    %338 = vmatpush2.msra.mxu0 0.0
    %339 = vmatprep.subr.mxu0 0.0
    %340 = vmatpush2.msra.mxu0 0.0
    %341 = vmatprep.subr.mxu0 0.0
    %342 = vmatpush2.msra.mxu0 0.0
    %343 = vmatprep.subr.mxu0 0.0
    %344 = vmatpush2.msra.mxu0 0.0
    %345 = vmatprep.subr.mxu0 0.0
    %346 = vmatpush2.msra.mxu0 0.0
    %347 = vmatprep.subr.mxu0 0.0
    %348 = vmatpush2.msra.mxu0 0.0
    %349 = vmatprep.subr.mxu0 0.0
    %350 = vmatpush2.msra.mxu0 0.0
    %351 = vmatprep.subr.mxu0 0.0
    %352 = vmatpush2.msra.mxu0 0.0
    %353 = vmatprep.subr.mxu0 0.0
    %354 = vmatpush2.msra.mxu0 0.0
    %355 = vmatprep.subr.mxu0 0.0
    %356 = vmatpush2.msra.mxu0 0.0
    %357 = vmatprep.subr.mxu0 0.0
    %358 = vmatpush2.msra.mxu0 0.0
    %359 = vmatprep.subr.mxu0 0.0
    %360 = vmatpush2.msra.mxu0 0.0
    %361 = vmatprep.subr.mxu0 0.0
    %362 = vmatpush2.msra.mxu0 0.0
    %363 = vmatprep.mubr.f32.mxu0 0.0
    %364 = vmatmul.mubr.f32.gmra.mxu0 %v276
    %v365 = vpop.f32.mrf.mxu0
    %v366 = vadd.f32 %v298, %v365
    %v367 = vpop.f32.mrf.mxu0
    %368 = vdwg.mxu0
    %v369 = vsel %vm139, %v366, 0.0
    %v370 = vrot.slane %v369, 4
    %v371 = vadd.f32 %v369, %v370
    %v372 = vrot.slane %v371, 2
    %v373 = vadd.f32 %v371, %v372
    %v374 = vrot.slane %v373, 1
    %v375 = vadd.f32 %v373, %v374
    %v376 = vmul.f32 %v375, %v147
    %v377 = vsub.f32 %v366, %v376
    %v378 = vmul.f32 %v377, %v377
    %v379 = vsel %vm139, %v378, 0.0
    %v380 = vrot.slane %v379, 4
    %v381 = vadd.f32 %v379, %v380
    %v382 = vrot.slane %v381, 2
    %v383 = vadd.f32 %v381, %v382
    %v384 = vrot.slane %v383, 1
    %v385 = vadd.f32 %v383, %v384
    %v386 = vmul.f32 %v385, %v147
    %v387 = vadd.f32 %v386, 1e-05
    %v388 = vrsqrt.pop %v387
    %v389 = vmul.f32 %v377, %v388
    %s390 = scalar_lea.vmem [#allocation2], 384
    %v391 = vld [vmem:[%s390] sm:$0xff]
    %v392 = vld [vmem:[%s390 + $0x8] sm:$0xff]
    %v393 = vld [vmem:[%s390 + $0x10] sm:$0xff]
    %v394 = vld [vmem:[%s390 + $0x18] sm:$0xff]
    %v395 = vld [vmem:[%s390 + $0x20] sm:$0xff]
    %v396 = vld [vmem:[%s390 + $0x28] sm:$0xff]
    %v397 = vld [vmem:[%s390 + $0x30] sm:$0xff]
    %v398 = vld [vmem:[%s390 + $0x38] sm:$0xff]
    %v399 = vld [vmem:[%s390 + $0x40] sm:$0xff]
    %v400 = vld [vmem:[%s390 + $0x48] sm:$0xff]
    %v401 = vld [vmem:[%s390 + $0x50] sm:$0xff]
    %v402 = vld [vmem:[%s390 + $0x58] sm:$0xff]
    %v403 = vld [vmem:[%s390 + $0x60] sm:$0xff]
    %v404 = vld [vmem:[%s390 + $0x68] sm:$0xff]
    %v405 = vld [vmem:[%s390 + $0x70] sm:$0xff]
    %v406 = vld [vmem:[%s390 + $0x78] sm:$0xff]
    %407 = vmatprep.subr.mxu0 0.0
    %408 = vmatpush1.msra.mxu0 %v406
    %409 = vmatprep.subr.mxu0 0.0
    %410 = vmatpush1.msra.mxu0 %v405
    %411 = vmatprep.subr.mxu0 0.0
    %412 = vmatpush1.msra.mxu0 %v404
    %413 = vmatprep.subr.mxu0 0.0
    %414 = vmatpush1.msra.mxu0 %v403
    %415 = vmatprep.subr.mxu0 0.0
    %416 = vmatpush1.msra.mxu0 %v402
    %417 = vmatprep.subr.mxu0 0.0
    %418 = vmatpush1.msra.mxu0 %v401
    %419 = vmatprep.subr.mxu0 0.0
    %420 = vmatpush1.msra.mxu0 %v400
    %421 = vmatprep.subr.mxu0 0.0
    %422 = vmatpush1.msra.mxu0 %v399
    %423 = vmatprep.subr.mxu0 0.0
    %424 = vmatpush1.msra.mxu0 %v398
    %425 = vmatprep.subr.mxu0 0.0
    %426 = vmatpush1.msra.mxu0 %v397
    %427 = vmatprep.subr.mxu0 0.0
    %428 = vmatpush1.msra.mxu0 %v396
    %429 = vmatprep.subr.mxu0 0.0
    %430 = vmatpush1.msra.mxu0 %v395
    %431 = vmatprep.subr.mxu0 0.0
    %432 = vmatpush1.msra.mxu0 %v394
    %433 = vmatprep.subr.mxu0 0.0
    %434 = vmatpush1.msra.mxu0 %v393
    %435 = vmatprep.subr.mxu0 0.0
    %436 = vmatpush1.msra.mxu0 %v392
    %437 = vmatprep.subr.mxu0 0.0
    %438 = vmatpush1.msra.mxu0 %v391
    %439 = vmatprep.subr.mxu0 0.0
    %440 = vmatpush2.msra.mxu0 0.0
    %441 = vmatprep.subr.mxu0 0.0
    %442 = vmatpush2.msra.mxu0 0.0
    %443 = vmatprep.subr.mxu0 0.0
    %444 = vmatpush2.msra.mxu0 0.0
    %445 = vmatprep.subr.mxu0 0.0
    %446 = vmatpush2.msra.mxu0 0.0
    %447 = vmatprep.subr.mxu0 0.0
    %448 = vmatpush2.msra.mxu0 0.0
    %449 = vmatprep.subr.mxu0 0.0
    %450 = vmatpush2.msra.mxu0 0.0
    %451 = vmatprep.subr.mxu0 0.0
    %452 = vmatpush2.msra.mxu0 0.0
    %453 = vmatprep.subr.mxu0 0.0
    %454 = vmatpush2.msra.mxu0 0.0
    %455 = vmatprep.subr.mxu0 0.0
    %456 = vmatpush2.msra.mxu0 0.0
    %457 = vmatprep.subr.mxu0 0.0
    %458 = vmatpush2.msra.mxu0 0.0
    %459 = vmatprep.subr.mxu0 0.0
    %460 = vmatpush2.msra.mxu0 0.0
    %461 = vmatprep.subr.mxu0 0.0
    %462 = vmatpush2.msra.mxu0 0.0
    %463 = vmatprep.subr.mxu0 0.0
    %464 = vmatpush2.msra.mxu0 0.0
    %465 = vmatprep.subr.mxu0 0.0
    %466 = vmatpush2.msra.mxu0 0.0
    %467 = vmatprep.subr.mxu0 0.0
    %468 = vmatpush2.msra.mxu0 0.0
    %469 = vmatprep.subr.mxu0 0.0
    %470 = vmatpush2.msra.mxu0 0.0
    %471 = vmatprep.mubr.f32.mxu0 0.0
    %472 = vmatmul.mubr.f32.gmra.mxu0 %v389
    %v473 = vpop.f32.mrf.mxu0
    %v474 = vadd.f32 0.0, %v473
    %v475 = vpop.f32.mrf.mxu0
    %476 = vdwg.mxu0
    %v477 = vmax.f32 %v474, 0.0
    %s478 = scalar_lea.vmem [#allocation2], 512
    %v479 = vld [vmem:[%s478] sm:$0xff]
    %v480 = vld [vmem:[%s478 + $0x8] sm:$0xff]
    %v481 = vld [vmem:[%s478 + $0x10] sm:$0xff]
    %v482 = vld [vmem:[%s478 + $0x18] sm:$0xff]
    %v483 = vld [vmem:[%s478 + $0x20] sm:$0xff]
    %v484 = vld [vmem:[%s478 + $0x28] sm:$0xff]
    %v485 = vld [vmem:[%s478 + $0x30] sm:$0xff]
    %v486 = vld [vmem:[%s478 + $0x38] sm:$0xff]
    %v487 = vld [vmem:[%s478 + $0x40] sm:$0xff]
    %v488 = vld [vmem:[%s478 + $0x48] sm:$0xff]
    %v489 = vld [vmem:[%s478 + $0x50] sm:$0xff]
    %v490 = vld [vmem:[%s478 + $0x58] sm:$0xff]
    %v491 = vld [vmem:[%s478 + $0x60] sm:$0xff]
    %v492 = vld [vmem:[%s478 + $0x68] sm:$0xff]
    %v493 = vld [vmem:[%s478 + $0x70] sm:$0xff]
    %v494 = vld [vmem:[%s478 + $0x78] sm:$0xff]
    %495 = vmatprep.subr.mxu0 0.0
    %496 = vmatpush1.msra.mxu0 %v494
    %497 = vmatprep.subr.mxu0 0.0
    %498 = vmatpush1.msra.mxu0 %v493
    %499 = vmatprep.subr.mxu0 0.0
    %500 = vmatpush1.msra.mxu0 %v492
    %501 = vmatprep.subr.mxu0 0.0
    %502 = vmatpush1.msra.mxu0 %v491
    %503 = vmatprep.subr.mxu0 0.0
    %504 = vmatpush1.msra.mxu0 %v490
    %505 = vmatprep.subr.mxu0 0.0
    %506 = vmatpush1.msra.mxu0 %v489
    %507 = vmatprep.subr.mxu0 0.0
    %508 = vmatpush1.msra.mxu0 %v488
    %509 = vmatprep.subr.mxu0 0.0
    %510 = vmatpush1.msra.mxu0 %v487
    %511 = vmatprep.subr.mxu0 0.0
    %512 = vmatpush1.msra.mxu0 %v486
    %513 = vmatprep.subr.mxu0 0.0
    %514 = vmatpush1.msra.mxu0 %v485
    %515 = vmatprep.subr.mxu0 0.0
    %516 = vmatpush1.msra.mxu0 %v484
    %517 = vmatprep.subr.mxu0 0.0
    %518 = vmatpush1.msra.mxu0 %v483
    %519 = vmatprep.subr.mxu0 0.0
    %520 = vmatpush1.msra.mxu0 %v482
    %521 = vmatprep.subr.mxu0 0.0
    %522 = vmatpush1.msra.mxu0 %v481
    %523 = vmatprep.subr.mxu0 0.0
    %524 = vmatpush1.msra.mxu0 %v480
    %525 = vmatprep.subr.mxu0 0.0
    %526 = vmatpush1.msra.mxu0 %v479
    %527 = vmatprep.subr.mxu0 0.0
    %528 = vmatpush2.msra.mxu0 0.0
    %529 = vmatprep.subr.mxu0 0.0
    %530 = vmatpush2.msra.mxu0 0.0
    %531 = vmatprep.subr.mxu0 0.0
    %532 = vmatpush2.msra.mxu0 0.0
    %533 = vmatprep.subr.mxu0 0.0
    %534 = vmatpush2.msra.mxu0 0.0
    %535 = vmatprep.subr.mxu0 0.0
    %536 = vmatpush2.msra.mxu0 0.0
    %537 = vmatprep.subr.mxu0 0.0
    %538 = vmatpush2.msra.mxu0 0.0
    %539 = vmatprep.subr.mxu0 0.0
    %540 = vmatpush2.msra.mxu0 0.0
    %541 = vmatprep.subr.mxu0 0.0
    %542 = vmatpush2.msra.mxu0 0.0
    %543 = vmatprep.subr.mxu0 0.0
    %544 = vmatpush2.msra.mxu0 0.0
    %545 = vmatprep.subr.mxu0 0.0
    %546 = vmatpush2.msra.mxu0 0.0
    %547 = vmatprep.subr.mxu0 0.0
    %548 = vmatpush2.msra.mxu0 0.0
    %549 = vmatprep.subr.mxu0 0.0
    %550 = vmatpush2.msra.mxu0 0.0
    %551 = vmatprep.subr.mxu0 0.0
    %552 = vmatpush2.msra.mxu0 0.0
    %553 = vmatprep.subr.mxu0 0.0
    %554 = vmatpush2.msra.mxu0 0.0
    %555 = vmatprep.subr.mxu0 0.0
    %556 = vmatpush2.msra.mxu0 0.0
    %557 = vmatprep.subr.mxu0 0.0
    %558 = vmatpush2.msra.mxu0 0.0
    %559 = vmatprep.mubr.f32.mxu0 0.0
    %560 = vmatmul.mubr.f32.gmra.mxu0 %v477
    %v561 = vpop.f32.mrf.mxu0
    %v562 = vadd.f32 0.0, %v561
    %v563 = vpop.f32.mrf.mxu0
    %564 = vdwg.mxu0
    %v565 = vmul.f32 %v562, 2.0
    %v566 = vxor.u32 %v565, 2147483648
    %v567 = vmul.f32 %v566, 1.442695
    %v568 = vpow.pop %v567
    %v569 = vadd.f32 %v568, 1.0
    %v570 = vrcp.pop %v569
    %v571 = vmul.f32 1.0, %v570
    %v572 = vmul.f32 %v389, %v571
    %vm573 = vcmp.lt.s32.totalorder %v46, 16
    %v574 = vsel %vm139, %v572, 0.0
    %575 = vadd.xlane.f32.xlu0 %v574
    %v576 = vpop.xlane.xlu0 %575
    %v577 = vmul.f32 %v576, 0.0625
    %v578 = vsel %vm573, 1, 0
    %vm579 = vcmp.eq.s32.totalorder %v578, 1
    %v580 = vsel %vm579, %v572, -1e+30
    %v581 = vsel %vm139, %v580, -inf
    %582 = vmax.xlane.f32.xlu0 %v581
    %v583 = vpop.xlane.xlu0 %582
    %v584 = vld [vmem:[#allocation5 + $0x8] sm:$0x1]
    %v585 = vlaneseq
    %v586 = vshrl.u32 %v585, 7
    %v587 = vsub.s32 0, %v586
    %v588 = vrot.slane %v584, %v587
    %v589 = vmul.f32 %v577, %v588
    %v590 = vld [vmem:[#allocation5 + $0x9] sm:$0x1]
    %v591 = vlaneseq
    %v592 = vshrl.u32 %v591, 7
    %v593 = vsub.s32 0, %v592
    %v594 = vrot.slane %v590, %v593
    %v595 = vmul.f32 %v583, %v594
    %v596 = vadd.f32 %v589, %v595
    %v597 = vld [vmem:[#allocation5 + $0xa] sm:$0x1]
    %v598 = vlaneseq
    %v599 = vshrl.u32 %v598, 7
    %v600 = vsub.s32 0, %v599
    %v601 = vrot.slane %v597, %v600
    %v602 = vadd.f32 %v596, %v601
    %v603 = vxor.u32 %v602, 2147483648
    %v604 = vmul.f32 %v603, 1.442695
    %v605 = vpow.pop %v604
    %v606 = vadd.f32 %v605, 1.0
    %v607 = vrcp.pop %v606
    %v608 = vmul.f32 1.0, %v607
    %v609 = vmul.f32 %v572, %v608
    %s610 = scalar_lea.vmem [#allocation2], 896
    %v611 = vld [vmem:[%s610] sm:$0xff]
    %v612 = vld [vmem:[%s610 + $0x8] sm:$0xff]
    %v613 = vld [vmem:[%s610 + $0x10] sm:$0xff]
    %v614 = vld [vmem:[%s610 + $0x18] sm:$0xff]
    %v615 = vld [vmem:[%s610 + $0x20] sm:$0xff]
    %v616 = vld [vmem:[%s610 + $0x28] sm:$0xff]
    %v617 = vld [vmem:[%s610 + $0x30] sm:$0xff]
    %v618 = vld [vmem:[%s610 + $0x38] sm:$0xff]
    %v619 = vld [vmem:[%s610 + $0x40] sm:$0xff]
    %v620 = vld [vmem:[%s610 + $0x48] sm:$0xff]
    %v621 = vld [vmem:[%s610 + $0x50] sm:$0xff]
    %v622 = vld [vmem:[%s610 + $0x58] sm:$0xff]
    %v623 = vld [vmem:[%s610 + $0x60] sm:$0xff]
    %v624 = vld [vmem:[%s610 + $0x68] sm:$0xff]
    %v625 = vld [vmem:[%s610 + $0x70] sm:$0xff]
    %v626 = vld [vmem:[%s610 + $0x78] sm:$0xff]
    %v627 = vld [vmem:[#allocation5 + $0x3] sm:$0x1]
    %v628 = vlaneseq
    %v629 = vshrl.u32 %v628, 7
    %v630 = vsub.s32 0, %v629
    %v631 = vrot.slane %v627, %v630
    %632 = vmatprep.subr.mxu0 0.0
    %633 = vmatpush1.msra.mxu0 %v626
    %634 = vmatprep.subr.mxu0 0.0
    %635 = vmatpush1.msra.mxu0 %v625
    %636 = vmatprep.subr.mxu0 0.0
    %637 = vmatpush1.msra.mxu0 %v624
    %638 = vmatprep.subr.mxu0 0.0
    %639 = vmatpush1.msra.mxu0 %v623
    %640 = vmatprep.subr.mxu0 0.0
    %641 = vmatpush1.msra.mxu0 %v622
    %642 = vmatprep.subr.mxu0 0.0
    %643 = vmatpush1.msra.mxu0 %v621
    %644 = vmatprep.subr.mxu0 0.0
    %645 = vmatpush1.msra.mxu0 %v620
    %646 = vmatprep.subr.mxu0 0.0
    %647 = vmatpush1.msra.mxu0 %v619
    %648 = vmatprep.subr.mxu0 0.0
    %649 = vmatpush1.msra.mxu0 %v618
    %650 = vmatprep.subr.mxu0 0.0
    %651 = vmatpush1.msra.mxu0 %v617
    %652 = vmatprep.subr.mxu0 0.0
    %653 = vmatpush1.msra.mxu0 %v616
    %654 = vmatprep.subr.mxu0 0.0
    %655 = vmatpush1.msra.mxu0 %v615
    %656 = vmatprep.subr.mxu0 0.0
    %657 = vmatpush1.msra.mxu0 %v614
    %658 = vmatprep.subr.mxu0 0.0
    %659 = vmatpush1.msra.mxu0 %v613
    %660 = vmatprep.subr.mxu0 0.0
    %661 = vmatpush1.msra.mxu0 %v612
    %662 = vmatprep.subr.mxu0 0.0
    %663 = vmatpush1.msra.mxu0 %v611
    %664 = vmatprep.subr.mxu0 0.0
    %665 = vmatpush2.msra.mxu0 0.0
    %666 = vmatprep.subr.mxu0 0.0
    %667 = vmatpush2.msra.mxu0 0.0
    %668 = vmatprep.subr.mxu0 0.0
    %669 = vmatpush2.msra.mxu0 0.0
    %670 = vmatprep.subr.mxu0 0.0
    %671 = vmatpush2.msra.mxu0 0.0
    %672 = vmatprep.subr.mxu0 0.0
    %673 = vmatpush2.msra.mxu0 0.0
    %674 = vmatprep.subr.mxu0 0.0
    %675 = vmatpush2.msra.mxu0 0.0
    %676 = vmatprep.subr.mxu0 0.0
    %677 = vmatpush2.msra.mxu0 0.0
    %678 = vmatprep.subr.mxu0 0.0
    %679 = vmatpush2.msra.mxu0 0.0
    %680 = vmatprep.subr.mxu0 0.0
    %681 = vmatpush2.msra.mxu0 0.0
    %682 = vmatprep.subr.mxu0 0.0
    %683 = vmatpush2.msra.mxu0 0.0
    %684 = vmatprep.subr.mxu0 0.0
    %685 = vmatpush2.msra.mxu0 0.0
    %686 = vmatprep.subr.mxu0 0.0
    %687 = vmatpush2.msra.mxu0 0.0
    %688 = vmatprep.subr.mxu0 0.0
    %689 = vmatpush2.msra.mxu0 0.0
    %690 = vmatprep.subr.mxu0 0.0
    %691 = vmatpush2.msra.mxu0 0.0
    %692 = vmatprep.subr.mxu0 0.0
    %693 = vmatpush2.msra.mxu0 0.0
    %694 = vmatprep.subr.mxu0 0.0
    %695 = vmatpush2.msra.mxu0 0.0
    %696 = vmatprep.mubr.f32.mxu0 0.0
    %697 = vmatmul.mubr.f32.gmra.mxu0 %v609
    %v698 = vpop.f32.mrf.mxu0
    %v699 = vadd.f32 %v631, %v698
    %v700 = vpop.f32.mrf.mxu0
    %701 = vdwg.mxu0
    %v702 = vmax.f32 %v699, 0.0
    %s703 = scalar_lea.vmem [#allocation2], 1024
    %v704 = vld [vmem:[%s703] sm:$0xff]
    %v705 = vld [vmem:[%s703 + $0x8] sm:$0xff]
    %v706 = vld [vmem:[%s703 + $0x10] sm:$0xff]
    %v707 = vld [vmem:[%s703 + $0x18] sm:$0xff]
    %v708 = vld [vmem:[%s703 + $0x20] sm:$0xff]
    %v709 = vld [vmem:[%s703 + $0x28] sm:$0xff]
    %v710 = vld [vmem:[%s703 + $0x30] sm:$0xff]
    %v711 = vld [vmem:[%s703 + $0x38] sm:$0xff]
    %v712 = vld [vmem:[%s703 + $0x40] sm:$0xff]
    %v713 = vld [vmem:[%s703 + $0x48] sm:$0xff]
    %v714 = vld [vmem:[%s703 + $0x50] sm:$0xff]
    %v715 = vld [vmem:[%s703 + $0x58] sm:$0xff]
    %v716 = vld [vmem:[%s703 + $0x60] sm:$0xff]
    %v717 = vld [vmem:[%s703 + $0x68] sm:$0xff]
    %v718 = vld [vmem:[%s703 + $0x70] sm:$0xff]
    %v719 = vld [vmem:[%s703 + $0x78] sm:$0xff]
    %v720 = vld [vmem:[#allocation5 + $0x4] sm:$0x1]
    %v721 = vlaneseq
    %v722 = vshrl.u32 %v721, 7
    %v723 = vsub.s32 0, %v722
    %v724 = vrot.slane %v720, %v723
    %725 = vmatprep.subr.mxu0 0.0
    %726 = vmatpush1.msra.mxu0 %v719
    %727 = vmatprep.subr.mxu0 0.0
    %728 = vmatpush1.msra.mxu0 %v718
    %729 = vmatprep.subr.mxu0 0.0
    %730 = vmatpush1.msra.mxu0 %v717
    %731 = vmatprep.subr.mxu0 0.0
    %732 = vmatpush1.msra.mxu0 %v716
    %733 = vmatprep.subr.mxu0 0.0
    %734 = vmatpush1.msra.mxu0 %v715
    %735 = vmatprep.subr.mxu0 0.0
    %736 = vmatpush1.msra.mxu0 %v714
    %737 = vmatprep.subr.mxu0 0.0
    %738 = vmatpush1.msra.mxu0 %v713
    %739 = vmatprep.subr.mxu0 0.0
    %740 = vmatpush1.msra.mxu0 %v712
    %741 = vmatprep.subr.mxu0 0.0
    %742 = vmatpush1.msra.mxu0 %v711
    %743 = vmatprep.subr.mxu0 0.0
    %744 = vmatpush1.msra.mxu0 %v710
    %745 = vmatprep.subr.mxu0 0.0
    %746 = vmatpush1.msra.mxu0 %v709
    %747 = vmatprep.subr.mxu0 0.0
    %748 = vmatpush1.msra.mxu0 %v708
    %749 = vmatprep.subr.mxu0 0.0
    %750 = vmatpush1.msra.mxu0 %v707
    %751 = vmatprep.subr.mxu0 0.0
    %752 = vmatpush1.msra.mxu0 %v706
    %753 = vmatprep.subr.mxu0 0.0
    %754 = vmatpush1.msra.mxu0 %v705
    %755 = vmatprep.subr.mxu0 0.0
    %756 = vmatpush1.msra.mxu0 %v704
    %757 = vmatprep.subr.mxu0 0.0
    %758 = vmatpush2.msra.mxu0 0.0
    %759 = vmatprep.subr.mxu0 0.0
    %760 = vmatpush2.msra.mxu0 0.0
    %761 = vmatprep.subr.mxu0 0.0
    %762 = vmatpush2.msra.mxu0 0.0
    %763 = vmatprep.subr.mxu0 0.0
    %764 = vmatpush2.msra.mxu0 0.0
    %765 = vmatprep.subr.mxu0 0.0
    %766 = vmatpush2.msra.mxu0 0.0
    %767 = vmatprep.subr.mxu0 0.0
    %768 = vmatpush2.msra.mxu0 0.0
    %769 = vmatprep.subr.mxu0 0.0
    %770 = vmatpush2.msra.mxu0 0.0
    %771 = vmatprep.subr.mxu0 0.0
    %772 = vmatpush2.msra.mxu0 0.0
    %773 = vmatprep.subr.mxu0 0.0
    %774 = vmatpush2.msra.mxu0 0.0
    %775 = vmatprep.subr.mxu0 0.0
    %776 = vmatpush2.msra.mxu0 0.0
    %777 = vmatprep.subr.mxu0 0.0
    %778 = vmatpush2.msra.mxu0 0.0
    %779 = vmatprep.subr.mxu0 0.0
    %780 = vmatpush2.msra.mxu0 0.0
    %781 = vmatprep.subr.mxu0 0.0
    %782 = vmatpush2.msra.mxu0 0.0
    %783 = vmatprep.subr.mxu0 0.0
    %784 = vmatpush2.msra.mxu0 0.0
    %785 = vmatprep.subr.mxu0 0.0
    %786 = vmatpush2.msra.mxu0 0.0
    %787 = vmatprep.subr.mxu0 0.0
    %788 = vmatpush2.msra.mxu0 0.0
    %789 = vmatprep.mubr.f32.mxu0 0.0
    %790 = vmatmul.mubr.f32.gmra.mxu0 %v702
    %v791 = vpop.f32.mrf.mxu0
    %v792 = vadd.f32 %v724, %v791
    %v793 = vpop.f32.mrf.mxu0
    %794 = vdwg.mxu0
    %s795 = scalar_lea.vmem [#allocation2], 640
    %v796 = vld [vmem:[%s795] sm:$0xff]
    %v797 = vld [vmem:[%s795 + $0x8] sm:$0xff]
    %v798 = vld [vmem:[%s795 + $0x10] sm:$0xff]
    %v799 = vld [vmem:[%s795 + $0x18] sm:$0xff]
    %v800 = vld [vmem:[%s795 + $0x20] sm:$0xff]
    %v801 = vld [vmem:[%s795 + $0x28] sm:$0xff]
    %v802 = vld [vmem:[%s795 + $0x30] sm:$0xff]
    %v803 = vld [vmem:[%s795 + $0x38] sm:$0xff]
    %v804 = vld [vmem:[%s795 + $0x40] sm:$0xff]
    %v805 = vld [vmem:[%s795 + $0x48] sm:$0xff]
    %v806 = vld [vmem:[%s795 + $0x50] sm:$0xff]
    %v807 = vld [vmem:[%s795 + $0x58] sm:$0xff]
    %v808 = vld [vmem:[%s795 + $0x60] sm:$0xff]
    %v809 = vld [vmem:[%s795 + $0x68] sm:$0xff]
    %v810 = vld [vmem:[%s795 + $0x70] sm:$0xff]
    %v811 = vld [vmem:[%s795 + $0x78] sm:$0xff]
    %812 = vmatprep.subr.mxu0 0.0
    %813 = vmatpush1.msra.mxu0 %v811
    %814 = vmatprep.subr.mxu0 0.0
    %815 = vmatpush1.msra.mxu0 %v810
    %816 = vmatprep.subr.mxu0 0.0
    %817 = vmatpush1.msra.mxu0 %v809
    %818 = vmatprep.subr.mxu0 0.0
    %819 = vmatpush1.msra.mxu0 %v808
    %820 = vmatprep.subr.mxu0 0.0
    %821 = vmatpush1.msra.mxu0 %v807
    %822 = vmatprep.subr.mxu0 0.0
    %823 = vmatpush1.msra.mxu0 %v806
    %824 = vmatprep.subr.mxu0 0.0
    %825 = vmatpush1.msra.mxu0 %v805
    %826 = vmatprep.subr.mxu0 0.0
    %827 = vmatpush1.msra.mxu0 %v804
    %828 = vmatprep.subr.mxu0 0.0
    %829 = vmatpush1.msra.mxu0 %v803
    %830 = vmatprep.subr.mxu0 0.0
    %831 = vmatpush1.msra.mxu0 %v802
    %832 = vmatprep.subr.mxu0 0.0
    %833 = vmatpush1.msra.mxu0 %v801
    %834 = vmatprep.subr.mxu0 0.0
    %835 = vmatpush1.msra.mxu0 %v800
    %836 = vmatprep.subr.mxu0 0.0
    %837 = vmatpush1.msra.mxu0 %v799
    %838 = vmatprep.subr.mxu0 0.0
    %839 = vmatpush1.msra.mxu0 %v798
    %840 = vmatprep.subr.mxu0 0.0
    %841 = vmatpush1.msra.mxu0 %v797
    %842 = vmatprep.subr.mxu0 0.0
    %843 = vmatpush1.msra.mxu0 %v796
    %844 = vmatprep.subr.mxu0 0.0
    %845 = vmatpush2.msra.mxu0 0.0
    %846 = vmatprep.subr.mxu0 0.0
    %847 = vmatpush2.msra.mxu0 0.0
    %848 = vmatprep.subr.mxu0 0.0
    %849 = vmatpush2.msra.mxu0 0.0
    %850 = vmatprep.subr.mxu0 0.0
    %851 = vmatpush2.msra.mxu0 0.0
    %852 = vmatprep.subr.mxu0 0.0
    %853 = vmatpush2.msra.mxu0 0.0
    %854 = vmatprep.subr.mxu0 0.0
    %855 = vmatpush2.msra.mxu0 0.0
    %856 = vmatprep.subr.mxu0 0.0
    %857 = vmatpush2.msra.mxu0 0.0
    %858 = vmatprep.subr.mxu0 0.0
    %859 = vmatpush2.msra.mxu0 0.0
    %860 = vmatprep.subr.mxu0 0.0
    %861 = vmatpush2.msra.mxu0 0.0
    %862 = vmatprep.subr.mxu0 0.0
    %863 = vmatpush2.msra.mxu0 0.0
    %864 = vmatprep.subr.mxu0 0.0
    %865 = vmatpush2.msra.mxu0 0.0
    %866 = vmatprep.subr.mxu0 0.0
    %867 = vmatpush2.msra.mxu0 0.0
    %868 = vmatprep.subr.mxu0 0.0
    %869 = vmatpush2.msra.mxu0 0.0
    %870 = vmatprep.subr.mxu0 0.0
    %871 = vmatpush2.msra.mxu0 0.0
    %872 = vmatprep.subr.mxu0 0.0
    %873 = vmatpush2.msra.mxu0 0.0
    %874 = vmatprep.subr.mxu0 0.0
    %875 = vmatpush2.msra.mxu0 0.0
    %876 = vmatprep.mubr.f32.mxu0 0.0
    %877 = vmatmul.mubr.f32.gmra.mxu0 %v792
    %v878 = vpop.f32.mrf.mxu0
    %v879 = vadd.f32 0.0, %v878
    %v880 = vpop.f32.mrf.mxu0
    %881 = vdwg.mxu0
    %v882 = vmul.f32 %v879, 0.25
    %vm883 = vcmp.lt.s32.totalorder %v46, 64
    %v884 = vsel %vm883, 1, 0
    %vm885 = vcmp.eq.s32.totalorder %v884, 1
    %v886 = vsel %vm885, %v882, -1e+30
    %v887 = vsel %vm139, %v886, -inf
    %888 = vmax.xlane.f32.xlu0 %v887
    %v889 = vpop.xlane.xlu0 %888
    %v890 = vsub.f32 %v886, %v889
    %v891 = vmul.f32 %v890, 1.442695
    %v892 = vpow.pop %v891
    %v893 = vsel %vm139, %v892, 0.0
    %894 = vadd.xlane.f32.xlu0 %v893
    %v895 = vpop.xlane.xlu0 %894
    %v896 = vrcp.pop %v895
    %v897 = vmul.f32 %v892, %v896
    %s898 = scalar_lea.vmem [#allocation2], 768
    %v899 = vld [vmem:[%s898] sm:$0xff]
    %v900 = vld [vmem:[%s898 + $0x8] sm:$0xff]
    %v901 = vld [vmem:[%s898 + $0x10] sm:$0xff]
    %v902 = vld [vmem:[%s898 + $0x18] sm:$0xff]
    %v903 = vld [vmem:[%s898 + $0x20] sm:$0xff]
    %v904 = vld [vmem:[%s898 + $0x28] sm:$0xff]
    %v905 = vld [vmem:[%s898 + $0x30] sm:$0xff]
    %v906 = vld [vmem:[%s898 + $0x38] sm:$0xff]
    %v907 = vld [vmem:[%s898 + $0x40] sm:$0xff]
    %v908 = vld [vmem:[%s898 + $0x48] sm:$0xff]
    %v909 = vld [vmem:[%s898 + $0x50] sm:$0xff]
    %v910 = vld [vmem:[%s898 + $0x58] sm:$0xff]
    %v911 = vld [vmem:[%s898 + $0x60] sm:$0xff]
    %v912 = vld [vmem:[%s898 + $0x68] sm:$0xff]
    %v913 = vld [vmem:[%s898 + $0x70] sm:$0xff]
    %v914 = vld [vmem:[%s898 + $0x78] sm:$0xff]
    %915 = vmatprep.subr.mxu0 0.0
    %916 = vmatpush1.msra.mxu0 %v914
    %917 = vmatprep.subr.mxu0 0.0
    %918 = vmatpush1.msra.mxu0 %v913
    %919 = vmatprep.subr.mxu0 0.0
    %920 = vmatpush1.msra.mxu0 %v912
    %921 = vmatprep.subr.mxu0 0.0
    %922 = vmatpush1.msra.mxu0 %v911
    %923 = vmatprep.subr.mxu0 0.0
    %924 = vmatpush1.msra.mxu0 %v910
    %925 = vmatprep.subr.mxu0 0.0
    %926 = vmatpush1.msra.mxu0 %v909
    %927 = vmatprep.subr.mxu0 0.0
    %928 = vmatpush1.msra.mxu0 %v908
    %929 = vmatprep.subr.mxu0 0.0
    %930 = vmatpush1.msra.mxu0 %v907
    %931 = vmatprep.subr.mxu0 0.0
    %932 = vmatpush1.msra.mxu0 %v906
    %933 = vmatprep.subr.mxu0 0.0
    %934 = vmatpush1.msra.mxu0 %v905
    %935 = vmatprep.subr.mxu0 0.0
    %936 = vmatpush1.msra.mxu0 %v904
    %937 = vmatprep.subr.mxu0 0.0
    %938 = vmatpush1.msra.mxu0 %v903
    %939 = vmatprep.subr.mxu0 0.0
    %940 = vmatpush1.msra.mxu0 %v902
    %941 = vmatprep.subr.mxu0 0.0
    %942 = vmatpush1.msra.mxu0 %v901
    %943 = vmatprep.subr.mxu0 0.0
    %944 = vmatpush1.msra.mxu0 %v900
    %945 = vmatprep.subr.mxu0 0.0
    %946 = vmatpush1.msra.mxu0 %v899
    %947 = vmatprep.subr.mxu0 0.0
    %948 = vmatpush2.msra.mxu0 0.0
    %949 = vmatprep.subr.mxu0 0.0
    %950 = vmatpush2.msra.mxu0 0.0
    %951 = vmatprep.subr.mxu0 0.0
    %952 = vmatpush2.msra.mxu0 0.0
    %953 = vmatprep.subr.mxu0 0.0
    %954 = vmatpush2.msra.mxu0 0.0
    %955 = vmatprep.subr.mxu0 0.0
    %956 = vmatpush2.msra.mxu0 0.0
    %957 = vmatprep.subr.mxu0 0.0
    %958 = vmatpush2.msra.mxu0 0.0
    %959 = vmatprep.subr.mxu0 0.0
    %960 = vmatpush2.msra.mxu0 0.0
    %961 = vmatprep.subr.mxu0 0.0
    %962 = vmatpush2.msra.mxu0 0.0
    %963 = vmatprep.subr.mxu0 0.0
    %964 = vmatpush2.msra.mxu0 0.0
    %965 = vmatprep.subr.mxu0 0.0
    %966 = vmatpush2.msra.mxu0 0.0
    %967 = vmatprep.subr.mxu0 0.0
    %968 = vmatpush2.msra.mxu0 0.0
    %969 = vmatprep.subr.mxu0 0.0
    %970 = vmatpush2.msra.mxu0 0.0
    %971 = vmatprep.subr.mxu0 0.0
    %972 = vmatpush2.msra.mxu0 0.0
    %973 = vmatprep.subr.mxu0 0.0
    %974 = vmatpush2.msra.mxu0 0.0
    %975 = vmatprep.subr.mxu0 0.0
    %976 = vmatpush2.msra.mxu0 0.0
    %977 = vmatprep.subr.mxu0 0.0
    %978 = vmatpush2.msra.mxu0 0.0
    %979 = vmatprep.mubr.f32.mxu0 0.0
    %980 = vmatmul.mubr.f32.gmra.mxu0 %v897
    %v981 = vpop.f32.mrf.mxu0
    %v982 = vadd.f32 0.0, %v981
    %v983 = vpop.f32.mrf.mxu0
    %984 = vdwg.mxu0
    %s985 = scalar_lea.vmem [#allocation2], 1152
    %v986 = vld [vmem:[%s985] sm:$0xff]
    %v987 = vld [vmem:[%s985 + $0x8] sm:$0xff]
    %v988 = vld [vmem:[%s985 + $0x10] sm:$0xff]
    %v989 = vld [vmem:[%s985 + $0x18] sm:$0xff]
    %v990 = vld [vmem:[%s985 + $0x20] sm:$0xff]
    %v991 = vld [vmem:[%s985 + $0x28] sm:$0xff]
    %v992 = vld [vmem:[%s985 + $0x30] sm:$0xff]
    %v993 = vld [vmem:[%s985 + $0x38] sm:$0xff]
    %v994 = vld [vmem:[%s985 + $0x40] sm:$0xff]
    %v995 = vld [vmem:[%s985 + $0x48] sm:$0xff]
    %v996 = vld [vmem:[%s985 + $0x50] sm:$0xff]
    %v997 = vld [vmem:[%s985 + $0x58] sm:$0xff]
    %v998 = vld [vmem:[%s985 + $0x60] sm:$0xff]
    %v999 = vld [vmem:[%s985 + $0x68] sm:$0xff]
    %v1000 = vld [vmem:[%s985 + $0x70] sm:$0xff]
    %v1001 = vld [vmem:[%s985 + $0x78] sm:$0xff]
    %s1002 = scalar_lea.vmem [#allocation2], 1280
    %v1003 = vld [vmem:[%s1002] sm:$0xff]
    %v1004 = vld [vmem:[%s1002 + $0x8] sm:$0xff]
    %v1005 = vld [vmem:[%s1002 + $0x10] sm:$0xff]
    %v1006 = vld [vmem:[%s1002 + $0x18] sm:$0xff]
    %v1007 = vld [vmem:[%s1002 + $0x20] sm:$0xff]
    %v1008 = vld [vmem:[%s1002 + $0x28] sm:$0xff]
    %v1009 = vld [vmem:[%s1002 + $0x30] sm:$0xff]
    %v1010 = vld [vmem:[%s1002 + $0x38] sm:$0xff]
    %v1011 = vld [vmem:[%s1002 + $0x40] sm:$0xff]
    %v1012 = vld [vmem:[%s1002 + $0x48] sm:$0xff]
    %v1013 = vld [vmem:[%s1002 + $0x50] sm:$0xff]
    %v1014 = vld [vmem:[%s1002 + $0x58] sm:$0xff]
    %v1015 = vld [vmem:[%s1002 + $0x60] sm:$0xff]
    %v1016 = vld [vmem:[%s1002 + $0x68] sm:$0xff]
    %v1017 = vld [vmem:[%s1002 + $0x70] sm:$0xff]
    %v1018 = vld [vmem:[%s1002 + $0x78] sm:$0xff]
    %1019 = vmatprep.subr.mxu0 0.0
    %1020 = vmatpush1.msra.mxu0 %v1018
    %1021 = vmatprep.subr.mxu0 0.0
    %1022 = vmatpush1.msra.mxu0 %v1017
    %1023 = vmatprep.subr.mxu0 0.0
    %1024 = vmatpush1.msra.mxu0 %v1016
    %1025 = vmatprep.subr.mxu0 0.0
    %1026 = vmatpush1.msra.mxu0 %v1015
    %1027 = vmatprep.subr.mxu0 0.0
    %1028 = vmatpush1.msra.mxu0 %v1014
    %1029 = vmatprep.subr.mxu0 0.0
    %1030 = vmatpush1.msra.mxu0 %v1013
    %1031 = vmatprep.subr.mxu0 0.0
    %1032 = vmatpush1.msra.mxu0 %v1012
    %1033 = vmatprep.subr.mxu0 0.0
    %1034 = vmatpush1.msra.mxu0 %v1011
    %1035 = vmatprep.subr.mxu0 0.0
    %1036 = vmatpush1.msra.mxu0 %v1010
    %1037 = vmatprep.subr.mxu0 0.0
    %1038 = vmatpush1.msra.mxu0 %v1009
    %1039 = vmatprep.subr.mxu0 0.0
    %1040 = vmatpush1.msra.mxu0 %v1008
    %1041 = vmatprep.subr.mxu0 0.0
    %1042 = vmatpush1.msra.mxu0 %v1007
    %1043 = vmatprep.subr.mxu0 0.0
    %1044 = vmatpush1.msra.mxu0 %v1006
    %1045 = vmatprep.subr.mxu0 0.0
    %1046 = vmatpush1.msra.mxu0 %v1005
    %1047 = vmatprep.subr.mxu0 0.0
    %1048 = vmatpush1.msra.mxu0 %v1004
    %1049 = vmatprep.subr.mxu0 0.0
    %1050 = vmatpush1.msra.mxu0 %v1003
    %1051 = vmatprep.subr.mxu0 0.0
    %1052 = vmatpush2.msra.mxu0 0.0
    %1053 = vmatprep.subr.mxu0 0.0
    %1054 = vmatpush2.msra.mxu0 0.0
    %1055 = vmatprep.subr.mxu0 0.0
    %1056 = vmatpush2.msra.mxu0 0.0
    %1057 = vmatprep.subr.mxu0 0.0
    %1058 = vmatpush2.msra.mxu0 0.0
    %1059 = vmatprep.subr.mxu0 0.0
    %1060 = vmatpush2.msra.mxu0 0.0
    %1061 = vmatprep.subr.mxu0 0.0
    %1062 = vmatpush2.msra.mxu0 0.0
    %1063 = vmatprep.subr.mxu0 0.0
    %1064 = vmatpush2.msra.mxu0 0.0
    %1065 = vmatprep.subr.mxu0 0.0
    %1066 = vmatpush2.msra.mxu0 0.0
    %1067 = vmatprep.subr.mxu0 0.0
    %1068 = vmatpush2.msra.mxu0 0.0
    %1069 = vmatprep.subr.mxu0 0.0
    %1070 = vmatpush2.msra.mxu0 0.0
    %1071 = vmatprep.subr.mxu0 0.0
    %1072 = vmatpush2.msra.mxu0 0.0
    %1073 = vmatprep.subr.mxu0 0.0
    %1074 = vmatpush2.msra.mxu0 0.0
    %1075 = vmatprep.subr.mxu0 0.0
    %1076 = vmatpush2.msra.mxu0 0.0
    %1077 = vmatprep.subr.mxu0 0.0
    %1078 = vmatpush2.msra.mxu0 0.0
    %1079 = vmatprep.subr.mxu0 0.0
    %1080 = vmatpush2.msra.mxu0 0.0
    %1081 = vmatprep.subr.mxu0 0.0
    %1082 = vmatpush2.msra.mxu0 0.0
    %1083 = vmatprep.mubr.f32.mxu0 0.0
    %1084 = vmatmul.mubr.f32.gmra.mxu0 %v982
    %v1085 = vpop.f32.mrf.mxu0
    %v1086 = vadd.f32 0.0, %v1085
    %v1087 = vpop.f32.mrf.mxu0
    %1088 = vdwg.mxu0
    %1089 = vmatprep.subr.mxu0 0.0
    %1090 = vmatpush1.msra.mxu0 %v1001
    %1091 = vmatprep.subr.mxu0 0.0
    %1092 = vmatpush1.msra.mxu0 %v1000
    %1093 = vmatprep.subr.mxu0 0.0
    %1094 = vmatpush1.msra.mxu0 %v999
    %1095 = vmatprep.subr.mxu0 0.0
    %1096 = vmatpush1.msra.mxu0 %v998
    %1097 = vmatprep.subr.mxu0 0.0
    %1098 = vmatpush1.msra.mxu0 %v997
    %1099 = vmatprep.subr.mxu0 0.0
    %1100 = vmatpush1.msra.mxu0 %v996
    %1101 = vmatprep.subr.mxu0 0.0
    %1102 = vmatpush1.msra.mxu0 %v995
    %1103 = vmatprep.subr.mxu0 0.0
    %1104 = vmatpush1.msra.mxu0 %v994
    %1105 = vmatprep.subr.mxu0 0.0
    %1106 = vmatpush1.msra.mxu0 %v993
    %1107 = vmatprep.subr.mxu0 0.0
    %1108 = vmatpush1.msra.mxu0 %v992
    %1109 = vmatprep.subr.mxu0 0.0
    %1110 = vmatpush1.msra.mxu0 %v991
    %1111 = vmatprep.subr.mxu0 0.0
    %1112 = vmatpush1.msra.mxu0 %v990
    %1113 = vmatprep.subr.mxu0 0.0
    %1114 = vmatpush1.msra.mxu0 %v989
    %1115 = vmatprep.subr.mxu0 0.0
    %1116 = vmatpush1.msra.mxu0 %v988
    %1117 = vmatprep.subr.mxu0 0.0
    %1118 = vmatpush1.msra.mxu0 %v987
    %1119 = vmatprep.subr.mxu0 0.0
    %1120 = vmatpush1.msra.mxu0 %v986
    %1121 = vmatprep.subr.mxu0 0.0
    %1122 = vmatpush2.msra.mxu0 0.0
    %1123 = vmatprep.subr.mxu0 0.0
    %1124 = vmatpush2.msra.mxu0 0.0
    %1125 = vmatprep.subr.mxu0 0.0
    %1126 = vmatpush2.msra.mxu0 0.0
    %1127 = vmatprep.subr.mxu0 0.0
    %1128 = vmatpush2.msra.mxu0 0.0
    %1129 = vmatprep.subr.mxu0 0.0
    %1130 = vmatpush2.msra.mxu0 0.0
    %1131 = vmatprep.subr.mxu0 0.0
    %1132 = vmatpush2.msra.mxu0 0.0
    %1133 = vmatprep.subr.mxu0 0.0
    %1134 = vmatpush2.msra.mxu0 0.0
    %1135 = vmatprep.subr.mxu0 0.0
    %1136 = vmatpush2.msra.mxu0 0.0
    %1137 = vmatprep.subr.mxu0 0.0
    %1138 = vmatpush2.msra.mxu0 0.0
    %1139 = vmatprep.subr.mxu0 0.0
    %1140 = vmatpush2.msra.mxu0 0.0
    %1141 = vmatprep.subr.mxu0 0.0
    %1142 = vmatpush2.msra.mxu0 0.0
    %1143 = vmatprep.subr.mxu0 0.0
    %1144 = vmatpush2.msra.mxu0 0.0
    %1145 = vmatprep.subr.mxu0 0.0
    %1146 = vmatpush2.msra.mxu0 0.0
    %1147 = vmatprep.subr.mxu0 0.0
    %1148 = vmatpush2.msra.mxu0 0.0
    %1149 = vmatprep.subr.mxu0 0.0
    %1150 = vmatpush2.msra.mxu0 0.0
    %1151 = vmatprep.subr.mxu0 0.0
    %1152 = vmatpush2.msra.mxu0 0.0
    %1153 = vmatprep.mubr.f32.mxu0 0.0
    %1154 = vmatmul.mubr.f32.gmra.mxu0 %v609
    %v1155 = vpop.f32.mrf.mxu0
    %v1156 = vadd.f32 %v1086, %v1155
    %v1157 = vpop.f32.mrf.mxu0
    %1158 = vdwg.mxu0
    %v1159 = vld [vmem:[#allocation5 + $0x5] sm:$0x1]
    %v1160 = vlaneseq
    %v1161 = vshrl.u32 %v1160, 7
    %v1162 = vsub.s32 0, %v1161
    %v1163 = vrot.slane %v1159, %v1162
    %v1164 = vadd.f32 %v1156, %v1163
    %v1165 = vxor.u32 %v1164, 2147483648
    %v1166 = vmul.f32 %v1165, 1.442695
    %v1167 = vpow.pop %v1166
    %v1168 = vadd.f32 %v1167, 1.0
    %v1169 = vrcp.pop %v1168
    %v1170 = vmul.f32 1.0, %v1169
    %v1171 = vmul.f32 %v1170, %v982
    %v1172 = vsub.f32 1.0, %v1170
    %v1173 = vmul.f32 %v1172, %v609
    %v1174 = vadd.f32 %v1171, %v1173
    %v1175 = vsel %vm139, %v897, 0.0
    %1176 = vadd.xlane.f32.xlu0 %v1175
    %v1177 = vpop.xlane.xlu0 %1176
    %v1178 = vrot.slane %v1177, 4
    %v1179 = vadd.f32 %v1177, %v1178
    %v1180 = vrot.slane %v1179, 2
    %v1181 = vadd.f32 %v1179, %v1180
    %v1182 = vrot.slane %v1181, 1
    %v1183 = vadd.f32 %v1181, %v1182
    %s1184 = vtos %v1183
    %v1185 = vstv %s1184
    %v1186 = vmul.f32 %v1185, 0.0078125
    %v1187 = vmul.f32 %v1174, 0.1
    %vm1188 = vcmp.ge.f32.partialorder %v1187, 1.0
    %v1189 = vsel %vm1188, 1, 0
    %v1190 = vcvt.s32.f32 %v1189
    %v1191 = vsel %vm139, %v1190, 0.0
    %1192 = vadd.xlane.f32.xlu0 %v1191
    %v1193 = vpop.xlane.xlu0 %1192
    %v1194 = vrot.slane %v1193, 4
    %v1195 = vadd.f32 %v1193, %v1194
    %v1196 = vrot.slane %v1195, 2
    %v1197 = vadd.f32 %v1195, %v1196
    %v1198 = vrot.slane %v1197, 1
    %v1199 = vadd.f32 %v1197, %v1198
    %s1200 = vtos %v1199
    %v1201 = vstv %s1200
    %v1202 = vmul.f32 %v1201, 0.03125
    %s1203 = scalar_lea.vmem [#allocation2], 1408
    %v1204 = vld [vmem:[%s1203] sm:$0xff]
    %v1205 = vld [vmem:[%s1203 + $0x8] sm:$0xff]
    %v1206 = vld [vmem:[%s1203 + $0x10] sm:$0xff]
    %v1207 = vld [vmem:[%s1203 + $0x18] sm:$0xff]
    %v1208 = vld [vmem:[%s1203 + $0x20] sm:$0xff]
    %v1209 = vld [vmem:[%s1203 + $0x28] sm:$0xff]
    %v1210 = vld [vmem:[%s1203 + $0x30] sm:$0xff]
    %v1211 = vld [vmem:[%s1203 + $0x38] sm:$0xff]
    %v1212 = vld [vmem:[%s1203 + $0x40] sm:$0xff]
    %v1213 = vld [vmem:[%s1203 + $0x48] sm:$0xff]
    %v1214 = vld [vmem:[%s1203 + $0x50] sm:$0xff]
    %v1215 = vld [vmem:[%s1203 + $0x58] sm:$0xff]
    %v1216 = vld [vmem:[%s1203 + $0x60] sm:$0xff]
    %v1217 = vld [vmem:[%s1203 + $0x68] sm:$0xff]
    %v1218 = vld [vmem:[%s1203 + $0x70] sm:$0xff]
    %v1219 = vld [vmem:[%s1203 + $0x78] sm:$0xff]
    %v1220 = vld [vmem:[#allocation5 + $0x6] sm:$0x1]
    %v1221 = vlaneseq
    %v1222 = vshrl.u32 %v1221, 7
    %v1223 = vsub.s32 0, %v1222
    %v1224 = vrot.slane %v1220, %v1223
    %1225 = vmatprep.subr.mxu0 0.0
    %1226 = vmatpush1.msra.mxu0 %v1219
    %1227 = vmatprep.subr.mxu0 0.0
    %1228 = vmatpush1.msra.mxu0 %v1218
    %1229 = vmatprep.subr.mxu0 0.0
    %1230 = vmatpush1.msra.mxu0 %v1217
    %1231 = vmatprep.subr.mxu0 0.0
    %1232 = vmatpush1.msra.mxu0 %v1216
    %1233 = vmatprep.subr.mxu0 0.0
    %1234 = vmatpush1.msra.mxu0 %v1215
    %1235 = vmatprep.subr.mxu0 0.0
    %1236 = vmatpush1.msra.mxu0 %v1214
    %1237 = vmatprep.subr.mxu0 0.0
    %1238 = vmatpush1.msra.mxu0 %v1213
    %1239 = vmatprep.subr.mxu0 0.0
    %1240 = vmatpush1.msra.mxu0 %v1212
    %1241 = vmatprep.subr.mxu0 0.0
    %1242 = vmatpush1.msra.mxu0 %v1211
    %1243 = vmatprep.subr.mxu0 0.0
    %1244 = vmatpush1.msra.mxu0 %v1210
    %1245 = vmatprep.subr.mxu0 0.0
    %1246 = vmatpush1.msra.mxu0 %v1209
    %1247 = vmatprep.subr.mxu0 0.0
    %1248 = vmatpush1.msra.mxu0 %v1208
    %1249 = vmatprep.subr.mxu0 0.0
    %1250 = vmatpush1.msra.mxu0 %v1207
    %1251 = vmatprep.subr.mxu0 0.0
    %1252 = vmatpush1.msra.mxu0 %v1206
    %1253 = vmatprep.subr.mxu0 0.0
    %1254 = vmatpush1.msra.mxu0 %v1205
    %1255 = vmatprep.subr.mxu0 0.0
    %1256 = vmatpush1.msra.mxu0 %v1204
    %1257 = vmatprep.subr.mxu0 0.0
    %1258 = vmatpush2.msra.mxu0 0.0
    %1259 = vmatprep.subr.mxu0 0.0
    %1260 = vmatpush2.msra.mxu0 0.0
    %1261 = vmatprep.subr.mxu0 0.0
    %1262 = vmatpush2.msra.mxu0 0.0
    %1263 = vmatprep.subr.mxu0 0.0
    %1264 = vmatpush2.msra.mxu0 0.0
    %1265 = vmatprep.subr.mxu0 0.0
    %1266 = vmatpush2.msra.mxu0 0.0
    %1267 = vmatprep.subr.mxu0 0.0
    %1268 = vmatpush2.msra.mxu0 0.0
    %1269 = vmatprep.subr.mxu0 0.0
    %1270 = vmatpush2.msra.mxu0 0.0
    %1271 = vmatprep.subr.mxu0 0.0
    %1272 = vmatpush2.msra.mxu0 0.0
    %1273 = vmatprep.subr.mxu0 0.0
    %1274 = vmatpush2.msra.mxu0 0.0
    %1275 = vmatprep.subr.mxu0 0.0
    %1276 = vmatpush2.msra.mxu0 0.0
    %1277 = vmatprep.subr.mxu0 0.0
    %1278 = vmatpush2.msra.mxu0 0.0
    %1279 = vmatprep.subr.mxu0 0.0
    %1280 = vmatpush2.msra.mxu0 0.0
    %1281 = vmatprep.subr.mxu0 0.0
    %1282 = vmatpush2.msra.mxu0 0.0
    %1283 = vmatprep.subr.mxu0 0.0
    %1284 = vmatpush2.msra.mxu0 0.0
    %1285 = vmatprep.subr.mxu0 0.0
    %1286 = vmatpush2.msra.mxu0 0.0
    %1287 = vmatprep.subr.mxu0 0.0
    %1288 = vmatpush2.msra.mxu0 0.0
    %1289 = vmatprep.mubr.f32.mxu0 0.0
    %1290 = vmatmul.mubr.f32.gmra.mxu0 %v1190
    %v1291 = vpop.f32.mrf.mxu0
    %v1292 = vadd.f32 %v1224, %v1291
    %v1293 = vpop.f32.mrf.mxu0
    %1294 = vdwg.mxu0
    %v1295 = vsel %vm139, %v1292, 0.0
    %v1296 = vrot.slane %v1295, 4
    %v1297 = vadd.f32 %v1295, %v1296
    %v1298 = vrot.slane %v1297, 2
    %v1299 = vadd.f32 %v1297, %v1298
    %v1300 = vrot.slane %v1299, 1
    %v1301 = vadd.f32 %v1299, %v1300
    %v1302 = vmul.f32 %v1301, %v147
    %v1303 = vsub.f32 %v1292, %v1302
    %v1304 = vmul.f32 %v1303, %v1303
    %v1305 = vsel %vm139, %v1304, 0.0
    %v1306 = vrot.slane %v1305, 4
    %v1307 = vadd.f32 %v1305, %v1306
    %v1308 = vrot.slane %v1307, 2
    %v1309 = vadd.f32 %v1307, %v1308
    %v1310 = vrot.slane %v1309, 1
    %v1311 = vadd.f32 %v1309, %v1310
    %v1312 = vmul.f32 %v1311, %v147
    %v1313 = vadd.f32 %v1312, 1e-05
    %v1314 = vrsqrt.pop %v1313
    %v1315 = vmul.f32 %v1303, %v1314
    %v1316 = vmax.f32 %v1315, 0.0
    %s1317 = scalar_lea.vmem [#allocation2], 1536
    %v1318 = vld [vmem:[%s1317] sm:$0xff]
    %v1319 = vld [vmem:[%s1317 + $0x8] sm:$0xff]
    %v1320 = vld [vmem:[%s1317 + $0x10] sm:$0xff]
    %v1321 = vld [vmem:[%s1317 + $0x18] sm:$0xff]
    %v1322 = vld [vmem:[%s1317 + $0x20] sm:$0xff]
    %v1323 = vld [vmem:[%s1317 + $0x28] sm:$0xff]
    %v1324 = vld [vmem:[%s1317 + $0x30] sm:$0xff]
    %v1325 = vld [vmem:[%s1317 + $0x38] sm:$0xff]
    %v1326 = vld [vmem:[%s1317 + $0x40] sm:$0xff]
    %v1327 = vld [vmem:[%s1317 + $0x48] sm:$0xff]
    %v1328 = vld [vmem:[%s1317 + $0x50] sm:$0xff]
    %v1329 = vld [vmem:[%s1317 + $0x58] sm:$0xff]
    %v1330 = vld [vmem:[%s1317 + $0x60] sm:$0xff]
    %v1331 = vld [vmem:[%s1317 + $0x68] sm:$0xff]
    %v1332 = vld [vmem:[%s1317 + $0x70] sm:$0xff]
    %v1333 = vld [vmem:[%s1317 + $0x78] sm:$0xff]
    %v1334 = vld [vmem:[#allocation5 + $0x7] sm:$0x1]
    %v1335 = vlaneseq
    %v1336 = vshrl.u32 %v1335, 7
    %v1337 = vsub.s32 0, %v1336
    %v1338 = vrot.slane %v1334, %v1337
    %1339 = vmatprep.subr.mxu0 0.0
    %1340 = vmatpush1.msra.mxu0 %v1333
    %1341 = vmatprep.subr.mxu0 0.0
    %1342 = vmatpush1.msra.mxu0 %v1332
    %1343 = vmatprep.subr.mxu0 0.0
    %1344 = vmatpush1.msra.mxu0 %v1331
    %1345 = vmatprep.subr.mxu0 0.0
    %1346 = vmatpush1.msra.mxu0 %v1330
    %1347 = vmatprep.subr.mxu0 0.0
    %1348 = vmatpush1.msra.mxu0 %v1329
    %1349 = vmatprep.subr.mxu0 0.0
    %1350 = vmatpush1.msra.mxu0 %v1328
    %1351 = vmatprep.subr.mxu0 0.0
    %1352 = vmatpush1.msra.mxu0 %v1327
    %1353 = vmatprep.subr.mxu0 0.0
    %1354 = vmatpush1.msra.mxu0 %v1326
    %1355 = vmatprep.subr.mxu0 0.0
    %1356 = vmatpush1.msra.mxu0 %v1325
    %1357 = vmatprep.subr.mxu0 0.0
    %1358 = vmatpush1.msra.mxu0 %v1324
    %1359 = vmatprep.subr.mxu0 0.0
    %1360 = vmatpush1.msra.mxu0 %v1323
    %1361 = vmatprep.subr.mxu0 0.0
    %1362 = vmatpush1.msra.mxu0 %v1322
    %1363 = vmatprep.subr.mxu0 0.0
    %1364 = vmatpush1.msra.mxu0 %v1321
    %1365 = vmatprep.subr.mxu0 0.0
    %1366 = vmatpush1.msra.mxu0 %v1320
    %1367 = vmatprep.subr.mxu0 0.0
    %1368 = vmatpush1.msra.mxu0 %v1319
    %1369 = vmatprep.subr.mxu0 0.0
    %1370 = vmatpush1.msra.mxu0 %v1318
    %1371 = vmatprep.subr.mxu0 0.0
    %1372 = vmatpush2.msra.mxu0 0.0
    %1373 = vmatprep.subr.mxu0 0.0
    %1374 = vmatpush2.msra.mxu0 0.0
    %1375 = vmatprep.subr.mxu0 0.0
    %1376 = vmatpush2.msra.mxu0 0.0
    %1377 = vmatprep.subr.mxu0 0.0
    %1378 = vmatpush2.msra.mxu0 0.0
    %1379 = vmatprep.subr.mxu0 0.0
    %1380 = vmatpush2.msra.mxu0 0.0
    %1381 = vmatprep.subr.mxu0 0.0
    %1382 = vmatpush2.msra.mxu0 0.0
    %1383 = vmatprep.subr.mxu0 0.0
    %1384 = vmatpush2.msra.mxu0 0.0
    %1385 = vmatprep.subr.mxu0 0.0
    %1386 = vmatpush2.msra.mxu0 0.0
    %1387 = vmatprep.subr.mxu0 0.0
    %1388 = vmatpush2.msra.mxu0 0.0
    %1389 = vmatprep.subr.mxu0 0.0
    %1390 = vmatpush2.msra.mxu0 0.0
    %1391 = vmatprep.subr.mxu0 0.0
    %1392 = vmatpush2.msra.mxu0 0.0
    %1393 = vmatprep.subr.mxu0 0.0
    %1394 = vmatpush2.msra.mxu0 0.0
    %1395 = vmatprep.subr.mxu0 0.0
    %1396 = vmatpush2.msra.mxu0 0.0
    %1397 = vmatprep.subr.mxu0 0.0
    %1398 = vmatpush2.msra.mxu0 0.0
    %1399 = vmatprep.subr.mxu0 0.0
    %1400 = vmatpush2.msra.mxu0 0.0
    %1401 = vmatprep.subr.mxu0 0.0
    %1402 = vmatpush2.msra.mxu0 0.0
    %1403 = vmatprep.mubr.f32.mxu0 0.0
    %1404 = vmatmul.mubr.f32.gmra.mxu0 %v1316
    %v1405 = vpop.f32.mrf.mxu0
    %v1406 = vadd.f32 %v1338, %v1405
    %v1407 = vpop.f32.mrf.mxu0
    %1408 = vdwg.mxu0
    %v1409 = vld [vmem:[#allocation5 + $0xb] sm:$0x1]
    %v1410 = vlaneseq
    %v1411 = vshrl.u32 %v1410, 7
    %v1412 = vsub.s32 0, %v1411
    %v1413 = vrot.slane %v1409, %v1412
    %v1414 = vmul.f32 %v1406, %v1413
    %v1415 = vsel %vm139, %v1414, 0.0
    %1416 = vadd.xlane.f32.xlu0 %v1415
    %v1417 = vpop.xlane.xlu0 %1416
    %v1418 = vld [vmem:[#allocation5 + $0xc] sm:$0x1]
    %v1419 = vlaneseq
    %v1420 = vshrl.u32 %v1419, 7
    %v1421 = vsub.s32 0, %v1420
    %v1422 = vrot.slane %v1418, %v1421
    %v1423 = vadd.f32 %v1417, %v1422
    %v1424 = vxor.u32 %v1423, 2147483648
    %v1425 = vmul.f32 %v1424, 1.442695
    %v1426 = vpow.pop %v1425
    %v1427 = vadd.f32 %v1426, 1.0
    %v1428 = vrcp.pop %v1427
    %v1429 = vmul.f32 1.0, %v1428
    %v1430 = vsel %vm139, %v1429, 0.0
    %1431 = vadd.xlane.f32.xlu0 %v1430
    %v1432 = vpop.xlane.xlu0 %1431
    %v1433 = vrot.slane %v1432, 4
    %v1434 = vadd.f32 %v1432, %v1433
    %v1435 = vrot.slane %v1434, 2
    %v1436 = vadd.f32 %v1434, %v1435
    %v1437 = vrot.slane %v1436, 1
    %v1438 = vadd.f32 %v1436, %v1437
    %s1439 = vtos %v1438
    %v1440 = vstv %s1439
    %v1441 = vmul.f32 %v1440, 0.00390625
    %v1442 = vadd.f32 %v1190, %v162
    %v1443 = vmax.f32 %v1442, 0.0
    %s1444 = scalar_lea.vmem [#allocation2], 3328
    %v1445 = vld [vmem:[%s1444] sm:$0xff]
    %v1446 = vld [vmem:[%s1444 + $0x8] sm:$0xff]
    %v1447 = vld [vmem:[%s1444 + $0x10] sm:$0xff]
    %v1448 = vld [vmem:[%s1444 + $0x18] sm:$0xff]
    %v1449 = vld [vmem:[%s1444 + $0x20] sm:$0xff]
    %v1450 = vld [vmem:[%s1444 + $0x28] sm:$0xff]
    %v1451 = vld [vmem:[%s1444 + $0x30] sm:$0xff]
    %v1452 = vld [vmem:[%s1444 + $0x38] sm:$0xff]
    %v1453 = vld [vmem:[%s1444 + $0x40] sm:$0xff]
    %v1454 = vld [vmem:[%s1444 + $0x48] sm:$0xff]
    %v1455 = vld [vmem:[%s1444 + $0x50] sm:$0xff]
    %v1456 = vld [vmem:[%s1444 + $0x58] sm:$0xff]
    %v1457 = vld [vmem:[%s1444 + $0x60] sm:$0xff]
    %v1458 = vld [vmem:[%s1444 + $0x68] sm:$0xff]
    %v1459 = vld [vmem:[%s1444 + $0x70] sm:$0xff]
    %v1460 = vld [vmem:[%s1444 + $0x78] sm:$0xff]
    %1461 = vmatprep.subr.mxu0 0.0
    %1462 = vmatpush1.msra.mxu0 %v1460
    %1463 = vmatprep.subr.mxu0 0.0
    %1464 = vmatpush1.msra.mxu0 %v1459
    %1465 = vmatprep.subr.mxu0 0.0
    %1466 = vmatpush1.msra.mxu0 %v1458
    %1467 = vmatprep.subr.mxu0 0.0
    %1468 = vmatpush1.msra.mxu0 %v1457
    %1469 = vmatprep.subr.mxu0 0.0
    %1470 = vmatpush1.msra.mxu0 %v1456
    %1471 = vmatprep.subr.mxu0 0.0
    %1472 = vmatpush1.msra.mxu0 %v1455
    %1473 = vmatprep.subr.mxu0 0.0
    %1474 = vmatpush1.msra.mxu0 %v1454
    %1475 = vmatprep.subr.mxu0 0.0
    %1476 = vmatpush1.msra.mxu0 %v1453
    %1477 = vmatprep.subr.mxu0 0.0
    %1478 = vmatpush1.msra.mxu0 %v1452
    %1479 = vmatprep.subr.mxu0 0.0
    %1480 = vmatpush1.msra.mxu0 %v1451
    %1481 = vmatprep.subr.mxu0 0.0
    %1482 = vmatpush1.msra.mxu0 %v1450
    %1483 = vmatprep.subr.mxu0 0.0
    %1484 = vmatpush1.msra.mxu0 %v1449
    %1485 = vmatprep.subr.mxu0 0.0
    %1486 = vmatpush1.msra.mxu0 %v1448
    %1487 = vmatprep.subr.mxu0 0.0
    %1488 = vmatpush1.msra.mxu0 %v1447
    %1489 = vmatprep.subr.mxu0 0.0
    %1490 = vmatpush1.msra.mxu0 %v1446
    %1491 = vmatprep.subr.mxu0 0.0
    %1492 = vmatpush1.msra.mxu0 %v1445
    %1493 = vmatprep.subr.mxu0 0.0
    %1494 = vmatpush2.msra.mxu0 0.0
    %1495 = vmatprep.subr.mxu0 0.0
    %1496 = vmatpush2.msra.mxu0 0.0
    %1497 = vmatprep.subr.mxu0 0.0
    %1498 = vmatpush2.msra.mxu0 0.0
    %1499 = vmatprep.subr.mxu0 0.0
    %1500 = vmatpush2.msra.mxu0 0.0
    %1501 = vmatprep.subr.mxu0 0.0
    %1502 = vmatpush2.msra.mxu0 0.0
    %1503 = vmatprep.subr.mxu0 0.0
    %1504 = vmatpush2.msra.mxu0 0.0
    %1505 = vmatprep.subr.mxu0 0.0
    %1506 = vmatpush2.msra.mxu0 0.0
    %1507 = vmatprep.subr.mxu0 0.0
    %1508 = vmatpush2.msra.mxu0 0.0
    %1509 = vmatprep.subr.mxu0 0.0
    %1510 = vmatpush2.msra.mxu0 0.0
    %1511 = vmatprep.subr.mxu0 0.0
    %1512 = vmatpush2.msra.mxu0 0.0
    %1513 = vmatprep.subr.mxu0 0.0
    %1514 = vmatpush2.msra.mxu0 0.0
    %1515 = vmatprep.subr.mxu0 0.0
    %1516 = vmatpush2.msra.mxu0 0.0
    %1517 = vmatprep.subr.mxu0 0.0
    %1518 = vmatpush2.msra.mxu0 0.0
    %1519 = vmatprep.subr.mxu0 0.0
    %1520 = vmatpush2.msra.mxu0 0.0
    %1521 = vmatprep.subr.mxu0 0.0
    %1522 = vmatpush2.msra.mxu0 0.0
    %1523 = vmatprep.subr.mxu0 0.0
    %1524 = vmatpush2.msra.mxu0 0.0
    %1525 = vmatprep.mubr.f32.mxu0 0.0
    %1526 = vmatmul.mubr.f32.gmra.mxu0 %v1443
    %v1527 = vpop.f32.mrf.mxu0
    %v1528 = vadd.f32 0.0, %v1527
    %v1529 = vpop.f32.mrf.mxu0
    %1530 = vdwg.mxu0
    %v1531 = vsel %vm139, %v1528, 0.0
    %v1532 = vrot.slane %v1531, 4
    %v1533 = vadd.f32 %v1531, %v1532
    %v1534 = vrot.slane %v1533, 2
    %v1535 = vadd.f32 %v1533, %v1534
    %v1536 = vrot.slane %v1535, 1
    %v1537 = vadd.f32 %v1535, %v1536
    %v1538 = vmul.f32 %v1537, %v147
    %v1539 = vsub.f32 %v1528, %v1538
    %v1540 = vmul.f32 %v1539, %v1539
    %v1541 = vsel %vm139, %v1540, 0.0
    %v1542 = vrot.slane %v1541, 4
    %v1543 = vadd.f32 %v1541, %v1542
    %v1544 = vrot.slane %v1543, 2
    %v1545 = vadd.f32 %v1543, %v1544
    %v1546 = vrot.slane %v1545, 1
    %v1547 = vadd.f32 %v1545, %v1546
    %v1548 = vmul.f32 %v1547, %v147
    %v1549 = vadd.f32 %v1548, 1e-05
    %v1550 = vrsqrt.pop %v1549
    %v1551 = vmul.f32 %v1539, %v1550
    %s1552 = scalar_lea.vmem [#allocation2], 1792
    %v1553 = vld [vmem:[%s1552] sm:$0xff]
    %v1554 = vld [vmem:[%s1552 + $0x8] sm:$0xff]
    %v1555 = vld [vmem:[%s1552 + $0x10] sm:$0xff]
    %v1556 = vld [vmem:[%s1552 + $0x18] sm:$0xff]
    %v1557 = vld [vmem:[%s1552 + $0x20] sm:$0xff]
    %v1558 = vld [vmem:[%s1552 + $0x28] sm:$0xff]
    %v1559 = vld [vmem:[%s1552 + $0x30] sm:$0xff]
    %v1560 = vld [vmem:[%s1552 + $0x38] sm:$0xff]
    %v1561 = vld [vmem:[%s1552 + $0x40] sm:$0xff]
    %v1562 = vld [vmem:[%s1552 + $0x48] sm:$0xff]
    %v1563 = vld [vmem:[%s1552 + $0x50] sm:$0xff]
    %v1564 = vld [vmem:[%s1552 + $0x58] sm:$0xff]
    %v1565 = vld [vmem:[%s1552 + $0x60] sm:$0xff]
    %v1566 = vld [vmem:[%s1552 + $0x68] sm:$0xff]
    %v1567 = vld [vmem:[%s1552 + $0x70] sm:$0xff]
    %v1568 = vld [vmem:[%s1552 + $0x78] sm:$0xff]
    %v1569 = vld [vmem:[#allocation5 + $0xd] sm:$0x1]
    %v1570 = vlaneseq
    %v1571 = vshrl.u32 %v1570, 7
    %v1572 = vsub.s32 0, %v1571
    %v1573 = vrot.slane %v1569, %v1572
    %1574 = vmatprep.subr.mxu0 0.0
    %1575 = vmatpush1.msra.mxu0 %v1568
    %1576 = vmatprep.subr.mxu0 0.0
    %1577 = vmatpush1.msra.mxu0 %v1567
    %1578 = vmatprep.subr.mxu0 0.0
    %1579 = vmatpush1.msra.mxu0 %v1566
    %1580 = vmatprep.subr.mxu0 0.0
    %1581 = vmatpush1.msra.mxu0 %v1565
    %1582 = vmatprep.subr.mxu0 0.0
    %1583 = vmatpush1.msra.mxu0 %v1564
    %1584 = vmatprep.subr.mxu0 0.0
    %1585 = vmatpush1.msra.mxu0 %v1563
    %1586 = vmatprep.subr.mxu0 0.0
    %1587 = vmatpush1.msra.mxu0 %v1562
    %1588 = vmatprep.subr.mxu0 0.0
    %1589 = vmatpush1.msra.mxu0 %v1561
    %1590 = vmatprep.subr.mxu0 0.0
    %1591 = vmatpush1.msra.mxu0 %v1560
    %1592 = vmatprep.subr.mxu0 0.0
    %1593 = vmatpush1.msra.mxu0 %v1559
    %1594 = vmatprep.subr.mxu0 0.0
    %1595 = vmatpush1.msra.mxu0 %v1558
    %1596 = vmatprep.subr.mxu0 0.0
    %1597 = vmatpush1.msra.mxu0 %v1557
    %1598 = vmatprep.subr.mxu0 0.0
    %1599 = vmatpush1.msra.mxu0 %v1556
    %1600 = vmatprep.subr.mxu0 0.0
    %1601 = vmatpush1.msra.mxu0 %v1555
    %1602 = vmatprep.subr.mxu0 0.0
    %1603 = vmatpush1.msra.mxu0 %v1554
    %1604 = vmatprep.subr.mxu0 0.0
    %1605 = vmatpush1.msra.mxu0 %v1553
    %1606 = vmatprep.subr.mxu0 0.0
    %1607 = vmatpush2.msra.mxu0 0.0
    %1608 = vmatprep.subr.mxu0 0.0
    %1609 = vmatpush2.msra.mxu0 0.0
    %1610 = vmatprep.subr.mxu0 0.0
    %1611 = vmatpush2.msra.mxu0 0.0
    %1612 = vmatprep.subr.mxu0 0.0
    %1613 = vmatpush2.msra.mxu0 0.0
    %1614 = vmatprep.subr.mxu0 0.0
    %1615 = vmatpush2.msra.mxu0 0.0
    %1616 = vmatprep.subr.mxu0 0.0
    %1617 = vmatpush2.msra.mxu0 0.0
    %1618 = vmatprep.subr.mxu0 0.0
    %1619 = vmatpush2.msra.mxu0 0.0
    %1620 = vmatprep.subr.mxu0 0.0
    %1621 = vmatpush2.msra.mxu0 0.0
    %1622 = vmatprep.subr.mxu0 0.0
    %1623 = vmatpush2.msra.mxu0 0.0
    %1624 = vmatprep.subr.mxu0 0.0
    %1625 = vmatpush2.msra.mxu0 0.0
    %1626 = vmatprep.subr.mxu0 0.0
    %1627 = vmatpush2.msra.mxu0 0.0
    %1628 = vmatprep.subr.mxu0 0.0
    %1629 = vmatpush2.msra.mxu0 0.0
    %1630 = vmatprep.subr.mxu0 0.0
    %1631 = vmatpush2.msra.mxu0 0.0
    %1632 = vmatprep.subr.mxu0 0.0
    %1633 = vmatpush2.msra.mxu0 0.0
    %1634 = vmatprep.subr.mxu0 0.0
    %1635 = vmatpush2.msra.mxu0 0.0
    %1636 = vmatprep.subr.mxu0 0.0
    %1637 = vmatpush2.msra.mxu0 0.0
    %1638 = vmatprep.mubr.f32.mxu0 0.0
    %1639 = vmatmul.mubr.f32.gmra.mxu0 %v1443
    %v1640 = vpop.f32.mrf.mxu0
    %v1641 = vadd.f32 %v1573, %v1640
    %v1642 = vpop.f32.mrf.mxu0
    %1643 = vdwg.mxu0
    %v1644 = vsel %vm139, %v1641, 0.0
    %v1645 = vrot.slane %v1644, 4
    %v1646 = vadd.f32 %v1644, %v1645
    %v1647 = vrot.slane %v1646, 2
    %v1648 = vadd.f32 %v1646, %v1647
    %v1649 = vrot.slane %v1648, 1
    %v1650 = vadd.f32 %v1648, %v1649
    %v1651 = vmul.f32 %v1650, %v147
    %v1652 = vsub.f32 %v1641, %v1651
    %v1653 = vmul.f32 %v1652, %v1652
    %v1654 = vsel %vm139, %v1653, 0.0
    %v1655 = vrot.slane %v1654, 4
    %v1656 = vadd.f32 %v1654, %v1655
    %v1657 = vrot.slane %v1656, 2
    %v1658 = vadd.f32 %v1656, %v1657
    %v1659 = vrot.slane %v1658, 1
    %v1660 = vadd.f32 %v1658, %v1659
    %v1661 = vmul.f32 %v1660, %v147
    %v1662 = vadd.f32 %v1661, 1e-05
    %v1663 = vrsqrt.pop %v1662
    %v1664 = vmul.f32 %v1652, %v1663
    %v1665 = vmax.f32 %v1664, 0.0
    %s1666 = scalar_lea.vmem [#allocation2], 1920
    %v1667 = vld [vmem:[%s1666] sm:$0xff]
    %v1668 = vld [vmem:[%s1666 + $0x8] sm:$0xff]
    %v1669 = vld [vmem:[%s1666 + $0x10] sm:$0xff]
    %v1670 = vld [vmem:[%s1666 + $0x18] sm:$0xff]
    %v1671 = vld [vmem:[%s1666 + $0x20] sm:$0xff]
    %v1672 = vld [vmem:[%s1666 + $0x28] sm:$0xff]
    %v1673 = vld [vmem:[%s1666 + $0x30] sm:$0xff]
    %v1674 = vld [vmem:[%s1666 + $0x38] sm:$0xff]
    %v1675 = vld [vmem:[%s1666 + $0x40] sm:$0xff]
    %v1676 = vld [vmem:[%s1666 + $0x48] sm:$0xff]
    %v1677 = vld [vmem:[%s1666 + $0x50] sm:$0xff]
    %v1678 = vld [vmem:[%s1666 + $0x58] sm:$0xff]
    %v1679 = vld [vmem:[%s1666 + $0x60] sm:$0xff]
    %v1680 = vld [vmem:[%s1666 + $0x68] sm:$0xff]
    %v1681 = vld [vmem:[%s1666 + $0x70] sm:$0xff]
    %v1682 = vld [vmem:[%s1666 + $0x78] sm:$0xff]
    %v1683 = vld [vmem:[#allocation5 + $0xe] sm:$0x1]
    %v1684 = vlaneseq
    %v1685 = vshrl.u32 %v1684, 7
    %v1686 = vsub.s32 0, %v1685
    %v1687 = vrot.slane %v1683, %v1686
    %1688 = vmatprep.subr.mxu0 0.0
    %1689 = vmatpush1.msra.mxu0 %v1682
    %1690 = vmatprep.subr.mxu0 0.0
    %1691 = vmatpush1.msra.mxu0 %v1681
    %1692 = vmatprep.subr.mxu0 0.0
    %1693 = vmatpush1.msra.mxu0 %v1680
    %1694 = vmatprep.subr.mxu0 0.0
    %1695 = vmatpush1.msra.mxu0 %v1679
    %1696 = vmatprep.subr.mxu0 0.0
    %1697 = vmatpush1.msra.mxu0 %v1678
    %1698 = vmatprep.subr.mxu0 0.0
    %1699 = vmatpush1.msra.mxu0 %v1677
    %1700 = vmatprep.subr.mxu0 0.0
    %1701 = vmatpush1.msra.mxu0 %v1676
    %1702 = vmatprep.subr.mxu0 0.0
    %1703 = vmatpush1.msra.mxu0 %v1675
    %1704 = vmatprep.subr.mxu0 0.0
    %1705 = vmatpush1.msra.mxu0 %v1674
    %1706 = vmatprep.subr.mxu0 0.0
    %1707 = vmatpush1.msra.mxu0 %v1673
    %1708 = vmatprep.subr.mxu0 0.0
    %1709 = vmatpush1.msra.mxu0 %v1672
    %1710 = vmatprep.subr.mxu0 0.0
    %1711 = vmatpush1.msra.mxu0 %v1671
    %1712 = vmatprep.subr.mxu0 0.0
    %1713 = vmatpush1.msra.mxu0 %v1670
    %1714 = vmatprep.subr.mxu0 0.0
    %1715 = vmatpush1.msra.mxu0 %v1669
    %1716 = vmatprep.subr.mxu0 0.0
    %1717 = vmatpush1.msra.mxu0 %v1668
    %1718 = vmatprep.subr.mxu0 0.0
    %1719 = vmatpush1.msra.mxu0 %v1667
    %1720 = vmatprep.subr.mxu0 0.0
    %1721 = vmatpush2.msra.mxu0 0.0
    %1722 = vmatprep.subr.mxu0 0.0
    %1723 = vmatpush2.msra.mxu0 0.0
    %1724 = vmatprep.subr.mxu0 0.0
    %1725 = vmatpush2.msra.mxu0 0.0
    %1726 = vmatprep.subr.mxu0 0.0
    %1727 = vmatpush2.msra.mxu0 0.0
    %1728 = vmatprep.subr.mxu0 0.0
    %1729 = vmatpush2.msra.mxu0 0.0
    %1730 = vmatprep.subr.mxu0 0.0
    %1731 = vmatpush2.msra.mxu0 0.0
    %1732 = vmatprep.subr.mxu0 0.0
    %1733 = vmatpush2.msra.mxu0 0.0
    %1734 = vmatprep.subr.mxu0 0.0
    %1735 = vmatpush2.msra.mxu0 0.0
    %1736 = vmatprep.subr.mxu0 0.0
    %1737 = vmatpush2.msra.mxu0 0.0
    %1738 = vmatprep.subr.mxu0 0.0
    %1739 = vmatpush2.msra.mxu0 0.0
    %1740 = vmatprep.subr.mxu0 0.0
    %1741 = vmatpush2.msra.mxu0 0.0
    %1742 = vmatprep.subr.mxu0 0.0
    %1743 = vmatpush2.msra.mxu0 0.0
    %1744 = vmatprep.subr.mxu0 0.0
    %1745 = vmatpush2.msra.mxu0 0.0
    %1746 = vmatprep.subr.mxu0 0.0
    %1747 = vmatpush2.msra.mxu0 0.0
    %1748 = vmatprep.subr.mxu0 0.0
    %1749 = vmatpush2.msra.mxu0 0.0
    %1750 = vmatprep.subr.mxu0 0.0
    %1751 = vmatpush2.msra.mxu0 0.0
    %1752 = vmatprep.mubr.f32.mxu0 0.0
    %1753 = vmatmul.mubr.f32.gmra.mxu0 %v1665
    %v1754 = vpop.f32.mrf.mxu0
    %v1755 = vadd.f32 %v1687, %v1754
    %v1756 = vpop.f32.mrf.mxu0
    %1757 = vdwg.mxu0
    %v1758 = vsel %vm139, %v1755, 0.0
    %v1759 = vrot.slane %v1758, 4
    %v1760 = vadd.f32 %v1758, %v1759
    %v1761 = vrot.slane %v1760, 2
    %v1762 = vadd.f32 %v1760, %v1761
    %v1763 = vrot.slane %v1762, 1
    %v1764 = vadd.f32 %v1762, %v1763
    %v1765 = vmul.f32 %v1764, %v147
    %v1766 = vsub.f32 %v1755, %v1765
    %v1767 = vmul.f32 %v1766, %v1766
    %v1768 = vsel %vm139, %v1767, 0.0
    %v1769 = vrot.slane %v1768, 4
    %v1770 = vadd.f32 %v1768, %v1769
    %v1771 = vrot.slane %v1770, 2
    %v1772 = vadd.f32 %v1770, %v1771
    %v1773 = vrot.slane %v1772, 1
    %v1774 = vadd.f32 %v1772, %v1773
    %v1775 = vmul.f32 %v1774, %v147
    %v1776 = vadd.f32 %v1775, 1e-05
    %v1777 = vrsqrt.pop %v1776
    %v1778 = vmul.f32 %v1766, %v1777
    %s1779 = scalar_lea.vmem [#allocation2], 2048
    %v1780 = vld [vmem:[%s1779] sm:$0xff]
    %v1781 = vld [vmem:[%s1779 + $0x8] sm:$0xff]
    %v1782 = vld [vmem:[%s1779 + $0x10] sm:$0xff]
    %v1783 = vld [vmem:[%s1779 + $0x18] sm:$0xff]
    %v1784 = vld [vmem:[%s1779 + $0x20] sm:$0xff]
    %v1785 = vld [vmem:[%s1779 + $0x28] sm:$0xff]
    %v1786 = vld [vmem:[%s1779 + $0x30] sm:$0xff]
    %v1787 = vld [vmem:[%s1779 + $0x38] sm:$0xff]
    %v1788 = vld [vmem:[%s1779 + $0x40] sm:$0xff]
    %v1789 = vld [vmem:[%s1779 + $0x48] sm:$0xff]
    %v1790 = vld [vmem:[%s1779 + $0x50] sm:$0xff]
    %v1791 = vld [vmem:[%s1779 + $0x58] sm:$0xff]
    %v1792 = vld [vmem:[%s1779 + $0x60] sm:$0xff]
    %v1793 = vld [vmem:[%s1779 + $0x68] sm:$0xff]
    %v1794 = vld [vmem:[%s1779 + $0x70] sm:$0xff]
    %v1795 = vld [vmem:[%s1779 + $0x78] sm:$0xff]
    %1796 = vmatprep.subr.mxu0 0.0
    %1797 = vmatpush1.msra.mxu0 %v1795
    %1798 = vmatprep.subr.mxu0 0.0
    %1799 = vmatpush1.msra.mxu0 %v1794
    %1800 = vmatprep.subr.mxu0 0.0
    %1801 = vmatpush1.msra.mxu0 %v1793
    %1802 = vmatprep.subr.mxu0 0.0
    %1803 = vmatpush1.msra.mxu0 %v1792
    %1804 = vmatprep.subr.mxu0 0.0
    %1805 = vmatpush1.msra.mxu0 %v1791
    %1806 = vmatprep.subr.mxu0 0.0
    %1807 = vmatpush1.msra.mxu0 %v1790
    %1808 = vmatprep.subr.mxu0 0.0
    %1809 = vmatpush1.msra.mxu0 %v1789
    %1810 = vmatprep.subr.mxu0 0.0
    %1811 = vmatpush1.msra.mxu0 %v1788
    %1812 = vmatprep.subr.mxu0 0.0
    %1813 = vmatpush1.msra.mxu0 %v1787
    %1814 = vmatprep.subr.mxu0 0.0
    %1815 = vmatpush1.msra.mxu0 %v1786
    %1816 = vmatprep.subr.mxu0 0.0
    %1817 = vmatpush1.msra.mxu0 %v1785
    %1818 = vmatprep.subr.mxu0 0.0
    %1819 = vmatpush1.msra.mxu0 %v1784
    %1820 = vmatprep.subr.mxu0 0.0
    %1821 = vmatpush1.msra.mxu0 %v1783
    %1822 = vmatprep.subr.mxu0 0.0
    %1823 = vmatpush1.msra.mxu0 %v1782
    %1824 = vmatprep.subr.mxu0 0.0
    %1825 = vmatpush1.msra.mxu0 %v1781
    %1826 = vmatprep.subr.mxu0 0.0
    %1827 = vmatpush1.msra.mxu0 %v1780
    %1828 = vmatprep.subr.mxu0 0.0
    %1829 = vmatpush2.msra.mxu0 0.0
    %1830 = vmatprep.subr.mxu0 0.0
    %1831 = vmatpush2.msra.mxu0 0.0
    %1832 = vmatprep.subr.mxu0 0.0
    %1833 = vmatpush2.msra.mxu0 0.0
    %1834 = vmatprep.subr.mxu0 0.0
    %1835 = vmatpush2.msra.mxu0 0.0
    %1836 = vmatprep.subr.mxu0 0.0
    %1837 = vmatpush2.msra.mxu0 0.0
    %1838 = vmatprep.subr.mxu0 0.0
    %1839 = vmatpush2.msra.mxu0 0.0
    %1840 = vmatprep.subr.mxu0 0.0
    %1841 = vmatpush2.msra.mxu0 0.0
    %1842 = vmatprep.subr.mxu0 0.0
    %1843 = vmatpush2.msra.mxu0 0.0
    %1844 = vmatprep.subr.mxu0 0.0
    %1845 = vmatpush2.msra.mxu0 0.0
    %1846 = vmatprep.subr.mxu0 0.0
    %1847 = vmatpush2.msra.mxu0 0.0
    %1848 = vmatprep.subr.mxu0 0.0
    %1849 = vmatpush2.msra.mxu0 0.0
    %1850 = vmatprep.subr.mxu0 0.0
    %1851 = vmatpush2.msra.mxu0 0.0
    %1852 = vmatprep.subr.mxu0 0.0
    %1853 = vmatpush2.msra.mxu0 0.0
    %1854 = vmatprep.subr.mxu0 0.0
    %1855 = vmatpush2.msra.mxu0 0.0
    %1856 = vmatprep.subr.mxu0 0.0
    %1857 = vmatpush2.msra.mxu0 0.0
    %1858 = vmatprep.subr.mxu0 0.0
    %1859 = vmatpush2.msra.mxu0 0.0
    %1860 = vmatprep.mubr.f32.mxu0 0.0
    %1861 = vmatmul.mubr.f32.gmra.mxu0 %v1778
    %v1862 = vpop.f32.mrf.mxu0
    %v1863 = vadd.f32 0.0, %v1862
    %v1864 = vpop.f32.mrf.mxu0
    %1865 = vdwg.mxu0
    %v1866 = vmax.f32 %v1863, 0.0
    %s1867 = scalar_lea.vmem [#allocation2], 2176
    %v1868 = vld [vmem:[%s1867] sm:$0xff]
    %v1869 = vld [vmem:[%s1867 + $0x8] sm:$0xff]
    %v1870 = vld [vmem:[%s1867 + $0x10] sm:$0xff]
    %v1871 = vld [vmem:[%s1867 + $0x18] sm:$0xff]
    %v1872 = vld [vmem:[%s1867 + $0x20] sm:$0xff]
    %v1873 = vld [vmem:[%s1867 + $0x28] sm:$0xff]
    %v1874 = vld [vmem:[%s1867 + $0x30] sm:$0xff]
    %v1875 = vld [vmem:[%s1867 + $0x38] sm:$0xff]
    %v1876 = vld [vmem:[%s1867 + $0x40] sm:$0xff]
    %v1877 = vld [vmem:[%s1867 + $0x48] sm:$0xff]
    %v1878 = vld [vmem:[%s1867 + $0x50] sm:$0xff]
    %v1879 = vld [vmem:[%s1867 + $0x58] sm:$0xff]
    %v1880 = vld [vmem:[%s1867 + $0x60] sm:$0xff]
    %v1881 = vld [vmem:[%s1867 + $0x68] sm:$0xff]
    %v1882 = vld [vmem:[%s1867 + $0x70] sm:$0xff]
    %v1883 = vld [vmem:[%s1867 + $0x78] sm:$0xff]
    %1884 = vmatprep.subr.mxu0 0.0
    %1885 = vmatpush1.msra.mxu0 %v1883
    %1886 = vmatprep.subr.mxu0 0.0
    %1887 = vmatpush1.msra.mxu0 %v1882
    %1888 = vmatprep.subr.mxu0 0.0
    %1889 = vmatpush1.msra.mxu0 %v1881
    %1890 = vmatprep.subr.mxu0 0.0
    %1891 = vmatpush1.msra.mxu0 %v1880
    %1892 = vmatprep.subr.mxu0 0.0
    %1893 = vmatpush1.msra.mxu0 %v1879
    %1894 = vmatprep.subr.mxu0 0.0
    %1895 = vmatpush1.msra.mxu0 %v1878
    %1896 = vmatprep.subr.mxu0 0.0
    %1897 = vmatpush1.msra.mxu0 %v1877
    %1898 = vmatprep.subr.mxu0 0.0
    %1899 = vmatpush1.msra.mxu0 %v1876
    %1900 = vmatprep.subr.mxu0 0.0
    %1901 = vmatpush1.msra.mxu0 %v1875
    %1902 = vmatprep.subr.mxu0 0.0
    %1903 = vmatpush1.msra.mxu0 %v1874
    %1904 = vmatprep.subr.mxu0 0.0
    %1905 = vmatpush1.msra.mxu0 %v1873
    %1906 = vmatprep.subr.mxu0 0.0
    %1907 = vmatpush1.msra.mxu0 %v1872
    %1908 = vmatprep.subr.mxu0 0.0
    %1909 = vmatpush1.msra.mxu0 %v1871
    %1910 = vmatprep.subr.mxu0 0.0
    %1911 = vmatpush1.msra.mxu0 %v1870
    %1912 = vmatprep.subr.mxu0 0.0
    %1913 = vmatpush1.msra.mxu0 %v1869
    %1914 = vmatprep.subr.mxu0 0.0
    %1915 = vmatpush1.msra.mxu0 %v1868
    %1916 = vmatprep.subr.mxu0 0.0
    %1917 = vmatpush2.msra.mxu0 0.0
    %1918 = vmatprep.subr.mxu0 0.0
    %1919 = vmatpush2.msra.mxu0 0.0
    %1920 = vmatprep.subr.mxu0 0.0
    %1921 = vmatpush2.msra.mxu0 0.0
    %1922 = vmatprep.subr.mxu0 0.0
    %1923 = vmatpush2.msra.mxu0 0.0
    %1924 = vmatprep.subr.mxu0 0.0
    %1925 = vmatpush2.msra.mxu0 0.0
    %1926 = vmatprep.subr.mxu0 0.0
    %1927 = vmatpush2.msra.mxu0 0.0
    %1928 = vmatprep.subr.mxu0 0.0
    %1929 = vmatpush2.msra.mxu0 0.0
    %1930 = vmatprep.subr.mxu0 0.0
    %1931 = vmatpush2.msra.mxu0 0.0
    %1932 = vmatprep.subr.mxu0 0.0
    %1933 = vmatpush2.msra.mxu0 0.0
    %1934 = vmatprep.subr.mxu0 0.0
    %1935 = vmatpush2.msra.mxu0 0.0
    %1936 = vmatprep.subr.mxu0 0.0
    %1937 = vmatpush2.msra.mxu0 0.0
    %1938 = vmatprep.subr.mxu0 0.0
    %1939 = vmatpush2.msra.mxu0 0.0
    %1940 = vmatprep.subr.mxu0 0.0
    %1941 = vmatpush2.msra.mxu0 0.0
    %1942 = vmatprep.subr.mxu0 0.0
    %1943 = vmatpush2.msra.mxu0 0.0
    %1944 = vmatprep.subr.mxu0 0.0
    %1945 = vmatpush2.msra.mxu0 0.0
    %1946 = vmatprep.subr.mxu0 0.0
    %1947 = vmatpush2.msra.mxu0 0.0
    %1948 = vmatprep.mubr.f32.mxu0 0.0
    %1949 = vmatmul.mubr.f32.gmra.mxu0 %v1866
    %v1950 = vpop.f32.mrf.mxu0
    %v1951 = vadd.f32 0.0, %v1950
    %v1952 = vpop.f32.mrf.mxu0
    %1953 = vdwg.mxu0
    %v1954 = vmul.f32 %v1951, 2.0
    %v1955 = vxor.u32 %v1954, 2147483648
    %v1956 = vmul.f32 %v1955, 1.442695
    %v1957 = vpow.pop %v1956
    %v1958 = vadd.f32 %v1957, 1.0
    %v1959 = vrcp.pop %v1958
    %v1960 = vmul.f32 1.0, %v1959
    %v1961 = vmul.f32 %v1778, %v1960
    %vm1962 = vcmp.lt.s32.totalorder %v46, 32
    %v1963 = vsel %vm139, %v1961, 0.0
    %1964 = vadd.xlane.f32.xlu0 %v1963
    %v1965 = vpop.xlane.xlu0 %1964
    %v1966 = vmul.f32 %v1965, 0.03125
    %v1967 = vsel %vm1962, 1, 0
    %vm1968 = vcmp.eq.s32.totalorder %v1967, 1
    %v1969 = vsel %vm1968, %v1961, -1e+30
    %v1970 = vsel %vm139, %v1969, -inf
    %1971 = vmax.xlane.f32.xlu0 %v1970
    %v1972 = vpop.xlane.xlu0 %1971
    %v1973 = vld [vmem:[#allocation5 + $0x14] sm:$0x1]
    %v1974 = vlaneseq
    %v1975 = vshrl.u32 %v1974, 7
    %v1976 = vsub.s32 0, %v1975
    %v1977 = vrot.slane %v1973, %v1976
    %v1978 = vmul.f32 %v1966, %v1977
    %v1979 = vld [vmem:[#allocation5 + $0x15] sm:$0x1]
    %v1980 = vlaneseq
    %v1981 = vshrl.u32 %v1980, 7
    %v1982 = vsub.s32 0, %v1981
    %v1983 = vrot.slane %v1979, %v1982
    %v1984 = vmul.f32 %v1972, %v1983
    %v1985 = vadd.f32 %v1978, %v1984
    %v1986 = vld [vmem:[#allocation5 + $0x16] sm:$0x1]
    %v1987 = vlaneseq
    %v1988 = vshrl.u32 %v1987, 7
    %v1989 = vsub.s32 0, %v1988
    %v1990 = vrot.slane %v1986, %v1989
    %v1991 = vadd.f32 %v1985, %v1990
    %v1992 = vxor.u32 %v1991, 2147483648
    %v1993 = vmul.f32 %v1992, 1.442695
    %v1994 = vpow.pop %v1993
    %v1995 = vadd.f32 %v1994, 1.0
    %v1996 = vrcp.pop %v1995
    %v1997 = vmul.f32 1.0, %v1996
    %v1998 = vmul.f32 %v1961, %v1997
    %s1999 = scalar_lea.vmem [#allocation2], 2560
    %v2000 = vld [vmem:[%s1999] sm:$0xff]
    %v2001 = vld [vmem:[%s1999 + $0x8] sm:$0xff]
    %v2002 = vld [vmem:[%s1999 + $0x10] sm:$0xff]
    %v2003 = vld [vmem:[%s1999 + $0x18] sm:$0xff]
    %v2004 = vld [vmem:[%s1999 + $0x20] sm:$0xff]
    %v2005 = vld [vmem:[%s1999 + $0x28] sm:$0xff]
    %v2006 = vld [vmem:[%s1999 + $0x30] sm:$0xff]
    %v2007 = vld [vmem:[%s1999 + $0x38] sm:$0xff]
    %v2008 = vld [vmem:[%s1999 + $0x40] sm:$0xff]
    %v2009 = vld [vmem:[%s1999 + $0x48] sm:$0xff]
    %v2010 = vld [vmem:[%s1999 + $0x50] sm:$0xff]
    %v2011 = vld [vmem:[%s1999 + $0x58] sm:$0xff]
    %v2012 = vld [vmem:[%s1999 + $0x60] sm:$0xff]
    %v2013 = vld [vmem:[%s1999 + $0x68] sm:$0xff]
    %v2014 = vld [vmem:[%s1999 + $0x70] sm:$0xff]
    %v2015 = vld [vmem:[%s1999 + $0x78] sm:$0xff]
    %v2016 = vld [vmem:[#allocation5 + $0xf] sm:$0x1]
    %v2017 = vlaneseq
    %v2018 = vshrl.u32 %v2017, 7
    %v2019 = vsub.s32 0, %v2018
    %v2020 = vrot.slane %v2016, %v2019
    %2021 = vmatprep.subr.mxu0 0.0
    %2022 = vmatpush1.msra.mxu0 %v2015
    %2023 = vmatprep.subr.mxu0 0.0
    %2024 = vmatpush1.msra.mxu0 %v2014
    %2025 = vmatprep.subr.mxu0 0.0
    %2026 = vmatpush1.msra.mxu0 %v2013
    %2027 = vmatprep.subr.mxu0 0.0
    %2028 = vmatpush1.msra.mxu0 %v2012
    %2029 = vmatprep.subr.mxu0 0.0
    %2030 = vmatpush1.msra.mxu0 %v2011
    %2031 = vmatprep.subr.mxu0 0.0
    %2032 = vmatpush1.msra.mxu0 %v2010
    %2033 = vmatprep.subr.mxu0 0.0
    %2034 = vmatpush1.msra.mxu0 %v2009
    %2035 = vmatprep.subr.mxu0 0.0
    %2036 = vmatpush1.msra.mxu0 %v2008
    %2037 = vmatprep.subr.mxu0 0.0
    %2038 = vmatpush1.msra.mxu0 %v2007
    %2039 = vmatprep.subr.mxu0 0.0
    %2040 = vmatpush1.msra.mxu0 %v2006
    %2041 = vmatprep.subr.mxu0 0.0
    %2042 = vmatpush1.msra.mxu0 %v2005
    %2043 = vmatprep.subr.mxu0 0.0
    %2044 = vmatpush1.msra.mxu0 %v2004
    %2045 = vmatprep.subr.mxu0 0.0
    %2046 = vmatpush1.msra.mxu0 %v2003
    %2047 = vmatprep.subr.mxu0 0.0
    %2048 = vmatpush1.msra.mxu0 %v2002
    %2049 = vmatprep.subr.mxu0 0.0
    %2050 = vmatpush1.msra.mxu0 %v2001
    %2051 = vmatprep.subr.mxu0 0.0
    %2052 = vmatpush1.msra.mxu0 %v2000
    %2053 = vmatprep.subr.mxu0 0.0
    %2054 = vmatpush2.msra.mxu0 0.0
    %2055 = vmatprep.subr.mxu0 0.0
    %2056 = vmatpush2.msra.mxu0 0.0
    %2057 = vmatprep.subr.mxu0 0.0
    %2058 = vmatpush2.msra.mxu0 0.0
    %2059 = vmatprep.subr.mxu0 0.0
    %2060 = vmatpush2.msra.mxu0 0.0
    %2061 = vmatprep.subr.mxu0 0.0
    %2062 = vmatpush2.msra.mxu0 0.0
    %2063 = vmatprep.subr.mxu0 0.0
    %2064 = vmatpush2.msra.mxu0 0.0
    %2065 = vmatprep.subr.mxu0 0.0
    %2066 = vmatpush2.msra.mxu0 0.0
    %2067 = vmatprep.subr.mxu0 0.0
    %2068 = vmatpush2.msra.mxu0 0.0
    %2069 = vmatprep.subr.mxu0 0.0
    %2070 = vmatpush2.msra.mxu0 0.0
    %2071 = vmatprep.subr.mxu0 0.0
    %2072 = vmatpush2.msra.mxu0 0.0
    %2073 = vmatprep.subr.mxu0 0.0
    %2074 = vmatpush2.msra.mxu0 0.0
    %2075 = vmatprep.subr.mxu0 0.0
    %2076 = vmatpush2.msra.mxu0 0.0
    %2077 = vmatprep.subr.mxu0 0.0
    %2078 = vmatpush2.msra.mxu0 0.0
    %2079 = vmatprep.subr.mxu0 0.0
    %2080 = vmatpush2.msra.mxu0 0.0
    %2081 = vmatprep.subr.mxu0 0.0
    %2082 = vmatpush2.msra.mxu0 0.0
    %2083 = vmatprep.subr.mxu0 0.0
    %2084 = vmatpush2.msra.mxu0 0.0
    %2085 = vmatprep.mubr.f32.mxu0 0.0
    %2086 = vmatmul.mubr.f32.gmra.mxu0 %v1998
    %v2087 = vpop.f32.mrf.mxu0
    %v2088 = vadd.f32 %v2020, %v2087
    %v2089 = vpop.f32.mrf.mxu0
    %2090 = vdwg.mxu0
    %v2091 = vmax.f32 %v2088, 0.0
    %s2092 = scalar_lea.vmem [#allocation2], 2688
    %v2093 = vld [vmem:[%s2092] sm:$0xff]
    %v2094 = vld [vmem:[%s2092 + $0x8] sm:$0xff]
    %v2095 = vld [vmem:[%s2092 + $0x10] sm:$0xff]
    %v2096 = vld [vmem:[%s2092 + $0x18] sm:$0xff]
    %v2097 = vld [vmem:[%s2092 + $0x20] sm:$0xff]
    %v2098 = vld [vmem:[%s2092 + $0x28] sm:$0xff]
    %v2099 = vld [vmem:[%s2092 + $0x30] sm:$0xff]
    %v2100 = vld [vmem:[%s2092 + $0x38] sm:$0xff]
    %v2101 = vld [vmem:[%s2092 + $0x40] sm:$0xff]
    %v2102 = vld [vmem:[%s2092 + $0x48] sm:$0xff]
    %v2103 = vld [vmem:[%s2092 + $0x50] sm:$0xff]
    %v2104 = vld [vmem:[%s2092 + $0x58] sm:$0xff]
    %v2105 = vld [vmem:[%s2092 + $0x60] sm:$0xff]
    %v2106 = vld [vmem:[%s2092 + $0x68] sm:$0xff]
    %v2107 = vld [vmem:[%s2092 + $0x70] sm:$0xff]
    %v2108 = vld [vmem:[%s2092 + $0x78] sm:$0xff]
    %v2109 = vld [vmem:[#allocation5 + $0x10] sm:$0x1]
    %v2110 = vlaneseq
    %v2111 = vshrl.u32 %v2110, 7
    %v2112 = vsub.s32 0, %v2111
    %v2113 = vrot.slane %v2109, %v2112
    %2114 = vmatprep.subr.mxu0 0.0
    %2115 = vmatpush1.msra.mxu0 %v2108
    %2116 = vmatprep.subr.mxu0 0.0
    %2117 = vmatpush1.msra.mxu0 %v2107
    %2118 = vmatprep.subr.mxu0 0.0
    %2119 = vmatpush1.msra.mxu0 %v2106
    %2120 = vmatprep.subr.mxu0 0.0
    %2121 = vmatpush1.msra.mxu0 %v2105
    %2122 = vmatprep.subr.mxu0 0.0
    %2123 = vmatpush1.msra.mxu0 %v2104
    %2124 = vmatprep.subr.mxu0 0.0
    %2125 = vmatpush1.msra.mxu0 %v2103
    %2126 = vmatprep.subr.mxu0 0.0
    %2127 = vmatpush1.msra.mxu0 %v2102
    %2128 = vmatprep.subr.mxu0 0.0
    %2129 = vmatpush1.msra.mxu0 %v2101
    %2130 = vmatprep.subr.mxu0 0.0
    %2131 = vmatpush1.msra.mxu0 %v2100
    %2132 = vmatprep.subr.mxu0 0.0
    %2133 = vmatpush1.msra.mxu0 %v2099
    %2134 = vmatprep.subr.mxu0 0.0
    %2135 = vmatpush1.msra.mxu0 %v2098
    %2136 = vmatprep.subr.mxu0 0.0
    %2137 = vmatpush1.msra.mxu0 %v2097
    %2138 = vmatprep.subr.mxu0 0.0
    %2139 = vmatpush1.msra.mxu0 %v2096
    %2140 = vmatprep.subr.mxu0 0.0
    %2141 = vmatpush1.msra.mxu0 %v2095
    %2142 = vmatprep.subr.mxu0 0.0
    %2143 = vmatpush1.msra.mxu0 %v2094
    %2144 = vmatprep.subr.mxu0 0.0
    %2145 = vmatpush1.msra.mxu0 %v2093
    %2146 = vmatprep.subr.mxu0 0.0
    %2147 = vmatpush2.msra.mxu0 0.0
    %2148 = vmatprep.subr.mxu0 0.0
    %2149 = vmatpush2.msra.mxu0 0.0
    %2150 = vmatprep.subr.mxu0 0.0
    %2151 = vmatpush2.msra.mxu0 0.0
    %2152 = vmatprep.subr.mxu0 0.0
    %2153 = vmatpush2.msra.mxu0 0.0
    %2154 = vmatprep.subr.mxu0 0.0
    %2155 = vmatpush2.msra.mxu0 0.0
    %2156 = vmatprep.subr.mxu0 0.0
    %2157 = vmatpush2.msra.mxu0 0.0
    %2158 = vmatprep.subr.mxu0 0.0
    %2159 = vmatpush2.msra.mxu0 0.0
    %2160 = vmatprep.subr.mxu0 0.0
    %2161 = vmatpush2.msra.mxu0 0.0
    %2162 = vmatprep.subr.mxu0 0.0
    %2163 = vmatpush2.msra.mxu0 0.0
    %2164 = vmatprep.subr.mxu0 0.0
    %2165 = vmatpush2.msra.mxu0 0.0
    %2166 = vmatprep.subr.mxu0 0.0
    %2167 = vmatpush2.msra.mxu0 0.0
    %2168 = vmatprep.subr.mxu0 0.0
    %2169 = vmatpush2.msra.mxu0 0.0
    %2170 = vmatprep.subr.mxu0 0.0
    %2171 = vmatpush2.msra.mxu0 0.0
    %2172 = vmatprep.subr.mxu0 0.0
    %2173 = vmatpush2.msra.mxu0 0.0
    %2174 = vmatprep.subr.mxu0 0.0
    %2175 = vmatpush2.msra.mxu0 0.0
    %2176 = vmatprep.subr.mxu0 0.0
    %2177 = vmatpush2.msra.mxu0 0.0
    %2178 = vmatprep.mubr.f32.mxu0 0.0
    %2179 = vmatmul.mubr.f32.gmra.mxu0 %v2091
    %v2180 = vpop.f32.mrf.mxu0
    %v2181 = vadd.f32 %v2113, %v2180
    %v2182 = vpop.f32.mrf.mxu0
    %2183 = vdwg.mxu0
    %s2184 = scalar_lea.vmem [#allocation2], 2304
    %v2185 = vld [vmem:[%s2184] sm:$0xff]
    %v2186 = vld [vmem:[%s2184 + $0x8] sm:$0xff]
    %v2187 = vld [vmem:[%s2184 + $0x10] sm:$0xff]
    %v2188 = vld [vmem:[%s2184 + $0x18] sm:$0xff]
    %v2189 = vld [vmem:[%s2184 + $0x20] sm:$0xff]
    %v2190 = vld [vmem:[%s2184 + $0x28] sm:$0xff]
    %v2191 = vld [vmem:[%s2184 + $0x30] sm:$0xff]
    %v2192 = vld [vmem:[%s2184 + $0x38] sm:$0xff]
    %v2193 = vld [vmem:[%s2184 + $0x40] sm:$0xff]
    %v2194 = vld [vmem:[%s2184 + $0x48] sm:$0xff]
    %v2195 = vld [vmem:[%s2184 + $0x50] sm:$0xff]
    %v2196 = vld [vmem:[%s2184 + $0x58] sm:$0xff]
    %v2197 = vld [vmem:[%s2184 + $0x60] sm:$0xff]
    %v2198 = vld [vmem:[%s2184 + $0x68] sm:$0xff]
    %v2199 = vld [vmem:[%s2184 + $0x70] sm:$0xff]
    %v2200 = vld [vmem:[%s2184 + $0x78] sm:$0xff]
    %2201 = vmatprep.subr.mxu0 0.0
    %2202 = vmatpush1.msra.mxu0 %v2200
    %2203 = vmatprep.subr.mxu0 0.0
    %2204 = vmatpush1.msra.mxu0 %v2199
    %2205 = vmatprep.subr.mxu0 0.0
    %2206 = vmatpush1.msra.mxu0 %v2198
    %2207 = vmatprep.subr.mxu0 0.0
    %2208 = vmatpush1.msra.mxu0 %v2197
    %2209 = vmatprep.subr.mxu0 0.0
    %2210 = vmatpush1.msra.mxu0 %v2196
    %2211 = vmatprep.subr.mxu0 0.0
    %2212 = vmatpush1.msra.mxu0 %v2195
    %2213 = vmatprep.subr.mxu0 0.0
    %2214 = vmatpush1.msra.mxu0 %v2194
    %2215 = vmatprep.subr.mxu0 0.0
    %2216 = vmatpush1.msra.mxu0 %v2193
    %2217 = vmatprep.subr.mxu0 0.0
    %2218 = vmatpush1.msra.mxu0 %v2192
    %2219 = vmatprep.subr.mxu0 0.0
    %2220 = vmatpush1.msra.mxu0 %v2191
    %2221 = vmatprep.subr.mxu0 0.0
    %2222 = vmatpush1.msra.mxu0 %v2190
    %2223 = vmatprep.subr.mxu0 0.0
    %2224 = vmatpush1.msra.mxu0 %v2189
    %2225 = vmatprep.subr.mxu0 0.0
    %2226 = vmatpush1.msra.mxu0 %v2188
    %2227 = vmatprep.subr.mxu0 0.0
    %2228 = vmatpush1.msra.mxu0 %v2187
    %2229 = vmatprep.subr.mxu0 0.0
    %2230 = vmatpush1.msra.mxu0 %v2186
    %2231 = vmatprep.subr.mxu0 0.0
    %2232 = vmatpush1.msra.mxu0 %v2185
    %2233 = vmatprep.subr.mxu0 0.0
    %2234 = vmatpush2.msra.mxu0 0.0
    %2235 = vmatprep.subr.mxu0 0.0
    %2236 = vmatpush2.msra.mxu0 0.0
    %2237 = vmatprep.subr.mxu0 0.0
    %2238 = vmatpush2.msra.mxu0 0.0
    %2239 = vmatprep.subr.mxu0 0.0
    %2240 = vmatpush2.msra.mxu0 0.0
    %2241 = vmatprep.subr.mxu0 0.0
    %2242 = vmatpush2.msra.mxu0 0.0
    %2243 = vmatprep.subr.mxu0 0.0
    %2244 = vmatpush2.msra.mxu0 0.0
    %2245 = vmatprep.subr.mxu0 0.0
    %2246 = vmatpush2.msra.mxu0 0.0
    %2247 = vmatprep.subr.mxu0 0.0
    %2248 = vmatpush2.msra.mxu0 0.0
    %2249 = vmatprep.subr.mxu0 0.0
    %2250 = vmatpush2.msra.mxu0 0.0
    %2251 = vmatprep.subr.mxu0 0.0
    %2252 = vmatpush2.msra.mxu0 0.0
    %2253 = vmatprep.subr.mxu0 0.0
    %2254 = vmatpush2.msra.mxu0 0.0
    %2255 = vmatprep.subr.mxu0 0.0
    %2256 = vmatpush2.msra.mxu0 0.0
    %2257 = vmatprep.subr.mxu0 0.0
    %2258 = vmatpush2.msra.mxu0 0.0
    %2259 = vmatprep.subr.mxu0 0.0
    %2260 = vmatpush2.msra.mxu0 0.0
    %2261 = vmatprep.subr.mxu0 0.0
    %2262 = vmatpush2.msra.mxu0 0.0
    %2263 = vmatprep.subr.mxu0 0.0
    %2264 = vmatpush2.msra.mxu0 0.0
    %2265 = vmatprep.mubr.f32.mxu0 0.0
    %2266 = vmatmul.mubr.f32.gmra.mxu0 %v2181
    %v2267 = vpop.f32.mrf.mxu0
    %v2268 = vadd.f32 0.0, %v2267
    %v2269 = vpop.f32.mrf.mxu0
    %2270 = vdwg.mxu0
    %v2271 = vmul.f32 %v2268, 0.17677669
    %v2272 = vsel %vm885, %v2271, -1e+30
    %v2273 = vsel %vm139, %v2272, -inf
    %2274 = vmax.xlane.f32.xlu0 %v2273
    %v2275 = vpop.xlane.xlu0 %2274
    %v2276 = vsub.f32 %v2272, %v2275
    %v2277 = vmul.f32 %v2276, 1.442695
    %v2278 = vpow.pop %v2277
    %v2279 = vsel %vm139, %v2278, 0.0
    %2280 = vadd.xlane.f32.xlu0 %v2279
    %v2281 = vpop.xlane.xlu0 %2280
    %v2282 = vrcp.pop %v2281
    %v2283 = vmul.f32 %v2278, %v2282
    %s2284 = scalar_lea.vmem [#allocation2], 2432
    %v2285 = vld [vmem:[%s2284] sm:$0xff]
    %v2286 = vld [vmem:[%s2284 + $0x8] sm:$0xff]
    %v2287 = vld [vmem:[%s2284 + $0x10] sm:$0xff]
    %v2288 = vld [vmem:[%s2284 + $0x18] sm:$0xff]
    %v2289 = vld [vmem:[%s2284 + $0x20] sm:$0xff]
    %v2290 = vld [vmem:[%s2284 + $0x28] sm:$0xff]
    %v2291 = vld [vmem:[%s2284 + $0x30] sm:$0xff]
    %v2292 = vld [vmem:[%s2284 + $0x38] sm:$0xff]
    %v2293 = vld [vmem:[%s2284 + $0x40] sm:$0xff]
    %v2294 = vld [vmem:[%s2284 + $0x48] sm:$0xff]
    %v2295 = vld [vmem:[%s2284 + $0x50] sm:$0xff]
    %v2296 = vld [vmem:[%s2284 + $0x58] sm:$0xff]
    %v2297 = vld [vmem:[%s2284 + $0x60] sm:$0xff]
    %v2298 = vld [vmem:[%s2284 + $0x68] sm:$0xff]
    %v2299 = vld [vmem:[%s2284 + $0x70] sm:$0xff]
    %v2300 = vld [vmem:[%s2284 + $0x78] sm:$0xff]
    %2301 = vmatprep.subr.mxu0 0.0
    %2302 = vmatpush1.msra.mxu0 %v2300
    %2303 = vmatprep.subr.mxu0 0.0
    %2304 = vmatpush1.msra.mxu0 %v2299
    %2305 = vmatprep.subr.mxu0 0.0
    %2306 = vmatpush1.msra.mxu0 %v2298
    %2307 = vmatprep.subr.mxu0 0.0
    %2308 = vmatpush1.msra.mxu0 %v2297
    %2309 = vmatprep.subr.mxu0 0.0
    %2310 = vmatpush1.msra.mxu0 %v2296
    %2311 = vmatprep.subr.mxu0 0.0
    %2312 = vmatpush1.msra.mxu0 %v2295
    %2313 = vmatprep.subr.mxu0 0.0
    %2314 = vmatpush1.msra.mxu0 %v2294
    %2315 = vmatprep.subr.mxu0 0.0
    %2316 = vmatpush1.msra.mxu0 %v2293
    %2317 = vmatprep.subr.mxu0 0.0
    %2318 = vmatpush1.msra.mxu0 %v2292
    %2319 = vmatprep.subr.mxu0 0.0
    %2320 = vmatpush1.msra.mxu0 %v2291
    %2321 = vmatprep.subr.mxu0 0.0
    %2322 = vmatpush1.msra.mxu0 %v2290
    %2323 = vmatprep.subr.mxu0 0.0
    %2324 = vmatpush1.msra.mxu0 %v2289
    %2325 = vmatprep.subr.mxu0 0.0
    %2326 = vmatpush1.msra.mxu0 %v2288
    %2327 = vmatprep.subr.mxu0 0.0
    %2328 = vmatpush1.msra.mxu0 %v2287
    %2329 = vmatprep.subr.mxu0 0.0
    %2330 = vmatpush1.msra.mxu0 %v2286
    %2331 = vmatprep.subr.mxu0 0.0
    %2332 = vmatpush1.msra.mxu0 %v2285
    %2333 = vmatprep.subr.mxu0 0.0
    %2334 = vmatpush2.msra.mxu0 0.0
    %2335 = vmatprep.subr.mxu0 0.0
    %2336 = vmatpush2.msra.mxu0 0.0
    %2337 = vmatprep.subr.mxu0 0.0
    %2338 = vmatpush2.msra.mxu0 0.0
    %2339 = vmatprep.subr.mxu0 0.0
    %2340 = vmatpush2.msra.mxu0 0.0
    %2341 = vmatprep.subr.mxu0 0.0
    %2342 = vmatpush2.msra.mxu0 0.0
    %2343 = vmatprep.subr.mxu0 0.0
    %2344 = vmatpush2.msra.mxu0 0.0
    %2345 = vmatprep.subr.mxu0 0.0
    %2346 = vmatpush2.msra.mxu0 0.0
    %2347 = vmatprep.subr.mxu0 0.0
    %2348 = vmatpush2.msra.mxu0 0.0
    %2349 = vmatprep.subr.mxu0 0.0
    %2350 = vmatpush2.msra.mxu0 0.0
    %2351 = vmatprep.subr.mxu0 0.0
    %2352 = vmatpush2.msra.mxu0 0.0
    %2353 = vmatprep.subr.mxu0 0.0
    %2354 = vmatpush2.msra.mxu0 0.0
    %2355 = vmatprep.subr.mxu0 0.0
    %2356 = vmatpush2.msra.mxu0 0.0
    %2357 = vmatprep.subr.mxu0 0.0
    %2358 = vmatpush2.msra.mxu0 0.0
    %2359 = vmatprep.subr.mxu0 0.0
    %2360 = vmatpush2.msra.mxu0 0.0
    %2361 = vmatprep.subr.mxu0 0.0
    %2362 = vmatpush2.msra.mxu0 0.0
    %2363 = vmatprep.subr.mxu0 0.0
    %2364 = vmatpush2.msra.mxu0 0.0
    %2365 = vmatprep.mubr.f32.mxu0 0.0
    %2366 = vmatmul.mubr.f32.gmra.mxu0 %v2283
    %v2367 = vpop.f32.mrf.mxu0
    %v2368 = vadd.f32 0.0, %v2367
    %v2369 = vpop.f32.mrf.mxu0
    %2370 = vdwg.mxu0
    %s2371 = scalar_lea.vmem [#allocation2], 2816
    %v2372 = vld [vmem:[%s2371] sm:$0xff]
    %v2373 = vld [vmem:[%s2371 + $0x8] sm:$0xff]
    %v2374 = vld [vmem:[%s2371 + $0x10] sm:$0xff]
    %v2375 = vld [vmem:[%s2371 + $0x18] sm:$0xff]
    %v2376 = vld [vmem:[%s2371 + $0x20] sm:$0xff]
    %v2377 = vld [vmem:[%s2371 + $0x28] sm:$0xff]
    %v2378 = vld [vmem:[%s2371 + $0x30] sm:$0xff]
    %v2379 = vld [vmem:[%s2371 + $0x38] sm:$0xff]
    %v2380 = vld [vmem:[%s2371 + $0x40] sm:$0xff]
    %v2381 = vld [vmem:[%s2371 + $0x48] sm:$0xff]
    %v2382 = vld [vmem:[%s2371 + $0x50] sm:$0xff]
    %v2383 = vld [vmem:[%s2371 + $0x58] sm:$0xff]
    %v2384 = vld [vmem:[%s2371 + $0x60] sm:$0xff]
    %v2385 = vld [vmem:[%s2371 + $0x68] sm:$0xff]
    %v2386 = vld [vmem:[%s2371 + $0x70] sm:$0xff]
    %v2387 = vld [vmem:[%s2371 + $0x78] sm:$0xff]
    %s2388 = scalar_lea.vmem [#allocation2], 2944
    %v2389 = vld [vmem:[%s2388] sm:$0xff]
    %v2390 = vld [vmem:[%s2388 + $0x8] sm:$0xff]
    %v2391 = vld [vmem:[%s2388 + $0x10] sm:$0xff]
    %v2392 = vld [vmem:[%s2388 + $0x18] sm:$0xff]
    %v2393 = vld [vmem:[%s2388 + $0x20] sm:$0xff]
    %v2394 = vld [vmem:[%s2388 + $0x28] sm:$0xff]
    %v2395 = vld [vmem:[%s2388 + $0x30] sm:$0xff]
    %v2396 = vld [vmem:[%s2388 + $0x38] sm:$0xff]
    %v2397 = vld [vmem:[%s2388 + $0x40] sm:$0xff]
    %v2398 = vld [vmem:[%s2388 + $0x48] sm:$0xff]
    %v2399 = vld [vmem:[%s2388 + $0x50] sm:$0xff]
    %v2400 = vld [vmem:[%s2388 + $0x58] sm:$0xff]
    %v2401 = vld [vmem:[%s2388 + $0x60] sm:$0xff]
    %v2402 = vld [vmem:[%s2388 + $0x68] sm:$0xff]
    %v2403 = vld [vmem:[%s2388 + $0x70] sm:$0xff]
    %v2404 = vld [vmem:[%s2388 + $0x78] sm:$0xff]
    %2405 = vmatprep.subr.mxu0 0.0
    %2406 = vmatpush1.msra.mxu0 %v2404
    %2407 = vmatprep.subr.mxu0 0.0
    %2408 = vmatpush1.msra.mxu0 %v2403
    %2409 = vmatprep.subr.mxu0 0.0
    %2410 = vmatpush1.msra.mxu0 %v2402
    %2411 = vmatprep.subr.mxu0 0.0
    %2412 = vmatpush1.msra.mxu0 %v2401
    %2413 = vmatprep.subr.mxu0 0.0
    %2414 = vmatpush1.msra.mxu0 %v2400
    %2415 = vmatprep.subr.mxu0 0.0
    %2416 = vmatpush1.msra.mxu0 %v2399
    %2417 = vmatprep.subr.mxu0 0.0
    %2418 = vmatpush1.msra.mxu0 %v2398
    %2419 = vmatprep.subr.mxu0 0.0
    %2420 = vmatpush1.msra.mxu0 %v2397
    %2421 = vmatprep.subr.mxu0 0.0
    %2422 = vmatpush1.msra.mxu0 %v2396
    %2423 = vmatprep.subr.mxu0 0.0
    %2424 = vmatpush1.msra.mxu0 %v2395
    %2425 = vmatprep.subr.mxu0 0.0
    %2426 = vmatpush1.msra.mxu0 %v2394
    %2427 = vmatprep.subr.mxu0 0.0
    %2428 = vmatpush1.msra.mxu0 %v2393
    %2429 = vmatprep.subr.mxu0 0.0
    %2430 = vmatpush1.msra.mxu0 %v2392
    %2431 = vmatprep.subr.mxu0 0.0
    %2432 = vmatpush1.msra.mxu0 %v2391
    %2433 = vmatprep.subr.mxu0 0.0
    %2434 = vmatpush1.msra.mxu0 %v2390
    %2435 = vmatprep.subr.mxu0 0.0
    %2436 = vmatpush1.msra.mxu0 %v2389
    %2437 = vmatprep.subr.mxu0 0.0
    %2438 = vmatpush2.msra.mxu0 0.0
    %2439 = vmatprep.subr.mxu0 0.0
    %2440 = vmatpush2.msra.mxu0 0.0
    %2441 = vmatprep.subr.mxu0 0.0
    %2442 = vmatpush2.msra.mxu0 0.0
    %2443 = vmatprep.subr.mxu0 0.0
    %2444 = vmatpush2.msra.mxu0 0.0
    %2445 = vmatprep.subr.mxu0 0.0
    %2446 = vmatpush2.msra.mxu0 0.0
    %2447 = vmatprep.subr.mxu0 0.0
    %2448 = vmatpush2.msra.mxu0 0.0
    %2449 = vmatprep.subr.mxu0 0.0
    %2450 = vmatpush2.msra.mxu0 0.0
    %2451 = vmatprep.subr.mxu0 0.0
    %2452 = vmatpush2.msra.mxu0 0.0
    %2453 = vmatprep.subr.mxu0 0.0
    %2454 = vmatpush2.msra.mxu0 0.0
    %2455 = vmatprep.subr.mxu0 0.0
    %2456 = vmatpush2.msra.mxu0 0.0
    %2457 = vmatprep.subr.mxu0 0.0
    %2458 = vmatpush2.msra.mxu0 0.0
    %2459 = vmatprep.subr.mxu0 0.0
    %2460 = vmatpush2.msra.mxu0 0.0
    %2461 = vmatprep.subr.mxu0 0.0
    %2462 = vmatpush2.msra.mxu0 0.0
    %2463 = vmatprep.subr.mxu0 0.0
    %2464 = vmatpush2.msra.mxu0 0.0
    %2465 = vmatprep.subr.mxu0 0.0
    %2466 = vmatpush2.msra.mxu0 0.0
    %2467 = vmatprep.subr.mxu0 0.0
    %2468 = vmatpush2.msra.mxu0 0.0
    %2469 = vmatprep.mubr.f32.mxu0 0.0
    %2470 = vmatmul.mubr.f32.gmra.mxu0 %v2368
    %v2471 = vpop.f32.mrf.mxu0
    %v2472 = vadd.f32 0.0, %v2471
    %v2473 = vpop.f32.mrf.mxu0
    %2474 = vdwg.mxu0
    %2475 = vmatprep.subr.mxu0 0.0
    %2476 = vmatpush1.msra.mxu0 %v2387
    %2477 = vmatprep.subr.mxu0 0.0
    %2478 = vmatpush1.msra.mxu0 %v2386
    %2479 = vmatprep.subr.mxu0 0.0
    %2480 = vmatpush1.msra.mxu0 %v2385
    %2481 = vmatprep.subr.mxu0 0.0
    %2482 = vmatpush1.msra.mxu0 %v2384
    %2483 = vmatprep.subr.mxu0 0.0
    %2484 = vmatpush1.msra.mxu0 %v2383
    %2485 = vmatprep.subr.mxu0 0.0
    %2486 = vmatpush1.msra.mxu0 %v2382
    %2487 = vmatprep.subr.mxu0 0.0
    %2488 = vmatpush1.msra.mxu0 %v2381
    %2489 = vmatprep.subr.mxu0 0.0
    %2490 = vmatpush1.msra.mxu0 %v2380
    %2491 = vmatprep.subr.mxu0 0.0
    %2492 = vmatpush1.msra.mxu0 %v2379
    %2493 = vmatprep.subr.mxu0 0.0
    %2494 = vmatpush1.msra.mxu0 %v2378
    %2495 = vmatprep.subr.mxu0 0.0
    %2496 = vmatpush1.msra.mxu0 %v2377
    %2497 = vmatprep.subr.mxu0 0.0
    %2498 = vmatpush1.msra.mxu0 %v2376
    %2499 = vmatprep.subr.mxu0 0.0
    %2500 = vmatpush1.msra.mxu0 %v2375
    %2501 = vmatprep.subr.mxu0 0.0
    %2502 = vmatpush1.msra.mxu0 %v2374
    %2503 = vmatprep.subr.mxu0 0.0
    %2504 = vmatpush1.msra.mxu0 %v2373
    %2505 = vmatprep.subr.mxu0 0.0
    %2506 = vmatpush1.msra.mxu0 %v2372
    %2507 = vmatprep.subr.mxu0 0.0
    %2508 = vmatpush2.msra.mxu0 0.0
    %2509 = vmatprep.subr.mxu0 0.0
    %2510 = vmatpush2.msra.mxu0 0.0
    %2511 = vmatprep.subr.mxu0 0.0
    %2512 = vmatpush2.msra.mxu0 0.0
    %2513 = vmatprep.subr.mxu0 0.0
    %2514 = vmatpush2.msra.mxu0 0.0
    %2515 = vmatprep.subr.mxu0 0.0
    %2516 = vmatpush2.msra.mxu0 0.0
    %2517 = vmatprep.subr.mxu0 0.0
    %2518 = vmatpush2.msra.mxu0 0.0
    %2519 = vmatprep.subr.mxu0 0.0
    %2520 = vmatpush2.msra.mxu0 0.0
    %2521 = vmatprep.subr.mxu0 0.0
    %2522 = vmatpush2.msra.mxu0 0.0
    %2523 = vmatprep.subr.mxu0 0.0
    %2524 = vmatpush2.msra.mxu0 0.0
    %2525 = vmatprep.subr.mxu0 0.0
    %2526 = vmatpush2.msra.mxu0 0.0
    %2527 = vmatprep.subr.mxu0 0.0
    %2528 = vmatpush2.msra.mxu0 0.0
    %2529 = vmatprep.subr.mxu0 0.0
    %2530 = vmatpush2.msra.mxu0 0.0
    %2531 = vmatprep.subr.mxu0 0.0
    %2532 = vmatpush2.msra.mxu0 0.0
    %2533 = vmatprep.subr.mxu0 0.0
    %2534 = vmatpush2.msra.mxu0 0.0
    %2535 = vmatprep.subr.mxu0 0.0
    %2536 = vmatpush2.msra.mxu0 0.0
    %2537 = vmatprep.subr.mxu0 0.0
    %2538 = vmatpush2.msra.mxu0 0.0
    %2539 = vmatprep.mubr.f32.mxu0 0.0
    %2540 = vmatmul.mubr.f32.gmra.mxu0 %v1998
    %v2541 = vpop.f32.mrf.mxu0
    %v2542 = vadd.f32 %v2472, %v2541
    %v2543 = vpop.f32.mrf.mxu0
    %2544 = vdwg.mxu0
    %v2545 = vld [vmem:[#allocation5 + $0x11] sm:$0x1]
    %v2546 = vlaneseq
    %v2547 = vshrl.u32 %v2546, 7
    %v2548 = vsub.s32 0, %v2547
    %v2549 = vrot.slane %v2545, %v2548
    %v2550 = vadd.f32 %v2542, %v2549
    %v2551 = vxor.u32 %v2550, 2147483648
    %v2552 = vmul.f32 %v2551, 1.442695
    %v2553 = vpow.pop %v2552
    %v2554 = vadd.f32 %v2553, 1.0
    %v2555 = vrcp.pop %v2554
    %v2556 = vmul.f32 1.0, %v2555
    %v2557 = vmul.f32 %v2556, %v2368
    %v2558 = vsub.f32 1.0, %v2556
    %v2559 = vmul.f32 %v2558, %v1998
    %v2560 = vadd.f32 %v2557, %v2559
    %v2561 = vsel %vm139, %v2283, 0.0
    %2562 = vadd.xlane.f32.xlu0 %v2561
    %v2563 = vpop.xlane.xlu0 %2562
    %v2564 = vrot.slane %v2563, 4
    %v2565 = vadd.f32 %v2563, %v2564
    %v2566 = vrot.slane %v2565, 2
    %v2567 = vadd.f32 %v2565, %v2566
    %v2568 = vrot.slane %v2567, 1
    %v2569 = vadd.f32 %v2567, %v2568
    %s2570 = vtos %v2569
    %v2571 = vstv %s2570
    %v2572 = vmul.f32 %v2571, 0.0078125
    %v2573 = vmul.f32 %v2560, 0.1
    %vm2574 = vcmp.ge.f32.partialorder %v2573, 1.0
    %v2575 = vsel %vm2574, 1, 0
    %v2576 = vcvt.s32.f32 %v2575
    %v2577 = vsel %vm139, %v2576, 0.0
    %2578 = vadd.xlane.f32.xlu0 %v2577
    %v2579 = vpop.xlane.xlu0 %2578
    %v2580 = vrot.slane %v2579, 4
    %v2581 = vadd.f32 %v2579, %v2580
    %v2582 = vrot.slane %v2581, 2
    %v2583 = vadd.f32 %v2581, %v2582
    %v2584 = vrot.slane %v2583, 1
    %v2585 = vadd.f32 %v2583, %v2584
    %s2586 = vtos %v2585
    %v2587 = vstv %s2586
    %v2588 = vmul.f32 %v2587, 0.015625
    %s2589 = scalar_lea.vmem [#allocation2], 3072
    %v2590 = vld [vmem:[%s2589] sm:$0xff]
    %v2591 = vld [vmem:[%s2589 + $0x8] sm:$0xff]
    %v2592 = vld [vmem:[%s2589 + $0x10] sm:$0xff]
    %v2593 = vld [vmem:[%s2589 + $0x18] sm:$0xff]
    %v2594 = vld [vmem:[%s2589 + $0x20] sm:$0xff]
    %v2595 = vld [vmem:[%s2589 + $0x28] sm:$0xff]
    %v2596 = vld [vmem:[%s2589 + $0x30] sm:$0xff]
    %v2597 = vld [vmem:[%s2589 + $0x38] sm:$0xff]
    %v2598 = vld [vmem:[%s2589 + $0x40] sm:$0xff]
    %v2599 = vld [vmem:[%s2589 + $0x48] sm:$0xff]
    %v2600 = vld [vmem:[%s2589 + $0x50] sm:$0xff]
    %v2601 = vld [vmem:[%s2589 + $0x58] sm:$0xff]
    %v2602 = vld [vmem:[%s2589 + $0x60] sm:$0xff]
    %v2603 = vld [vmem:[%s2589 + $0x68] sm:$0xff]
    %v2604 = vld [vmem:[%s2589 + $0x70] sm:$0xff]
    %v2605 = vld [vmem:[%s2589 + $0x78] sm:$0xff]
    %v2606 = vld [vmem:[#allocation5 + $0x12] sm:$0x1]
    %v2607 = vlaneseq
    %v2608 = vshrl.u32 %v2607, 7
    %v2609 = vsub.s32 0, %v2608
    %v2610 = vrot.slane %v2606, %v2609
    %2611 = vmatprep.subr.mxu0 0.0
    %2612 = vmatpush1.msra.mxu0 %v2605
    %2613 = vmatprep.subr.mxu0 0.0
    %2614 = vmatpush1.msra.mxu0 %v2604
    %2615 = vmatprep.subr.mxu0 0.0
    %2616 = vmatpush1.msra.mxu0 %v2603
    %2617 = vmatprep.subr.mxu0 0.0
    %2618 = vmatpush1.msra.mxu0 %v2602
    %2619 = vmatprep.subr.mxu0 0.0
    %2620 = vmatpush1.msra.mxu0 %v2601
    %2621 = vmatprep.subr.mxu0 0.0
    %2622 = vmatpush1.msra.mxu0 %v2600
    %2623 = vmatprep.subr.mxu0 0.0
    %2624 = vmatpush1.msra.mxu0 %v2599
    %2625 = vmatprep.subr.mxu0 0.0
    %2626 = vmatpush1.msra.mxu0 %v2598
    %2627 = vmatprep.subr.mxu0 0.0
    %2628 = vmatpush1.msra.mxu0 %v2597
    %2629 = vmatprep.subr.mxu0 0.0
    %2630 = vmatpush1.msra.mxu0 %v2596
    %2631 = vmatprep.subr.mxu0 0.0
    %2632 = vmatpush1.msra.mxu0 %v2595
    %2633 = vmatprep.subr.mxu0 0.0
    %2634 = vmatpush1.msra.mxu0 %v2594
    %2635 = vmatprep.subr.mxu0 0.0
    %2636 = vmatpush1.msra.mxu0 %v2593
    %2637 = vmatprep.subr.mxu0 0.0
    %2638 = vmatpush1.msra.mxu0 %v2592
    %2639 = vmatprep.subr.mxu0 0.0
    %2640 = vmatpush1.msra.mxu0 %v2591
    %2641 = vmatprep.subr.mxu0 0.0
    %2642 = vmatpush1.msra.mxu0 %v2590
    %2643 = vmatprep.subr.mxu0 0.0
    %2644 = vmatpush2.msra.mxu0 0.0
    %2645 = vmatprep.subr.mxu0 0.0
    %2646 = vmatpush2.msra.mxu0 0.0
    %2647 = vmatprep.subr.mxu0 0.0
    %2648 = vmatpush2.msra.mxu0 0.0
    %2649 = vmatprep.subr.mxu0 0.0
    %2650 = vmatpush2.msra.mxu0 0.0
    %2651 = vmatprep.subr.mxu0 0.0
    %2652 = vmatpush2.msra.mxu0 0.0
    %2653 = vmatprep.subr.mxu0 0.0
    %2654 = vmatpush2.msra.mxu0 0.0
    %2655 = vmatprep.subr.mxu0 0.0
    %2656 = vmatpush2.msra.mxu0 0.0
    %2657 = vmatprep.subr.mxu0 0.0
    %2658 = vmatpush2.msra.mxu0 0.0
    %2659 = vmatprep.subr.mxu0 0.0
    %2660 = vmatpush2.msra.mxu0 0.0
    %2661 = vmatprep.subr.mxu0 0.0
    %2662 = vmatpush2.msra.mxu0 0.0
    %2663 = vmatprep.subr.mxu0 0.0
    %2664 = vmatpush2.msra.mxu0 0.0
    %2665 = vmatprep.subr.mxu0 0.0
    %2666 = vmatpush2.msra.mxu0 0.0
    %2667 = vmatprep.subr.mxu0 0.0
    %2668 = vmatpush2.msra.mxu0 0.0
    %2669 = vmatprep.subr.mxu0 0.0
    %2670 = vmatpush2.msra.mxu0 0.0
    %2671 = vmatprep.subr.mxu0 0.0
    %2672 = vmatpush2.msra.mxu0 0.0
    %2673 = vmatprep.subr.mxu0 0.0
    %2674 = vmatpush2.msra.mxu0 0.0
    %2675 = vmatprep.mubr.f32.mxu0 0.0
    %2676 = vmatmul.mubr.f32.gmra.mxu0 %v2576
    %v2677 = vpop.f32.mrf.mxu0
    %v2678 = vadd.f32 %v2610, %v2677
    %v2679 = vpop.f32.mrf.mxu0
    %2680 = vdwg.mxu0
    %v2681 = vsel %vm139, %v2678, 0.0
    %v2682 = vrot.slane %v2681, 4
    %v2683 = vadd.f32 %v2681, %v2682
    %v2684 = vrot.slane %v2683, 2
    %v2685 = vadd.f32 %v2683, %v2684
    %v2686 = vrot.slane %v2685, 1
    %v2687 = vadd.f32 %v2685, %v2686
    %v2688 = vmul.f32 %v2687, %v147
    %v2689 = vsub.f32 %v2678, %v2688
    %v2690 = vmul.f32 %v2689, %v2689
    %v2691 = vsel %vm139, %v2690, 0.0
    %v2692 = vrot.slane %v2691, 4
    %v2693 = vadd.f32 %v2691, %v2692
    %v2694 = vrot.slane %v2693, 2
    %v2695 = vadd.f32 %v2693, %v2694
    %v2696 = vrot.slane %v2695, 1
    %v2697 = vadd.f32 %v2695, %v2696
    %v2698 = vmul.f32 %v2697, %v147
    %v2699 = vadd.f32 %v2698, 1e-05
    %v2700 = vrsqrt.pop %v2699
    %v2701 = vmul.f32 %v2689, %v2700
    %v2702 = vmax.f32 %v2701, 0.0
    %s2703 = scalar_lea.vmem [#allocation2], 3200
    %v2704 = vld [vmem:[%s2703] sm:$0xff]
    %v2705 = vld [vmem:[%s2703 + $0x8] sm:$0xff]
    %v2706 = vld [vmem:[%s2703 + $0x10] sm:$0xff]
    %v2707 = vld [vmem:[%s2703 + $0x18] sm:$0xff]
    %v2708 = vld [vmem:[%s2703 + $0x20] sm:$0xff]
    %v2709 = vld [vmem:[%s2703 + $0x28] sm:$0xff]
    %v2710 = vld [vmem:[%s2703 + $0x30] sm:$0xff]
    %v2711 = vld [vmem:[%s2703 + $0x38] sm:$0xff]
    %v2712 = vld [vmem:[%s2703 + $0x40] sm:$0xff]
    %v2713 = vld [vmem:[%s2703 + $0x48] sm:$0xff]
    %v2714 = vld [vmem:[%s2703 + $0x50] sm:$0xff]
    %v2715 = vld [vmem:[%s2703 + $0x58] sm:$0xff]
    %v2716 = vld [vmem:[%s2703 + $0x60] sm:$0xff]
    %v2717 = vld [vmem:[%s2703 + $0x68] sm:$0xff]
    %v2718 = vld [vmem:[%s2703 + $0x70] sm:$0xff]
    %v2719 = vld [vmem:[%s2703 + $0x78] sm:$0xff]
    %v2720 = vld [vmem:[#allocation5 + $0x13] sm:$0x1]
    %v2721 = vlaneseq
    %v2722 = vshrl.u32 %v2721, 7
    %v2723 = vsub.s32 0, %v2722
    %v2724 = vrot.slane %v2720, %v2723
    %2725 = vmatprep.subr.mxu0 0.0
    %2726 = vmatpush1.msra.mxu0 %v2719
    %2727 = vmatprep.subr.mxu0 0.0
    %2728 = vmatpush1.msra.mxu0 %v2718
    %2729 = vmatprep.subr.mxu0 0.0
    %2730 = vmatpush1.msra.mxu0 %v2717
    %2731 = vmatprep.subr.mxu0 0.0
    %2732 = vmatpush1.msra.mxu0 %v2716
    %2733 = vmatprep.subr.mxu0 0.0
    %2734 = vmatpush1.msra.mxu0 %v2715
    %2735 = vmatprep.subr.mxu0 0.0
    %2736 = vmatpush1.msra.mxu0 %v2714
    %2737 = vmatprep.subr.mxu0 0.0
    %2738 = vmatpush1.msra.mxu0 %v2713
    %2739 = vmatprep.subr.mxu0 0.0
    %2740 = vmatpush1.msra.mxu0 %v2712
    %2741 = vmatprep.subr.mxu0 0.0
    %2742 = vmatpush1.msra.mxu0 %v2711
    %2743 = vmatprep.subr.mxu0 0.0
    %2744 = vmatpush1.msra.mxu0 %v2710
    %2745 = vmatprep.subr.mxu0 0.0
    %2746 = vmatpush1.msra.mxu0 %v2709
    %2747 = vmatprep.subr.mxu0 0.0
    %2748 = vmatpush1.msra.mxu0 %v2708
    %2749 = vmatprep.subr.mxu0 0.0
    %2750 = vmatpush1.msra.mxu0 %v2707
    %2751 = vmatprep.subr.mxu0 0.0
    %2752 = vmatpush1.msra.mxu0 %v2706
    %2753 = vmatprep.subr.mxu0 0.0
    %2754 = vmatpush1.msra.mxu0 %v2705
    %2755 = vmatprep.subr.mxu0 0.0
    %2756 = vmatpush1.msra.mxu0 %v2704
    %2757 = vmatprep.subr.mxu0 0.0
    %2758 = vmatpush2.msra.mxu0 0.0
    %2759 = vmatprep.subr.mxu0 0.0
    %2760 = vmatpush2.msra.mxu0 0.0
    %2761 = vmatprep.subr.mxu0 0.0
    %2762 = vmatpush2.msra.mxu0 0.0
    %2763 = vmatprep.subr.mxu0 0.0
    %2764 = vmatpush2.msra.mxu0 0.0
    %2765 = vmatprep.subr.mxu0 0.0
    %2766 = vmatpush2.msra.mxu0 0.0
    %2767 = vmatprep.subr.mxu0 0.0
    %2768 = vmatpush2.msra.mxu0 0.0
    %2769 = vmatprep.subr.mxu0 0.0
    %2770 = vmatpush2.msra.mxu0 0.0
    %2771 = vmatprep.subr.mxu0 0.0
    %2772 = vmatpush2.msra.mxu0 0.0
    %2773 = vmatprep.subr.mxu0 0.0
    %2774 = vmatpush2.msra.mxu0 0.0
    %2775 = vmatprep.subr.mxu0 0.0
    %2776 = vmatpush2.msra.mxu0 0.0
    %2777 = vmatprep.subr.mxu0 0.0
    %2778 = vmatpush2.msra.mxu0 0.0
    %2779 = vmatprep.subr.mxu0 0.0
    %2780 = vmatpush2.msra.mxu0 0.0
    %2781 = vmatprep.subr.mxu0 0.0
    %2782 = vmatpush2.msra.mxu0 0.0
    %2783 = vmatprep.subr.mxu0 0.0
    %2784 = vmatpush2.msra.mxu0 0.0
    %2785 = vmatprep.subr.mxu0 0.0
    %2786 = vmatpush2.msra.mxu0 0.0
    %2787 = vmatprep.subr.mxu0 0.0
    %2788 = vmatpush2.msra.mxu0 0.0
    %2789 = vmatprep.mubr.f32.mxu0 0.0
    %2790 = vmatmul.mubr.f32.gmra.mxu0 %v2702
    %v2791 = vpop.f32.mrf.mxu0
    %v2792 = vadd.f32 %v2724, %v2791
    %v2793 = vpop.f32.mrf.mxu0
    %2794 = vdwg.mxu0
    %v2795 = vld [vmem:[#allocation5 + $0x17] sm:$0x1]
    %v2796 = vlaneseq
    %v2797 = vshrl.u32 %v2796, 7
    %v2798 = vsub.s32 0, %v2797
    %v2799 = vrot.slane %v2795, %v2798
    %v2800 = vmul.f32 %v2792, %v2799
    %v2801 = vsel %vm139, %v2800, 0.0
    %2802 = vadd.xlane.f32.xlu0 %v2801
    %v2803 = vpop.xlane.xlu0 %2802
    %v2804 = vld [vmem:[#allocation5 + $0x18] sm:$0x1]
    %v2805 = vlaneseq
    %v2806 = vshrl.u32 %v2805, 7
    %v2807 = vsub.s32 0, %v2806
    %v2808 = vrot.slane %v2804, %v2807
    %v2809 = vadd.f32 %v2803, %v2808
    %v2810 = vxor.u32 %v2809, 2147483648
    %v2811 = vmul.f32 %v2810, 1.442695
    %v2812 = vpow.pop %v2811
    %v2813 = vadd.f32 %v2812, 1.0
    %v2814 = vrcp.pop %v2813
    %v2815 = vmul.f32 1.0, %v2814
    %v2816 = vsel %vm139, %v2815, 0.0
    %2817 = vadd.xlane.f32.xlu0 %v2816
    %v2818 = vpop.xlane.xlu0 %2817
    %v2819 = vrot.slane %v2818, 4
    %v2820 = vadd.f32 %v2818, %v2819
    %v2821 = vrot.slane %v2820, 2
    %v2822 = vadd.f32 %v2820, %v2821
    %v2823 = vrot.slane %v2822, 1
    %v2824 = vadd.f32 %v2822, %v2823
    %s2825 = vtos %v2824
    %v2826 = vstv %s2825
    %v2827 = vmul.f32 %v2826, 0.00390625
    %v2828 = vadd.f32 %v2576, %v1551
    %v2829 = vmax.f32 %v2828, 0.0
    %s2830 = scalar_lea.vmem [#allocation2], 4992
    %v2831 = vld [vmem:[%s2830] sm:$0xff]
    %v2832 = vld [vmem:[%s2830 + $0x8] sm:$0xff]
    %v2833 = vld [vmem:[%s2830 + $0x10] sm:$0xff]
    %v2834 = vld [vmem:[%s2830 + $0x18] sm:$0xff]
    %v2835 = vld [vmem:[%s2830 + $0x20] sm:$0xff]
    %v2836 = vld [vmem:[%s2830 + $0x28] sm:$0xff]
    %v2837 = vld [vmem:[%s2830 + $0x30] sm:$0xff]
    %v2838 = vld [vmem:[%s2830 + $0x38] sm:$0xff]
    %v2839 = vld [vmem:[%s2830 + $0x40] sm:$0xff]
    %v2840 = vld [vmem:[%s2830 + $0x48] sm:$0xff]
    %v2841 = vld [vmem:[%s2830 + $0x50] sm:$0xff]
    %v2842 = vld [vmem:[%s2830 + $0x58] sm:$0xff]
    %v2843 = vld [vmem:[%s2830 + $0x60] sm:$0xff]
    %v2844 = vld [vmem:[%s2830 + $0x68] sm:$0xff]
    %v2845 = vld [vmem:[%s2830 + $0x70] sm:$0xff]
    %v2846 = vld [vmem:[%s2830 + $0x78] sm:$0xff]
    %2847 = vmatprep.subr.mxu0 0.0
    %2848 = vmatpush1.msra.mxu0 %v2846
    %2849 = vmatprep.subr.mxu0 0.0
    %2850 = vmatpush1.msra.mxu0 %v2845
    %2851 = vmatprep.subr.mxu0 0.0
    %2852 = vmatpush1.msra.mxu0 %v2844
    %2853 = vmatprep.subr.mxu0 0.0
    %2854 = vmatpush1.msra.mxu0 %v2843
    %2855 = vmatprep.subr.mxu0 0.0
    %2856 = vmatpush1.msra.mxu0 %v2842
    %2857 = vmatprep.subr.mxu0 0.0
    %2858 = vmatpush1.msra.mxu0 %v2841
    %2859 = vmatprep.subr.mxu0 0.0
    %2860 = vmatpush1.msra.mxu0 %v2840
    %2861 = vmatprep.subr.mxu0 0.0
    %2862 = vmatpush1.msra.mxu0 %v2839
    %2863 = vmatprep.subr.mxu0 0.0
    %2864 = vmatpush1.msra.mxu0 %v2838
    %2865 = vmatprep.subr.mxu0 0.0
    %2866 = vmatpush1.msra.mxu0 %v2837
    %2867 = vmatprep.subr.mxu0 0.0
    %2868 = vmatpush1.msra.mxu0 %v2836
    %2869 = vmatprep.subr.mxu0 0.0
    %2870 = vmatpush1.msra.mxu0 %v2835
    %2871 = vmatprep.subr.mxu0 0.0
    %2872 = vmatpush1.msra.mxu0 %v2834
    %2873 = vmatprep.subr.mxu0 0.0
    %2874 = vmatpush1.msra.mxu0 %v2833
    %2875 = vmatprep.subr.mxu0 0.0
    %2876 = vmatpush1.msra.mxu0 %v2832
    %2877 = vmatprep.subr.mxu0 0.0
    %2878 = vmatpush1.msra.mxu0 %v2831
    %2879 = vmatprep.subr.mxu0 0.0
    %2880 = vmatpush2.msra.mxu0 0.0
    %2881 = vmatprep.subr.mxu0 0.0
    %2882 = vmatpush2.msra.mxu0 0.0
    %2883 = vmatprep.subr.mxu0 0.0
    %2884 = vmatpush2.msra.mxu0 0.0
    %2885 = vmatprep.subr.mxu0 0.0
    %2886 = vmatpush2.msra.mxu0 0.0
    %2887 = vmatprep.subr.mxu0 0.0
    %2888 = vmatpush2.msra.mxu0 0.0
    %2889 = vmatprep.subr.mxu0 0.0
    %2890 = vmatpush2.msra.mxu0 0.0
    %2891 = vmatprep.subr.mxu0 0.0
    %2892 = vmatpush2.msra.mxu0 0.0
    %2893 = vmatprep.subr.mxu0 0.0
    %2894 = vmatpush2.msra.mxu0 0.0
    %2895 = vmatprep.subr.mxu0 0.0
    %2896 = vmatpush2.msra.mxu0 0.0
    %2897 = vmatprep.subr.mxu0 0.0
    %2898 = vmatpush2.msra.mxu0 0.0
    %2899 = vmatprep.subr.mxu0 0.0
    %2900 = vmatpush2.msra.mxu0 0.0
    %2901 = vmatprep.subr.mxu0 0.0
    %2902 = vmatpush2.msra.mxu0 0.0
    %2903 = vmatprep.subr.mxu0 0.0
    %2904 = vmatpush2.msra.mxu0 0.0
    %2905 = vmatprep.subr.mxu0 0.0
    %2906 = vmatpush2.msra.mxu0 0.0
    %2907 = vmatprep.subr.mxu0 0.0
    %2908 = vmatpush2.msra.mxu0 0.0
    %2909 = vmatprep.subr.mxu0 0.0
    %2910 = vmatpush2.msra.mxu0 0.0
    %2911 = vmatprep.mubr.f32.mxu0 0.0
    %2912 = vmatmul.mubr.f32.gmra.mxu0 %v2829
    %v2913 = vpop.f32.mrf.mxu0
    %v2914 = vadd.f32 0.0, %v2913
    %v2915 = vpop.f32.mrf.mxu0
    %2916 = vdwg.mxu0
    %v2917 = vsel %vm139, %v2914, 0.0
    %v2918 = vrot.slane %v2917, 4
    %v2919 = vadd.f32 %v2917, %v2918
    %v2920 = vrot.slane %v2919, 2
    %v2921 = vadd.f32 %v2919, %v2920
    %v2922 = vrot.slane %v2921, 1
    %v2923 = vadd.f32 %v2921, %v2922
    %v2924 = vmul.f32 %v2923, %v147
    %v2925 = vsub.f32 %v2914, %v2924
    %v2926 = vmul.f32 %v2925, %v2925
    %v2927 = vsel %vm139, %v2926, 0.0
    %v2928 = vrot.slane %v2927, 4
    %v2929 = vadd.f32 %v2927, %v2928
    %v2930 = vrot.slane %v2929, 2
    %v2931 = vadd.f32 %v2929, %v2930
    %v2932 = vrot.slane %v2931, 1
    %v2933 = vadd.f32 %v2931, %v2932
    %v2934 = vmul.f32 %v2933, %v147
    %v2935 = vadd.f32 %v2934, 1e-05
    %v2936 = vrsqrt.pop %v2935
    %v2937 = vmul.f32 %v2925, %v2936
    %s2938 = scalar_lea.vmem [#allocation2], 3456
    %v2939 = vld [vmem:[%s2938] sm:$0xff]
    %v2940 = vld [vmem:[%s2938 + $0x8] sm:$0xff]
    %v2941 = vld [vmem:[%s2938 + $0x10] sm:$0xff]
    %v2942 = vld [vmem:[%s2938 + $0x18] sm:$0xff]
    %v2943 = vld [vmem:[%s2938 + $0x20] sm:$0xff]
    %v2944 = vld [vmem:[%s2938 + $0x28] sm:$0xff]
    %v2945 = vld [vmem:[%s2938 + $0x30] sm:$0xff]
    %v2946 = vld [vmem:[%s2938 + $0x38] sm:$0xff]
    %v2947 = vld [vmem:[%s2938 + $0x40] sm:$0xff]
    %v2948 = vld [vmem:[%s2938 + $0x48] sm:$0xff]
    %v2949 = vld [vmem:[%s2938 + $0x50] sm:$0xff]
    %v2950 = vld [vmem:[%s2938 + $0x58] sm:$0xff]
    %v2951 = vld [vmem:[%s2938 + $0x60] sm:$0xff]
    %v2952 = vld [vmem:[%s2938 + $0x68] sm:$0xff]
    %v2953 = vld [vmem:[%s2938 + $0x70] sm:$0xff]
    %v2954 = vld [vmem:[%s2938 + $0x78] sm:$0xff]
    %v2955 = vld [vmem:[#allocation5 + $0x19] sm:$0x1]
    %v2956 = vlaneseq
    %v2957 = vshrl.u32 %v2956, 7
    %v2958 = vsub.s32 0, %v2957
    %v2959 = vrot.slane %v2955, %v2958
    %2960 = vmatprep.subr.mxu0 0.0
    %2961 = vmatpush1.msra.mxu0 %v2954
    %2962 = vmatprep.subr.mxu0 0.0
    %2963 = vmatpush1.msra.mxu0 %v2953
    %2964 = vmatprep.subr.mxu0 0.0
    %2965 = vmatpush1.msra.mxu0 %v2952
    %2966 = vmatprep.subr.mxu0 0.0
    %2967 = vmatpush1.msra.mxu0 %v2951
    %2968 = vmatprep.subr.mxu0 0.0
    %2969 = vmatpush1.msra.mxu0 %v2950
    %2970 = vmatprep.subr.mxu0 0.0
    %2971 = vmatpush1.msra.mxu0 %v2949
    %2972 = vmatprep.subr.mxu0 0.0
    %2973 = vmatpush1.msra.mxu0 %v2948
    %2974 = vmatprep.subr.mxu0 0.0
    %2975 = vmatpush1.msra.mxu0 %v2947
    %2976 = vmatprep.subr.mxu0 0.0
    %2977 = vmatpush1.msra.mxu0 %v2946
    %2978 = vmatprep.subr.mxu0 0.0
    %2979 = vmatpush1.msra.mxu0 %v2945
    %2980 = vmatprep.subr.mxu0 0.0
    %2981 = vmatpush1.msra.mxu0 %v2944
    %2982 = vmatprep.subr.mxu0 0.0
    %2983 = vmatpush1.msra.mxu0 %v2943
    %2984 = vmatprep.subr.mxu0 0.0
    %2985 = vmatpush1.msra.mxu0 %v2942
    %2986 = vmatprep.subr.mxu0 0.0
    %2987 = vmatpush1.msra.mxu0 %v2941
    %2988 = vmatprep.subr.mxu0 0.0
    %2989 = vmatpush1.msra.mxu0 %v2940
    %2990 = vmatprep.subr.mxu0 0.0
    %2991 = vmatpush1.msra.mxu0 %v2939
    %2992 = vmatprep.subr.mxu0 0.0
    %2993 = vmatpush2.msra.mxu0 0.0
    %2994 = vmatprep.subr.mxu0 0.0
    %2995 = vmatpush2.msra.mxu0 0.0
    %2996 = vmatprep.subr.mxu0 0.0
    %2997 = vmatpush2.msra.mxu0 0.0
    %2998 = vmatprep.subr.mxu0 0.0
    %2999 = vmatpush2.msra.mxu0 0.0
    %3000 = vmatprep.subr.mxu0 0.0
    %3001 = vmatpush2.msra.mxu0 0.0
    %3002 = vmatprep.subr.mxu0 0.0
    %3003 = vmatpush2.msra.mxu0 0.0
    %3004 = vmatprep.subr.mxu0 0.0
    %3005 = vmatpush2.msra.mxu0 0.0
    %3006 = vmatprep.subr.mxu0 0.0
    %3007 = vmatpush2.msra.mxu0 0.0
    %3008 = vmatprep.subr.mxu0 0.0
    %3009 = vmatpush2.msra.mxu0 0.0
    %3010 = vmatprep.subr.mxu0 0.0
    %3011 = vmatpush2.msra.mxu0 0.0
    %3012 = vmatprep.subr.mxu0 0.0
    %3013 = vmatpush2.msra.mxu0 0.0
    %3014 = vmatprep.subr.mxu0 0.0
    %3015 = vmatpush2.msra.mxu0 0.0
    %3016 = vmatprep.subr.mxu0 0.0
    %3017 = vmatpush2.msra.mxu0 0.0
    %3018 = vmatprep.subr.mxu0 0.0
    %3019 = vmatpush2.msra.mxu0 0.0
    %3020 = vmatprep.subr.mxu0 0.0
    %3021 = vmatpush2.msra.mxu0 0.0
    %3022 = vmatprep.subr.mxu0 0.0
    %3023 = vmatpush2.msra.mxu0 0.0
    %3024 = vmatprep.mubr.f32.mxu0 0.0
    %3025 = vmatmul.mubr.f32.gmra.mxu0 %v2829
    %v3026 = vpop.f32.mrf.mxu0
    %v3027 = vadd.f32 %v2959, %v3026
    %v3028 = vpop.f32.mrf.mxu0
    %3029 = vdwg.mxu0
    %v3030 = vsel %vm139, %v3027, 0.0
    %v3031 = vrot.slane %v3030, 4
    %v3032 = vadd.f32 %v3030, %v3031
    %v3033 = vrot.slane %v3032, 2
    %v3034 = vadd.f32 %v3032, %v3033
    %v3035 = vrot.slane %v3034, 1
    %v3036 = vadd.f32 %v3034, %v3035
    %v3037 = vmul.f32 %v3036, %v147
    %v3038 = vsub.f32 %v3027, %v3037
    %v3039 = vmul.f32 %v3038, %v3038
    %v3040 = vsel %vm139, %v3039, 0.0
    %v3041 = vrot.slane %v3040, 4
    %v3042 = vadd.f32 %v3040, %v3041
    %v3043 = vrot.slane %v3042, 2
    %v3044 = vadd.f32 %v3042, %v3043
    %v3045 = vrot.slane %v3044, 1
    %v3046 = vadd.f32 %v3044, %v3045
    %v3047 = vmul.f32 %v3046, %v147
    %v3048 = vadd.f32 %v3047, 1e-05
    %v3049 = vrsqrt.pop %v3048
    %v3050 = vmul.f32 %v3038, %v3049
    %v3051 = vmax.f32 %v3050, 0.0
    %s3052 = scalar_lea.vmem [#allocation2], 3584
    %v3053 = vld [vmem:[%s3052] sm:$0xff]
    %v3054 = vld [vmem:[%s3052 + $0x8] sm:$0xff]
    %v3055 = vld [vmem:[%s3052 + $0x10] sm:$0xff]
    %v3056 = vld [vmem:[%s3052 + $0x18] sm:$0xff]
    %v3057 = vld [vmem:[%s3052 + $0x20] sm:$0xff]
    %v3058 = vld [vmem:[%s3052 + $0x28] sm:$0xff]
    %v3059 = vld [vmem:[%s3052 + $0x30] sm:$0xff]
    %v3060 = vld [vmem:[%s3052 + $0x38] sm:$0xff]
    %v3061 = vld [vmem:[%s3052 + $0x40] sm:$0xff]
    %v3062 = vld [vmem:[%s3052 + $0x48] sm:$0xff]
    %v3063 = vld [vmem:[%s3052 + $0x50] sm:$0xff]
    %v3064 = vld [vmem:[%s3052 + $0x58] sm:$0xff]
    %v3065 = vld [vmem:[%s3052 + $0x60] sm:$0xff]
    %v3066 = vld [vmem:[%s3052 + $0x68] sm:$0xff]
    %v3067 = vld [vmem:[%s3052 + $0x70] sm:$0xff]
    %v3068 = vld [vmem:[%s3052 + $0x78] sm:$0xff]
    %v3069 = vld [vmem:[#allocation5 + $0x1a] sm:$0x1]
    %v3070 = vlaneseq
    %v3071 = vshrl.u32 %v3070, 7
    %v3072 = vsub.s32 0, %v3071
    %v3073 = vrot.slane %v3069, %v3072
    %3074 = vmatprep.subr.mxu0 0.0
    %3075 = vmatpush1.msra.mxu0 %v3068
    %3076 = vmatprep.subr.mxu0 0.0
    %3077 = vmatpush1.msra.mxu0 %v3067
    %3078 = vmatprep.subr.mxu0 0.0
    %3079 = vmatpush1.msra.mxu0 %v3066
    %3080 = vmatprep.subr.mxu0 0.0
    %3081 = vmatpush1.msra.mxu0 %v3065
    %3082 = vmatprep.subr.mxu0 0.0
    %3083 = vmatpush1.msra.mxu0 %v3064
    %3084 = vmatprep.subr.mxu0 0.0
    %3085 = vmatpush1.msra.mxu0 %v3063
    %3086 = vmatprep.subr.mxu0 0.0
    %3087 = vmatpush1.msra.mxu0 %v3062
    %3088 = vmatprep.subr.mxu0 0.0
    %3089 = vmatpush1.msra.mxu0 %v3061
    %3090 = vmatprep.subr.mxu0 0.0
    %3091 = vmatpush1.msra.mxu0 %v3060
    %3092 = vmatprep.subr.mxu0 0.0
    %3093 = vmatpush1.msra.mxu0 %v3059
    %3094 = vmatprep.subr.mxu0 0.0
    %3095 = vmatpush1.msra.mxu0 %v3058
    %3096 = vmatprep.subr.mxu0 0.0
    %3097 = vmatpush1.msra.mxu0 %v3057
    %3098 = vmatprep.subr.mxu0 0.0
    %3099 = vmatpush1.msra.mxu0 %v3056
    %3100 = vmatprep.subr.mxu0 0.0
    %3101 = vmatpush1.msra.mxu0 %v3055
    %3102 = vmatprep.subr.mxu0 0.0
    %3103 = vmatpush1.msra.mxu0 %v3054
    %3104 = vmatprep.subr.mxu0 0.0
    %3105 = vmatpush1.msra.mxu0 %v3053
    %3106 = vmatprep.subr.mxu0 0.0
    %3107 = vmatpush2.msra.mxu0 0.0
    %3108 = vmatprep.subr.mxu0 0.0
    %3109 = vmatpush2.msra.mxu0 0.0
    %3110 = vmatprep.subr.mxu0 0.0
    %3111 = vmatpush2.msra.mxu0 0.0
    %3112 = vmatprep.subr.mxu0 0.0
    %3113 = vmatpush2.msra.mxu0 0.0
    %3114 = vmatprep.subr.mxu0 0.0
    %3115 = vmatpush2.msra.mxu0 0.0
    %3116 = vmatprep.subr.mxu0 0.0
    %3117 = vmatpush2.msra.mxu0 0.0
    %3118 = vmatprep.subr.mxu0 0.0
    %3119 = vmatpush2.msra.mxu0 0.0
    %3120 = vmatprep.subr.mxu0 0.0
    %3121 = vmatpush2.msra.mxu0 0.0
    %3122 = vmatprep.subr.mxu0 0.0
    %3123 = vmatpush2.msra.mxu0 0.0
    %3124 = vmatprep.subr.mxu0 0.0
    %3125 = vmatpush2.msra.mxu0 0.0
    %3126 = vmatprep.subr.mxu0 0.0
    %3127 = vmatpush2.msra.mxu0 0.0
    %3128 = vmatprep.subr.mxu0 0.0
    %3129 = vmatpush2.msra.mxu0 0.0
    %3130 = vmatprep.subr.mxu0 0.0
    %3131 = vmatpush2.msra.mxu0 0.0
    %3132 = vmatprep.subr.mxu0 0.0
    %3133 = vmatpush2.msra.mxu0 0.0
    %3134 = vmatprep.subr.mxu0 0.0
    %3135 = vmatpush2.msra.mxu0 0.0
    %3136 = vmatprep.subr.mxu0 0.0
    %3137 = vmatpush2.msra.mxu0 0.0
    %3138 = vmatprep.mubr.f32.mxu0 0.0
    %3139 = vmatmul.mubr.f32.gmra.mxu0 %v3051
    %v3140 = vpop.f32.mrf.mxu0
    %v3141 = vadd.f32 %v3073, %v3140
    %v3142 = vpop.f32.mrf.mxu0
    %3143 = vdwg.mxu0
    %v3144 = vsel %vm139, %v3141, 0.0
    %v3145 = vrot.slane %v3144, 4
    %v3146 = vadd.f32 %v3144, %v3145
    %v3147 = vrot.slane %v3146, 2
    %v3148 = vadd.f32 %v3146, %v3147
    %v3149 = vrot.slane %v3148, 1
    %v3150 = vadd.f32 %v3148, %v3149
    %v3151 = vmul.f32 %v3150, %v147
    %v3152 = vsub.f32 %v3141, %v3151
    %v3153 = vmul.f32 %v3152, %v3152
    %v3154 = vsel %vm139, %v3153, 0.0
    %v3155 = vrot.slane %v3154, 4
    %v3156 = vadd.f32 %v3154, %v3155
    %v3157 = vrot.slane %v3156, 2
    %v3158 = vadd.f32 %v3156, %v3157
    %v3159 = vrot.slane %v3158, 1
    %v3160 = vadd.f32 %v3158, %v3159
    %v3161 = vmul.f32 %v3160, %v147
    %v3162 = vadd.f32 %v3161, 1e-05
    %v3163 = vrsqrt.pop %v3162
    %v3164 = vmul.f32 %v3152, %v3163
    %s3165 = scalar_lea.vmem [#allocation2], 3712
    %v3166 = vld [vmem:[%s3165] sm:$0xff]
    %v3167 = vld [vmem:[%s3165 + $0x8] sm:$0xff]
    %v3168 = vld [vmem:[%s3165 + $0x10] sm:$0xff]
    %v3169 = vld [vmem:[%s3165 + $0x18] sm:$0xff]
    %v3170 = vld [vmem:[%s3165 + $0x20] sm:$0xff]
    %v3171 = vld [vmem:[%s3165 + $0x28] sm:$0xff]
    %v3172 = vld [vmem:[%s3165 + $0x30] sm:$0xff]
    %v3173 = vld [vmem:[%s3165 + $0x38] sm:$0xff]
    %v3174 = vld [vmem:[%s3165 + $0x40] sm:$0xff]
    %v3175 = vld [vmem:[%s3165 + $0x48] sm:$0xff]
    %v3176 = vld [vmem:[%s3165 + $0x50] sm:$0xff]
    %v3177 = vld [vmem:[%s3165 + $0x58] sm:$0xff]
    %v3178 = vld [vmem:[%s3165 + $0x60] sm:$0xff]
    %v3179 = vld [vmem:[%s3165 + $0x68] sm:$0xff]
    %v3180 = vld [vmem:[%s3165 + $0x70] sm:$0xff]
    %v3181 = vld [vmem:[%s3165 + $0x78] sm:$0xff]
    %3182 = vmatprep.subr.mxu0 0.0
    %3183 = vmatpush1.msra.mxu0 %v3181
    %3184 = vmatprep.subr.mxu0 0.0
    %3185 = vmatpush1.msra.mxu0 %v3180
    %3186 = vmatprep.subr.mxu0 0.0
    %3187 = vmatpush1.msra.mxu0 %v3179
    %3188 = vmatprep.subr.mxu0 0.0
    %3189 = vmatpush1.msra.mxu0 %v3178
    %3190 = vmatprep.subr.mxu0 0.0
    %3191 = vmatpush1.msra.mxu0 %v3177
    %3192 = vmatprep.subr.mxu0 0.0
    %3193 = vmatpush1.msra.mxu0 %v3176
    %3194 = vmatprep.subr.mxu0 0.0
    %3195 = vmatpush1.msra.mxu0 %v3175
    %3196 = vmatprep.subr.mxu0 0.0
    %3197 = vmatpush1.msra.mxu0 %v3174
    %3198 = vmatprep.subr.mxu0 0.0
    %3199 = vmatpush1.msra.mxu0 %v3173
    %3200 = vmatprep.subr.mxu0 0.0
    %3201 = vmatpush1.msra.mxu0 %v3172
    %3202 = vmatprep.subr.mxu0 0.0
    %3203 = vmatpush1.msra.mxu0 %v3171
    %3204 = vmatprep.subr.mxu0 0.0
    %3205 = vmatpush1.msra.mxu0 %v3170
    %3206 = vmatprep.subr.mxu0 0.0
    %3207 = vmatpush1.msra.mxu0 %v3169
    %3208 = vmatprep.subr.mxu0 0.0
    %3209 = vmatpush1.msra.mxu0 %v3168
    %3210 = vmatprep.subr.mxu0 0.0
    %3211 = vmatpush1.msra.mxu0 %v3167
    %3212 = vmatprep.subr.mxu0 0.0
    %3213 = vmatpush1.msra.mxu0 %v3166
    %3214 = vmatprep.subr.mxu0 0.0
    %3215 = vmatpush2.msra.mxu0 0.0
    %3216 = vmatprep.subr.mxu0 0.0
    %3217 = vmatpush2.msra.mxu0 0.0
    %3218 = vmatprep.subr.mxu0 0.0
    %3219 = vmatpush2.msra.mxu0 0.0
    %3220 = vmatprep.subr.mxu0 0.0
    %3221 = vmatpush2.msra.mxu0 0.0
    %3222 = vmatprep.subr.mxu0 0.0
    %3223 = vmatpush2.msra.mxu0 0.0
    %3224 = vmatprep.subr.mxu0 0.0
    %3225 = vmatpush2.msra.mxu0 0.0
    %3226 = vmatprep.subr.mxu0 0.0
    %3227 = vmatpush2.msra.mxu0 0.0
    %3228 = vmatprep.subr.mxu0 0.0
    %3229 = vmatpush2.msra.mxu0 0.0
    %3230 = vmatprep.subr.mxu0 0.0
    %3231 = vmatpush2.msra.mxu0 0.0
    %3232 = vmatprep.subr.mxu0 0.0
    %3233 = vmatpush2.msra.mxu0 0.0
    %3234 = vmatprep.subr.mxu0 0.0
    %3235 = vmatpush2.msra.mxu0 0.0
    %3236 = vmatprep.subr.mxu0 0.0
    %3237 = vmatpush2.msra.mxu0 0.0
    %3238 = vmatprep.subr.mxu0 0.0
    %3239 = vmatpush2.msra.mxu0 0.0
    %3240 = vmatprep.subr.mxu0 0.0
    %3241 = vmatpush2.msra.mxu0 0.0
    %3242 = vmatprep.subr.mxu0 0.0
    %3243 = vmatpush2.msra.mxu0 0.0
    %3244 = vmatprep.subr.mxu0 0.0
    %3245 = vmatpush2.msra.mxu0 0.0
    %3246 = vmatprep.mubr.f32.mxu0 0.0
    %3247 = vmatmul.mubr.f32.gmra.mxu0 %v3164
    %v3248 = vpop.f32.mrf.mxu0
    %v3249 = vadd.f32 0.0, %v3248
    %v3250 = vpop.f32.mrf.mxu0
    %3251 = vdwg.mxu0
    %v3252 = vmax.f32 %v3249, 0.0
    %s3253 = scalar_lea.vmem [#allocation2], 3840
    %v3254 = vld [vmem:[%s3253] sm:$0xff]
    %v3255 = vld [vmem:[%s3253 + $0x8] sm:$0xff]
    %v3256 = vld [vmem:[%s3253 + $0x10] sm:$0xff]
    %v3257 = vld [vmem:[%s3253 + $0x18] sm:$0xff]
    %v3258 = vld [vmem:[%s3253 + $0x20] sm:$0xff]
    %v3259 = vld [vmem:[%s3253 + $0x28] sm:$0xff]
    %v3260 = vld [vmem:[%s3253 + $0x30] sm:$0xff]
    %v3261 = vld [vmem:[%s3253 + $0x38] sm:$0xff]
    %v3262 = vld [vmem:[%s3253 + $0x40] sm:$0xff]
    %v3263 = vld [vmem:[%s3253 + $0x48] sm:$0xff]
    %v3264 = vld [vmem:[%s3253 + $0x50] sm:$0xff]
    %v3265 = vld [vmem:[%s3253 + $0x58] sm:$0xff]
    %v3266 = vld [vmem:[%s3253 + $0x60] sm:$0xff]
    %v3267 = vld [vmem:[%s3253 + $0x68] sm:$0xff]
    %v3268 = vld [vmem:[%s3253 + $0x70] sm:$0xff]
    %v3269 = vld [vmem:[%s3253 + $0x78] sm:$0xff]
    %3270 = vmatprep.subr.mxu0 0.0
    %3271 = vmatpush1.msra.mxu0 %v3269
    %3272 = vmatprep.subr.mxu0 0.0
    %3273 = vmatpush1.msra.mxu0 %v3268
    %3274 = vmatprep.subr.mxu0 0.0
    %3275 = vmatpush1.msra.mxu0 %v3267
    %3276 = vmatprep.subr.mxu0 0.0
    %3277 = vmatpush1.msra.mxu0 %v3266
    %3278 = vmatprep.subr.mxu0 0.0
    %3279 = vmatpush1.msra.mxu0 %v3265
    %3280 = vmatprep.subr.mxu0 0.0
    %3281 = vmatpush1.msra.mxu0 %v3264
    %3282 = vmatprep.subr.mxu0 0.0
    %3283 = vmatpush1.msra.mxu0 %v3263
    %3284 = vmatprep.subr.mxu0 0.0
    %3285 = vmatpush1.msra.mxu0 %v3262
    %3286 = vmatprep.subr.mxu0 0.0
    %3287 = vmatpush1.msra.mxu0 %v3261
    %3288 = vmatprep.subr.mxu0 0.0
    %3289 = vmatpush1.msra.mxu0 %v3260
    %3290 = vmatprep.subr.mxu0 0.0
    %3291 = vmatpush1.msra.mxu0 %v3259
    %3292 = vmatprep.subr.mxu0 0.0
    %3293 = vmatpush1.msra.mxu0 %v3258
    %3294 = vmatprep.subr.mxu0 0.0
    %3295 = vmatpush1.msra.mxu0 %v3257
    %3296 = vmatprep.subr.mxu0 0.0
    %3297 = vmatpush1.msra.mxu0 %v3256
    %3298 = vmatprep.subr.mxu0 0.0
    %3299 = vmatpush1.msra.mxu0 %v3255
    %3300 = vmatprep.subr.mxu0 0.0
    %3301 = vmatpush1.msra.mxu0 %v3254
    %3302 = vmatprep.subr.mxu0 0.0
    %3303 = vmatpush2.msra.mxu0 0.0
    %3304 = vmatprep.subr.mxu0 0.0
    %3305 = vmatpush2.msra.mxu0 0.0
    %3306 = vmatprep.subr.mxu0 0.0
    %3307 = vmatpush2.msra.mxu0 0.0
    %3308 = vmatprep.subr.mxu0 0.0
    %3309 = vmatpush2.msra.mxu0 0.0
    %3310 = vmatprep.subr.mxu0 0.0
    %3311 = vmatpush2.msra.mxu0 0.0
    %3312 = vmatprep.subr.mxu0 0.0
    %3313 = vmatpush2.msra.mxu0 0.0
    %3314 = vmatprep.subr.mxu0 0.0
    %3315 = vmatpush2.msra.mxu0 0.0
    %3316 = vmatprep.subr.mxu0 0.0
    %3317 = vmatpush2.msra.mxu0 0.0
    %3318 = vmatprep.subr.mxu0 0.0
    %3319 = vmatpush2.msra.mxu0 0.0
    %3320 = vmatprep.subr.mxu0 0.0
    %3321 = vmatpush2.msra.mxu0 0.0
    %3322 = vmatprep.subr.mxu0 0.0
    %3323 = vmatpush2.msra.mxu0 0.0
    %3324 = vmatprep.subr.mxu0 0.0
    %3325 = vmatpush2.msra.mxu0 0.0
    %3326 = vmatprep.subr.mxu0 0.0
    %3327 = vmatpush2.msra.mxu0 0.0
    %3328 = vmatprep.subr.mxu0 0.0
    %3329 = vmatpush2.msra.mxu0 0.0
    %3330 = vmatprep.subr.mxu0 0.0
    %3331 = vmatpush2.msra.mxu0 0.0
    %3332 = vmatprep.subr.mxu0 0.0
    %3333 = vmatpush2.msra.mxu0 0.0
    %3334 = vmatprep.mubr.f32.mxu0 0.0
    %3335 = vmatmul.mubr.f32.gmra.mxu0 %v3252
    %v3336 = vpop.f32.mrf.mxu0
    %v3337 = vadd.f32 0.0, %v3336
    %v3338 = vpop.f32.mrf.mxu0
    %3339 = vdwg.mxu0
    %v3340 = vmul.f32 %v3337, 2.0
    %v3341 = vxor.u32 %v3340, 2147483648
    %v3342 = vmul.f32 %v3341, 1.442695
    %v3343 = vpow.pop %v3342
    %v3344 = vadd.f32 %v3343, 1.0
    %v3345 = vrcp.pop %v3344
    %v3346 = vmul.f32 1.0, %v3345
    %v3347 = vmul.f32 %v3164, %v3346
    %v3348 = vsel %vm139, %v3347, 0.0
    %3349 = vadd.xlane.f32.xlu0 %v3348
    %v3350 = vpop.xlane.xlu0 %3349
    %v3351 = vmul.f32 %v3350, 0.015625
    %v3352 = vsel %vm885, %v3347, -1e+30
    %v3353 = vsel %vm139, %v3352, -inf
    %3354 = vmax.xlane.f32.xlu0 %v3353
    %v3355 = vpop.xlane.xlu0 %3354
    %v3356 = vld [vmem:[#allocation5 + $0x20] sm:$0x1]
    %v3357 = vlaneseq
    %v3358 = vshrl.u32 %v3357, 7
    %v3359 = vsub.s32 0, %v3358
    %v3360 = vrot.slane %v3356, %v3359
    %v3361 = vmul.f32 %v3351, %v3360
    %v3362 = vld [vmem:[#allocation5 + $0x21] sm:$0x1]
    %v3363 = vlaneseq
    %v3364 = vshrl.u32 %v3363, 7
    %v3365 = vsub.s32 0, %v3364
    %v3366 = vrot.slane %v3362, %v3365
    %v3367 = vmul.f32 %v3355, %v3366
    %v3368 = vadd.f32 %v3361, %v3367
    %v3369 = vld [vmem:[#allocation5 + $0x22] sm:$0x1]
    %v3370 = vlaneseq
    %v3371 = vshrl.u32 %v3370, 7
    %v3372 = vsub.s32 0, %v3371
    %v3373 = vrot.slane %v3369, %v3372
    %v3374 = vadd.f32 %v3368, %v3373
    %v3375 = vxor.u32 %v3374, 2147483648
    %v3376 = vmul.f32 %v3375, 1.442695
    %v3377 = vpow.pop %v3376
    %v3378 = vadd.f32 %v3377, 1.0
    %v3379 = vrcp.pop %v3378
    %v3380 = vmul.f32 1.0, %v3379
    %v3381 = vmul.f32 %v3347, %v3380
    %s3382 = scalar_lea.vmem [#allocation2], 4224
    %v3383 = vld [vmem:[%s3382] sm:$0xff]
    %v3384 = vld [vmem:[%s3382 + $0x8] sm:$0xff]
    %v3385 = vld [vmem:[%s3382 + $0x10] sm:$0xff]
    %v3386 = vld [vmem:[%s3382 + $0x18] sm:$0xff]
    %v3387 = vld [vmem:[%s3382 + $0x20] sm:$0xff]
    %v3388 = vld [vmem:[%s3382 + $0x28] sm:$0xff]
    %v3389 = vld [vmem:[%s3382 + $0x30] sm:$0xff]
    %v3390 = vld [vmem:[%s3382 + $0x38] sm:$0xff]
    %v3391 = vld [vmem:[%s3382 + $0x40] sm:$0xff]
    %v3392 = vld [vmem:[%s3382 + $0x48] sm:$0xff]
    %v3393 = vld [vmem:[%s3382 + $0x50] sm:$0xff]
    %v3394 = vld [vmem:[%s3382 + $0x58] sm:$0xff]
    %v3395 = vld [vmem:[%s3382 + $0x60] sm:$0xff]
    %v3396 = vld [vmem:[%s3382 + $0x68] sm:$0xff]
    %v3397 = vld [vmem:[%s3382 + $0x70] sm:$0xff]
    %v3398 = vld [vmem:[%s3382 + $0x78] sm:$0xff]
    %v3399 = vld [vmem:[#allocation5 + $0x1b] sm:$0x1]
    %v3400 = vlaneseq
    %v3401 = vshrl.u32 %v3400, 7
    %v3402 = vsub.s32 0, %v3401
    %v3403 = vrot.slane %v3399, %v3402
    %3404 = vmatprep.subr.mxu0 0.0
    %3405 = vmatpush1.msra.mxu0 %v3398
    %3406 = vmatprep.subr.mxu0 0.0
    %3407 = vmatpush1.msra.mxu0 %v3397
    %3408 = vmatprep.subr.mxu0 0.0
    %3409 = vmatpush1.msra.mxu0 %v3396
    %3410 = vmatprep.subr.mxu0 0.0
    %3411 = vmatpush1.msra.mxu0 %v3395
    %3412 = vmatprep.subr.mxu0 0.0
    %3413 = vmatpush1.msra.mxu0 %v3394
    %3414 = vmatprep.subr.mxu0 0.0
    %3415 = vmatpush1.msra.mxu0 %v3393
    %3416 = vmatprep.subr.mxu0 0.0
    %3417 = vmatpush1.msra.mxu0 %v3392
    %3418 = vmatprep.subr.mxu0 0.0
    %3419 = vmatpush1.msra.mxu0 %v3391
    %3420 = vmatprep.subr.mxu0 0.0
    %3421 = vmatpush1.msra.mxu0 %v3390
    %3422 = vmatprep.subr.mxu0 0.0
    %3423 = vmatpush1.msra.mxu0 %v3389
    %3424 = vmatprep.subr.mxu0 0.0
    %3425 = vmatpush1.msra.mxu0 %v3388
    %3426 = vmatprep.subr.mxu0 0.0
    %3427 = vmatpush1.msra.mxu0 %v3387
    %3428 = vmatprep.subr.mxu0 0.0
    %3429 = vmatpush1.msra.mxu0 %v3386
    %3430 = vmatprep.subr.mxu0 0.0
    %3431 = vmatpush1.msra.mxu0 %v3385
    %3432 = vmatprep.subr.mxu0 0.0
    %3433 = vmatpush1.msra.mxu0 %v3384
    %3434 = vmatprep.subr.mxu0 0.0
    %3435 = vmatpush1.msra.mxu0 %v3383
    %3436 = vmatprep.subr.mxu0 0.0
    %3437 = vmatpush2.msra.mxu0 0.0
    %3438 = vmatprep.subr.mxu0 0.0
    %3439 = vmatpush2.msra.mxu0 0.0
    %3440 = vmatprep.subr.mxu0 0.0
    %3441 = vmatpush2.msra.mxu0 0.0
    %3442 = vmatprep.subr.mxu0 0.0
    %3443 = vmatpush2.msra.mxu0 0.0
    %3444 = vmatprep.subr.mxu0 0.0
    %3445 = vmatpush2.msra.mxu0 0.0
    %3446 = vmatprep.subr.mxu0 0.0
    %3447 = vmatpush2.msra.mxu0 0.0
    %3448 = vmatprep.subr.mxu0 0.0
    %3449 = vmatpush2.msra.mxu0 0.0
    %3450 = vmatprep.subr.mxu0 0.0
    %3451 = vmatpush2.msra.mxu0 0.0
    %3452 = vmatprep.subr.mxu0 0.0
    %3453 = vmatpush2.msra.mxu0 0.0
    %3454 = vmatprep.subr.mxu0 0.0
    %3455 = vmatpush2.msra.mxu0 0.0
    %3456 = vmatprep.subr.mxu0 0.0
    %3457 = vmatpush2.msra.mxu0 0.0
    %3458 = vmatprep.subr.mxu0 0.0
    %3459 = vmatpush2.msra.mxu0 0.0
    %3460 = vmatprep.subr.mxu0 0.0
    %3461 = vmatpush2.msra.mxu0 0.0
    %3462 = vmatprep.subr.mxu0 0.0
    %3463 = vmatpush2.msra.mxu0 0.0
    %3464 = vmatprep.subr.mxu0 0.0
    %3465 = vmatpush2.msra.mxu0 0.0
    %3466 = vmatprep.subr.mxu0 0.0
    %3467 = vmatpush2.msra.mxu0 0.0
    %3468 = vmatprep.mubr.f32.mxu0 0.0
    %3469 = vmatmul.mubr.f32.gmra.mxu0 %v3381
    %v3470 = vpop.f32.mrf.mxu0
    %v3471 = vadd.f32 %v3403, %v3470
    %v3472 = vpop.f32.mrf.mxu0
    %3473 = vdwg.mxu0
    %v3474 = vmax.f32 %v3471, 0.0
    %s3475 = scalar_lea.vmem [#allocation2], 4352
    %v3476 = vld [vmem:[%s3475] sm:$0xff]
    %v3477 = vld [vmem:[%s3475 + $0x8] sm:$0xff]
    %v3478 = vld [vmem:[%s3475 + $0x10] sm:$0xff]
    %v3479 = vld [vmem:[%s3475 + $0x18] sm:$0xff]
    %v3480 = vld [vmem:[%s3475 + $0x20] sm:$0xff]
    %v3481 = vld [vmem:[%s3475 + $0x28] sm:$0xff]
    %v3482 = vld [vmem:[%s3475 + $0x30] sm:$0xff]
    %v3483 = vld [vmem:[%s3475 + $0x38] sm:$0xff]
    %v3484 = vld [vmem:[%s3475 + $0x40] sm:$0xff]
    %v3485 = vld [vmem:[%s3475 + $0x48] sm:$0xff]
    %v3486 = vld [vmem:[%s3475 + $0x50] sm:$0xff]
    %v3487 = vld [vmem:[%s3475 + $0x58] sm:$0xff]
    %v3488 = vld [vmem:[%s3475 + $0x60] sm:$0xff]
    %v3489 = vld [vmem:[%s3475 + $0x68] sm:$0xff]
    %v3490 = vld [vmem:[%s3475 + $0x70] sm:$0xff]
    %v3491 = vld [vmem:[%s3475 + $0x78] sm:$0xff]
    %v3492 = vld [vmem:[#allocation5 + $0x1c] sm:$0x1]
    %v3493 = vlaneseq
    %v3494 = vshrl.u32 %v3493, 7
    %v3495 = vsub.s32 0, %v3494
    %v3496 = vrot.slane %v3492, %v3495
    %3497 = vmatprep.subr.mxu0 0.0
    %3498 = vmatpush1.msra.mxu0 %v3491
    %3499 = vmatprep.subr.mxu0 0.0
    %3500 = vmatpush1.msra.mxu0 %v3490
    %3501 = vmatprep.subr.mxu0 0.0
    %3502 = vmatpush1.msra.mxu0 %v3489
    %3503 = vmatprep.subr.mxu0 0.0
    %3504 = vmatpush1.msra.mxu0 %v3488
    %3505 = vmatprep.subr.mxu0 0.0
    %3506 = vmatpush1.msra.mxu0 %v3487
    %3507 = vmatprep.subr.mxu0 0.0
    %3508 = vmatpush1.msra.mxu0 %v3486
    %3509 = vmatprep.subr.mxu0 0.0
    %3510 = vmatpush1.msra.mxu0 %v3485
    %3511 = vmatprep.subr.mxu0 0.0
    %3512 = vmatpush1.msra.mxu0 %v3484
    %3513 = vmatprep.subr.mxu0 0.0
    %3514 = vmatpush1.msra.mxu0 %v3483
    %3515 = vmatprep.subr.mxu0 0.0
    %3516 = vmatpush1.msra.mxu0 %v3482
    %3517 = vmatprep.subr.mxu0 0.0
    %3518 = vmatpush1.msra.mxu0 %v3481
    %3519 = vmatprep.subr.mxu0 0.0
    %3520 = vmatpush1.msra.mxu0 %v3480
    %3521 = vmatprep.subr.mxu0 0.0
    %3522 = vmatpush1.msra.mxu0 %v3479
    %3523 = vmatprep.subr.mxu0 0.0
    %3524 = vmatpush1.msra.mxu0 %v3478
    %3525 = vmatprep.subr.mxu0 0.0
    %3526 = vmatpush1.msra.mxu0 %v3477
    %3527 = vmatprep.subr.mxu0 0.0
    %3528 = vmatpush1.msra.mxu0 %v3476
    %3529 = vmatprep.subr.mxu0 0.0
    %3530 = vmatpush2.msra.mxu0 0.0
    %3531 = vmatprep.subr.mxu0 0.0
    %3532 = vmatpush2.msra.mxu0 0.0
    %3533 = vmatprep.subr.mxu0 0.0
    %3534 = vmatpush2.msra.mxu0 0.0
    %3535 = vmatprep.subr.mxu0 0.0
    %3536 = vmatpush2.msra.mxu0 0.0
    %3537 = vmatprep.subr.mxu0 0.0
    %3538 = vmatpush2.msra.mxu0 0.0
    %3539 = vmatprep.subr.mxu0 0.0
    %3540 = vmatpush2.msra.mxu0 0.0
    %3541 = vmatprep.subr.mxu0 0.0
    %3542 = vmatpush2.msra.mxu0 0.0
    %3543 = vmatprep.subr.mxu0 0.0
    %3544 = vmatpush2.msra.mxu0 0.0
    %3545 = vmatprep.subr.mxu0 0.0
    %3546 = vmatpush2.msra.mxu0 0.0
    %3547 = vmatprep.subr.mxu0 0.0
    %3548 = vmatpush2.msra.mxu0 0.0
    %3549 = vmatprep.subr.mxu0 0.0
    %3550 = vmatpush2.msra.mxu0 0.0
    %3551 = vmatprep.subr.mxu0 0.0
    %3552 = vmatpush2.msra.mxu0 0.0
    %3553 = vmatprep.subr.mxu0 0.0
    %3554 = vmatpush2.msra.mxu0 0.0
    %3555 = vmatprep.subr.mxu0 0.0
    %3556 = vmatpush2.msra.mxu0 0.0
    %3557 = vmatprep.subr.mxu0 0.0
    %3558 = vmatpush2.msra.mxu0 0.0
    %3559 = vmatprep.subr.mxu0 0.0
    %3560 = vmatpush2.msra.mxu0 0.0
    %3561 = vmatprep.mubr.f32.mxu0 0.0
    %3562 = vmatmul.mubr.f32.gmra.mxu0 %v3474
    %v3563 = vpop.f32.mrf.mxu0
    %v3564 = vadd.f32 %v3496, %v3563
    %v3565 = vpop.f32.mrf.mxu0
    %3566 = vdwg.mxu0
    %s3567 = scalar_lea.vmem [#allocation2], 3968
    %v3568 = vld [vmem:[%s3567] sm:$0xff]
    %v3569 = vld [vmem:[%s3567 + $0x8] sm:$0xff]
    %v3570 = vld [vmem:[%s3567 + $0x10] sm:$0xff]
    %v3571 = vld [vmem:[%s3567 + $0x18] sm:$0xff]
    %v3572 = vld [vmem:[%s3567 + $0x20] sm:$0xff]
    %v3573 = vld [vmem:[%s3567 + $0x28] sm:$0xff]
    %v3574 = vld [vmem:[%s3567 + $0x30] sm:$0xff]
    %v3575 = vld [vmem:[%s3567 + $0x38] sm:$0xff]
    %v3576 = vld [vmem:[%s3567 + $0x40] sm:$0xff]
    %v3577 = vld [vmem:[%s3567 + $0x48] sm:$0xff]
    %v3578 = vld [vmem:[%s3567 + $0x50] sm:$0xff]
    %v3579 = vld [vmem:[%s3567 + $0x58] sm:$0xff]
    %v3580 = vld [vmem:[%s3567 + $0x60] sm:$0xff]
    %v3581 = vld [vmem:[%s3567 + $0x68] sm:$0xff]
    %v3582 = vld [vmem:[%s3567 + $0x70] sm:$0xff]
    %v3583 = vld [vmem:[%s3567 + $0x78] sm:$0xff]
    %3584 = vmatprep.subr.mxu0 0.0
    %3585 = vmatpush1.msra.mxu0 %v3583
    %3586 = vmatprep.subr.mxu0 0.0
    %3587 = vmatpush1.msra.mxu0 %v3582
    %3588 = vmatprep.subr.mxu0 0.0
    %3589 = vmatpush1.msra.mxu0 %v3581
    %3590 = vmatprep.subr.mxu0 0.0
    %3591 = vmatpush1.msra.mxu0 %v3580
    %3592 = vmatprep.subr.mxu0 0.0
    %3593 = vmatpush1.msra.mxu0 %v3579
    %3594 = vmatprep.subr.mxu0 0.0
    %3595 = vmatpush1.msra.mxu0 %v3578
    %3596 = vmatprep.subr.mxu0 0.0
    %3597 = vmatpush1.msra.mxu0 %v3577
    %3598 = vmatprep.subr.mxu0 0.0
    %3599 = vmatpush1.msra.mxu0 %v3576
    %3600 = vmatprep.subr.mxu0 0.0
    %3601 = vmatpush1.msra.mxu0 %v3575
    %3602 = vmatprep.subr.mxu0 0.0
    %3603 = vmatpush1.msra.mxu0 %v3574
    %3604 = vmatprep.subr.mxu0 0.0
    %3605 = vmatpush1.msra.mxu0 %v3573
    %3606 = vmatprep.subr.mxu0 0.0
    %3607 = vmatpush1.msra.mxu0 %v3572
    %3608 = vmatprep.subr.mxu0 0.0
    %3609 = vmatpush1.msra.mxu0 %v3571
    %3610 = vmatprep.subr.mxu0 0.0
    %3611 = vmatpush1.msra.mxu0 %v3570
    %3612 = vmatprep.subr.mxu0 0.0
    %3613 = vmatpush1.msra.mxu0 %v3569
    %3614 = vmatprep.subr.mxu0 0.0
    %3615 = vmatpush1.msra.mxu0 %v3568
    %3616 = vmatprep.subr.mxu0 0.0
    %3617 = vmatpush2.msra.mxu0 0.0
    %3618 = vmatprep.subr.mxu0 0.0
    %3619 = vmatpush2.msra.mxu0 0.0
    %3620 = vmatprep.subr.mxu0 0.0
    %3621 = vmatpush2.msra.mxu0 0.0
    %3622 = vmatprep.subr.mxu0 0.0
    %3623 = vmatpush2.msra.mxu0 0.0
    %3624 = vmatprep.subr.mxu0 0.0
    %3625 = vmatpush2.msra.mxu0 0.0
    %3626 = vmatprep.subr.mxu0 0.0
    %3627 = vmatpush2.msra.mxu0 0.0
    %3628 = vmatprep.subr.mxu0 0.0
    %3629 = vmatpush2.msra.mxu0 0.0
    %3630 = vmatprep.subr.mxu0 0.0
    %3631 = vmatpush2.msra.mxu0 0.0
    %3632 = vmatprep.subr.mxu0 0.0
    %3633 = vmatpush2.msra.mxu0 0.0
    %3634 = vmatprep.subr.mxu0 0.0
    %3635 = vmatpush2.msra.mxu0 0.0
    %3636 = vmatprep.subr.mxu0 0.0
    %3637 = vmatpush2.msra.mxu0 0.0
    %3638 = vmatprep.subr.mxu0 0.0
    %3639 = vmatpush2.msra.mxu0 0.0
    %3640 = vmatprep.subr.mxu0 0.0
    %3641 = vmatpush2.msra.mxu0 0.0
    %3642 = vmatprep.subr.mxu0 0.0
    %3643 = vmatpush2.msra.mxu0 0.0
    %3644 = vmatprep.subr.mxu0 0.0
    %3645 = vmatpush2.msra.mxu0 0.0
    %3646 = vmatprep.subr.mxu0 0.0
    %3647 = vmatpush2.msra.mxu0 0.0
    %3648 = vmatprep.mubr.f32.mxu0 0.0
    %3649 = vmatmul.mubr.f32.gmra.mxu0 %v3564
    %v3650 = vpop.f32.mrf.mxu0
    %v3651 = vadd.f32 0.0, %v3650
    %v3652 = vpop.f32.mrf.mxu0
    %3653 = vdwg.mxu0
    %v3654 = vmul.f32 %v3651, 0.125
    %v3655 = vsel %vm885, %v3654, -1e+30
    %v3656 = vsel %vm139, %v3655, -inf
    %3657 = vmax.xlane.f32.xlu0 %v3656
    %v3658 = vpop.xlane.xlu0 %3657
    %v3659 = vsub.f32 %v3655, %v3658
    %v3660 = vmul.f32 %v3659, 1.442695
    %v3661 = vpow.pop %v3660
    %v3662 = vsel %vm139, %v3661, 0.0
    %3663 = vadd.xlane.f32.xlu0 %v3662
    %v3664 = vpop.xlane.xlu0 %3663
    %v3665 = vrcp.pop %v3664
    %v3666 = vmul.f32 %v3661, %v3665
    %s3667 = scalar_lea.vmem [#allocation2], 4096
    %v3668 = vld [vmem:[%s3667] sm:$0xff]
    %v3669 = vld [vmem:[%s3667 + $0x8] sm:$0xff]
    %v3670 = vld [vmem:[%s3667 + $0x10] sm:$0xff]
    %v3671 = vld [vmem:[%s3667 + $0x18] sm:$0xff]
    %v3672 = vld [vmem:[%s3667 + $0x20] sm:$0xff]
    %v3673 = vld [vmem:[%s3667 + $0x28] sm:$0xff]
    %v3674 = vld [vmem:[%s3667 + $0x30] sm:$0xff]
    %v3675 = vld [vmem:[%s3667 + $0x38] sm:$0xff]
    %v3676 = vld [vmem:[%s3667 + $0x40] sm:$0xff]
    %v3677 = vld [vmem:[%s3667 + $0x48] sm:$0xff]
    %v3678 = vld [vmem:[%s3667 + $0x50] sm:$0xff]
    %v3679 = vld [vmem:[%s3667 + $0x58] sm:$0xff]
    %v3680 = vld [vmem:[%s3667 + $0x60] sm:$0xff]
    %v3681 = vld [vmem:[%s3667 + $0x68] sm:$0xff]
    %v3682 = vld [vmem:[%s3667 + $0x70] sm:$0xff]
    %v3683 = vld [vmem:[%s3667 + $0x78] sm:$0xff]
    %3684 = vmatprep.subr.mxu0 0.0
    %3685 = vmatpush1.msra.mxu0 %v3683
    %3686 = vmatprep.subr.mxu0 0.0
    %3687 = vmatpush1.msra.mxu0 %v3682
    %3688 = vmatprep.subr.mxu0 0.0
    %3689 = vmatpush1.msra.mxu0 %v3681
    %3690 = vmatprep.subr.mxu0 0.0
    %3691 = vmatpush1.msra.mxu0 %v3680
    %3692 = vmatprep.subr.mxu0 0.0
    %3693 = vmatpush1.msra.mxu0 %v3679
    %3694 = vmatprep.subr.mxu0 0.0
    %3695 = vmatpush1.msra.mxu0 %v3678
    %3696 = vmatprep.subr.mxu0 0.0
    %3697 = vmatpush1.msra.mxu0 %v3677
    %3698 = vmatprep.subr.mxu0 0.0
    %3699 = vmatpush1.msra.mxu0 %v3676
    %3700 = vmatprep.subr.mxu0 0.0
    %3701 = vmatpush1.msra.mxu0 %v3675
    %3702 = vmatprep.subr.mxu0 0.0
    %3703 = vmatpush1.msra.mxu0 %v3674
    %3704 = vmatprep.subr.mxu0 0.0
    %3705 = vmatpush1.msra.mxu0 %v3673
    %3706 = vmatprep.subr.mxu0 0.0
    %3707 = vmatpush1.msra.mxu0 %v3672
    %3708 = vmatprep.subr.mxu0 0.0
    %3709 = vmatpush1.msra.mxu0 %v3671
    %3710 = vmatprep.subr.mxu0 0.0
    %3711 = vmatpush1.msra.mxu0 %v3670
    %3712 = vmatprep.subr.mxu0 0.0
    %3713 = vmatpush1.msra.mxu0 %v3669
    %3714 = vmatprep.subr.mxu0 0.0
    %3715 = vmatpush1.msra.mxu0 %v3668
    %3716 = vmatprep.subr.mxu0 0.0
    %3717 = vmatpush2.msra.mxu0 0.0
    %3718 = vmatprep.subr.mxu0 0.0
    %3719 = vmatpush2.msra.mxu0 0.0
    %3720 = vmatprep.subr.mxu0 0.0
    %3721 = vmatpush2.msra.mxu0 0.0
    %3722 = vmatprep.subr.mxu0 0.0
    %3723 = vmatpush2.msra.mxu0 0.0
    %3724 = vmatprep.subr.mxu0 0.0
    %3725 = vmatpush2.msra.mxu0 0.0
    %3726 = vmatprep.subr.mxu0 0.0
    %3727 = vmatpush2.msra.mxu0 0.0
    %3728 = vmatprep.subr.mxu0 0.0
    %3729 = vmatpush2.msra.mxu0 0.0
    %3730 = vmatprep.subr.mxu0 0.0
    %3731 = vmatpush2.msra.mxu0 0.0
    %3732 = vmatprep.subr.mxu0 0.0
    %3733 = vmatpush2.msra.mxu0 0.0
    %3734 = vmatprep.subr.mxu0 0.0
    %3735 = vmatpush2.msra.mxu0 0.0
    %3736 = vmatprep.subr.mxu0 0.0
    %3737 = vmatpush2.msra.mxu0 0.0
    %3738 = vmatprep.subr.mxu0 0.0
    %3739 = vmatpush2.msra.mxu0 0.0
    %3740 = vmatprep.subr.mxu0 0.0
    %3741 = vmatpush2.msra.mxu0 0.0
    %3742 = vmatprep.subr.mxu0 0.0
    %3743 = vmatpush2.msra.mxu0 0.0
    %3744 = vmatprep.subr.mxu0 0.0
    %3745 = vmatpush2.msra.mxu0 0.0
    %3746 = vmatprep.subr.mxu0 0.0
    %3747 = vmatpush2.msra.mxu0 0.0
    %3748 = vmatprep.mubr.f32.mxu0 0.0
    %3749 = vmatmul.mubr.f32.gmra.mxu0 %v3666
    %v3750 = vpop.f32.mrf.mxu0
    %v3751 = vadd.f32 0.0, %v3750
    %v3752 = vpop.f32.mrf.mxu0
    %3753 = vdwg.mxu0
    %s3754 = scalar_lea.vmem [#allocation2], 4480
    %v3755 = vld [vmem:[%s3754] sm:$0xff]
    %v3756 = vld [vmem:[%s3754 + $0x8] sm:$0xff]
    %v3757 = vld [vmem:[%s3754 + $0x10] sm:$0xff]
    %v3758 = vld [vmem:[%s3754 + $0x18] sm:$0xff]
    %v3759 = vld [vmem:[%s3754 + $0x20] sm:$0xff]
    %v3760 = vld [vmem:[%s3754 + $0x28] sm:$0xff]
    %v3761 = vld [vmem:[%s3754 + $0x30] sm:$0xff]
    %v3762 = vld [vmem:[%s3754 + $0x38] sm:$0xff]
    %v3763 = vld [vmem:[%s3754 + $0x40] sm:$0xff]
    %v3764 = vld [vmem:[%s3754 + $0x48] sm:$0xff]
    %v3765 = vld [vmem:[%s3754 + $0x50] sm:$0xff]
    %v3766 = vld [vmem:[%s3754 + $0x58] sm:$0xff]
    %v3767 = vld [vmem:[%s3754 + $0x60] sm:$0xff]
    %v3768 = vld [vmem:[%s3754 + $0x68] sm:$0xff]
    %v3769 = vld [vmem:[%s3754 + $0x70] sm:$0xff]
    %v3770 = vld [vmem:[%s3754 + $0x78] sm:$0xff]
    %s3771 = scalar_lea.vmem [#allocation2], 4608
    %v3772 = vld [vmem:[%s3771] sm:$0xff]
    %v3773 = vld [vmem:[%s3771 + $0x8] sm:$0xff]
    %v3774 = vld [vmem:[%s3771 + $0x10] sm:$0xff]
    %v3775 = vld [vmem:[%s3771 + $0x18] sm:$0xff]
    %v3776 = vld [vmem:[%s3771 + $0x20] sm:$0xff]
    %v3777 = vld [vmem:[%s3771 + $0x28] sm:$0xff]
    %v3778 = vld [vmem:[%s3771 + $0x30] sm:$0xff]
    %v3779 = vld [vmem:[%s3771 + $0x38] sm:$0xff]
    %v3780 = vld [vmem:[%s3771 + $0x40] sm:$0xff]
    %v3781 = vld [vmem:[%s3771 + $0x48] sm:$0xff]
    %v3782 = vld [vmem:[%s3771 + $0x50] sm:$0xff]
    %v3783 = vld [vmem:[%s3771 + $0x58] sm:$0xff]
    %v3784 = vld [vmem:[%s3771 + $0x60] sm:$0xff]
    %v3785 = vld [vmem:[%s3771 + $0x68] sm:$0xff]
    %v3786 = vld [vmem:[%s3771 + $0x70] sm:$0xff]
    %v3787 = vld [vmem:[%s3771 + $0x78] sm:$0xff]
    %3788 = vmatprep.subr.mxu0 0.0
    %3789 = vmatpush1.msra.mxu0 %v3787
    %3790 = vmatprep.subr.mxu0 0.0
    %3791 = vmatpush1.msra.mxu0 %v3786
    %3792 = vmatprep.subr.mxu0 0.0
    %3793 = vmatpush1.msra.mxu0 %v3785
    %3794 = vmatprep.subr.mxu0 0.0
    %3795 = vmatpush1.msra.mxu0 %v3784
    %3796 = vmatprep.subr.mxu0 0.0
    %3797 = vmatpush1.msra.mxu0 %v3783
    %3798 = vmatprep.subr.mxu0 0.0
    %3799 = vmatpush1.msra.mxu0 %v3782
    %3800 = vmatprep.subr.mxu0 0.0
    %3801 = vmatpush1.msra.mxu0 %v3781
    %3802 = vmatprep.subr.mxu0 0.0
    %3803 = vmatpush1.msra.mxu0 %v3780
    %3804 = vmatprep.subr.mxu0 0.0
    %3805 = vmatpush1.msra.mxu0 %v3779
    %3806 = vmatprep.subr.mxu0 0.0
    %3807 = vmatpush1.msra.mxu0 %v3778
    %3808 = vmatprep.subr.mxu0 0.0
    %3809 = vmatpush1.msra.mxu0 %v3777
    %3810 = vmatprep.subr.mxu0 0.0
    %3811 = vmatpush1.msra.mxu0 %v3776
    %3812 = vmatprep.subr.mxu0 0.0
    %3813 = vmatpush1.msra.mxu0 %v3775
    %3814 = vmatprep.subr.mxu0 0.0
    %3815 = vmatpush1.msra.mxu0 %v3774
    %3816 = vmatprep.subr.mxu0 0.0
    %3817 = vmatpush1.msra.mxu0 %v3773
    %3818 = vmatprep.subr.mxu0 0.0
    %3819 = vmatpush1.msra.mxu0 %v3772
    %3820 = vmatprep.subr.mxu0 0.0
    %3821 = vmatpush2.msra.mxu0 0.0
    %3822 = vmatprep.subr.mxu0 0.0
    %3823 = vmatpush2.msra.mxu0 0.0
    %3824 = vmatprep.subr.mxu0 0.0
    %3825 = vmatpush2.msra.mxu0 0.0
    %3826 = vmatprep.subr.mxu0 0.0
    %3827 = vmatpush2.msra.mxu0 0.0
    %3828 = vmatprep.subr.mxu0 0.0
    %3829 = vmatpush2.msra.mxu0 0.0
    %3830 = vmatprep.subr.mxu0 0.0
    %3831 = vmatpush2.msra.mxu0 0.0
    %3832 = vmatprep.subr.mxu0 0.0
    %3833 = vmatpush2.msra.mxu0 0.0
    %3834 = vmatprep.subr.mxu0 0.0
    %3835 = vmatpush2.msra.mxu0 0.0
    %3836 = vmatprep.subr.mxu0 0.0
    %3837 = vmatpush2.msra.mxu0 0.0
    %3838 = vmatprep.subr.mxu0 0.0
    %3839 = vmatpush2.msra.mxu0 0.0
    %3840 = vmatprep.subr.mxu0 0.0
    %3841 = vmatpush2.msra.mxu0 0.0
    %3842 = vmatprep.subr.mxu0 0.0
    %3843 = vmatpush2.msra.mxu0 0.0
    %3844 = vmatprep.subr.mxu0 0.0
    %3845 = vmatpush2.msra.mxu0 0.0
    %3846 = vmatprep.subr.mxu0 0.0
    %3847 = vmatpush2.msra.mxu0 0.0
    %3848 = vmatprep.subr.mxu0 0.0
    %3849 = vmatpush2.msra.mxu0 0.0
    %3850 = vmatprep.subr.mxu0 0.0
    %3851 = vmatpush2.msra.mxu0 0.0
    %3852 = vmatprep.mubr.f32.mxu0 0.0
    %3853 = vmatmul.mubr.f32.gmra.mxu0 %v3751
    %v3854 = vpop.f32.mrf.mxu0
    %v3855 = vadd.f32 0.0, %v3854
    %v3856 = vpop.f32.mrf.mxu0
    %3857 = vdwg.mxu0
    %3858 = vmatprep.subr.mxu0 0.0
    %3859 = vmatpush1.msra.mxu0 %v3770
    %3860 = vmatprep.subr.mxu0 0.0
    %3861 = vmatpush1.msra.mxu0 %v3769
    %3862 = vmatprep.subr.mxu0 0.0
    %3863 = vmatpush1.msra.mxu0 %v3768
    %3864 = vmatprep.subr.mxu0 0.0
    %3865 = vmatpush1.msra.mxu0 %v3767
    %3866 = vmatprep.subr.mxu0 0.0
    %3867 = vmatpush1.msra.mxu0 %v3766
    %3868 = vmatprep.subr.mxu0 0.0
    %3869 = vmatpush1.msra.mxu0 %v3765
    %3870 = vmatprep.subr.mxu0 0.0
    %3871 = vmatpush1.msra.mxu0 %v3764
    %3872 = vmatprep.subr.mxu0 0.0
    %3873 = vmatpush1.msra.mxu0 %v3763
    %3874 = vmatprep.subr.mxu0 0.0
    %3875 = vmatpush1.msra.mxu0 %v3762
    %3876 = vmatprep.subr.mxu0 0.0
    %3877 = vmatpush1.msra.mxu0 %v3761
    %3878 = vmatprep.subr.mxu0 0.0
    %3879 = vmatpush1.msra.mxu0 %v3760
    %3880 = vmatprep.subr.mxu0 0.0
    %3881 = vmatpush1.msra.mxu0 %v3759
    %3882 = vmatprep.subr.mxu0 0.0
    %3883 = vmatpush1.msra.mxu0 %v3758
    %3884 = vmatprep.subr.mxu0 0.0
    %3885 = vmatpush1.msra.mxu0 %v3757
    %3886 = vmatprep.subr.mxu0 0.0
    %3887 = vmatpush1.msra.mxu0 %v3756
    %3888 = vmatprep.subr.mxu0 0.0
    %3889 = vmatpush1.msra.mxu0 %v3755
    %3890 = vmatprep.subr.mxu0 0.0
    %3891 = vmatpush2.msra.mxu0 0.0
    %3892 = vmatprep.subr.mxu0 0.0
    %3893 = vmatpush2.msra.mxu0 0.0
    %3894 = vmatprep.subr.mxu0 0.0
    %3895 = vmatpush2.msra.mxu0 0.0
    %3896 = vmatprep.subr.mxu0 0.0
    %3897 = vmatpush2.msra.mxu0 0.0
    %3898 = vmatprep.subr.mxu0 0.0
    %3899 = vmatpush2.msra.mxu0 0.0
    %3900 = vmatprep.subr.mxu0 0.0
    %3901 = vmatpush2.msra.mxu0 0.0
    %3902 = vmatprep.subr.mxu0 0.0
    %3903 = vmatpush2.msra.mxu0 0.0
    %3904 = vmatprep.subr.mxu0 0.0
    %3905 = vmatpush2.msra.mxu0 0.0
    %3906 = vmatprep.subr.mxu0 0.0
    %3907 = vmatpush2.msra.mxu0 0.0
    %3908 = vmatprep.subr.mxu0 0.0
    %3909 = vmatpush2.msra.mxu0 0.0
    %3910 = vmatprep.subr.mxu0 0.0
    %3911 = vmatpush2.msra.mxu0 0.0
    %3912 = vmatprep.subr.mxu0 0.0
    %3913 = vmatpush2.msra.mxu0 0.0
    %3914 = vmatprep.subr.mxu0 0.0
    %3915 = vmatpush2.msra.mxu0 0.0
    %3916 = vmatprep.subr.mxu0 0.0
    %3917 = vmatpush2.msra.mxu0 0.0
    %3918 = vmatprep.subr.mxu0 0.0
    %3919 = vmatpush2.msra.mxu0 0.0
    %3920 = vmatprep.subr.mxu0 0.0
    %3921 = vmatpush2.msra.mxu0 0.0
    %3922 = vmatprep.mubr.f32.mxu0 0.0
    %3923 = vmatmul.mubr.f32.gmra.mxu0 %v3381
    %v3924 = vpop.f32.mrf.mxu0
    %v3925 = vadd.f32 %v3855, %v3924
    %v3926 = vpop.f32.mrf.mxu0
    %3927 = vdwg.mxu0
    %v3928 = vld [vmem:[#allocation5 + $0x1d] sm:$0x1]
    %v3929 = vlaneseq
    %v3930 = vshrl.u32 %v3929, 7
    %v3931 = vsub.s32 0, %v3930
    %v3932 = vrot.slane %v3928, %v3931
    %v3933 = vadd.f32 %v3925, %v3932
    %v3934 = vxor.u32 %v3933, 2147483648
    %v3935 = vmul.f32 %v3934, 1.442695
    %v3936 = vpow.pop %v3935
    %v3937 = vadd.f32 %v3936, 1.0
    %v3938 = vrcp.pop %v3937
    %v3939 = vmul.f32 1.0, %v3938
    %v3940 = vmul.f32 %v3939, %v3751
    %v3941 = vsub.f32 1.0, %v3939
    %v3942 = vmul.f32 %v3941, %v3381
    %v3943 = vadd.f32 %v3940, %v3942
    %v3944 = vsel %vm139, %v3666, 0.0
    %3945 = vadd.xlane.f32.xlu0 %v3944
    %v3946 = vpop.xlane.xlu0 %3945
    %v3947 = vrot.slane %v3946, 4
    %v3948 = vadd.f32 %v3946, %v3947
    %v3949 = vrot.slane %v3948, 2
    %v3950 = vadd.f32 %v3948, %v3949
    %v3951 = vrot.slane %v3950, 1
    %v3952 = vadd.f32 %v3950, %v3951
    %s3953 = vtos %v3952
    %v3954 = vstv %s3953
    %v3955 = vmul.f32 %v3954, 0.0078125
    %v3956 = vmul.f32 %v3943, 0.1
    %vm3957 = vcmp.ge.f32.partialorder %v3956, 1.0
    %v3958 = vsel %vm3957, 1, 0
    %v3959 = vcvt.s32.f32 %v3958
    %v3960 = vsel %vm139, %v3959, 0.0
    %3961 = vadd.xlane.f32.xlu0 %v3960
    %v3962 = vpop.xlane.xlu0 %3961
    %v3963 = vrot.slane %v3962, 4
    %v3964 = vadd.f32 %v3962, %v3963
    %v3965 = vrot.slane %v3964, 2
    %v3966 = vadd.f32 %v3964, %v3965
    %v3967 = vrot.slane %v3966, 1
    %v3968 = vadd.f32 %v3966, %v3967
    %s3969 = vtos %v3968
    %v3970 = vstv %s3969
    %v3971 = vmul.f32 %v3970, 0.0078125
    %s3972 = scalar_lea.vmem [#allocation2], 4736
    %v3973 = vld [vmem:[%s3972] sm:$0xff]
    %v3974 = vld [vmem:[%s3972 + $0x8] sm:$0xff]
    %v3975 = vld [vmem:[%s3972 + $0x10] sm:$0xff]
    %v3976 = vld [vmem:[%s3972 + $0x18] sm:$0xff]
    %v3977 = vld [vmem:[%s3972 + $0x20] sm:$0xff]
    %v3978 = vld [vmem:[%s3972 + $0x28] sm:$0xff]
    %v3979 = vld [vmem:[%s3972 + $0x30] sm:$0xff]
    %v3980 = vld [vmem:[%s3972 + $0x38] sm:$0xff]
    %v3981 = vld [vmem:[%s3972 + $0x40] sm:$0xff]
    %v3982 = vld [vmem:[%s3972 + $0x48] sm:$0xff]
    %v3983 = vld [vmem:[%s3972 + $0x50] sm:$0xff]
    %v3984 = vld [vmem:[%s3972 + $0x58] sm:$0xff]
    %v3985 = vld [vmem:[%s3972 + $0x60] sm:$0xff]
    %v3986 = vld [vmem:[%s3972 + $0x68] sm:$0xff]
    %v3987 = vld [vmem:[%s3972 + $0x70] sm:$0xff]
    %v3988 = vld [vmem:[%s3972 + $0x78] sm:$0xff]
    %v3989 = vld [vmem:[#allocation5 + $0x1e] sm:$0x1]
    %v3990 = vlaneseq
    %v3991 = vshrl.u32 %v3990, 7
    %v3992 = vsub.s32 0, %v3991
    %v3993 = vrot.slane %v3989, %v3992
    %3994 = vmatprep.subr.mxu0 0.0
    %3995 = vmatpush1.msra.mxu0 %v3988
    %3996 = vmatprep.subr.mxu0 0.0
    %3997 = vmatpush1.msra.mxu0 %v3987
    %3998 = vmatprep.subr.mxu0 0.0
    %3999 = vmatpush1.msra.mxu0 %v3986
    %4000 = vmatprep.subr.mxu0 0.0
    %4001 = vmatpush1.msra.mxu0 %v3985
    %4002 = vmatprep.subr.mxu0 0.0
    %4003 = vmatpush1.msra.mxu0 %v3984
    %4004 = vmatprep.subr.mxu0 0.0
    %4005 = vmatpush1.msra.mxu0 %v3983
    %4006 = vmatprep.subr.mxu0 0.0
    %4007 = vmatpush1.msra.mxu0 %v3982
    %4008 = vmatprep.subr.mxu0 0.0
    %4009 = vmatpush1.msra.mxu0 %v3981
    %4010 = vmatprep.subr.mxu0 0.0
    %4011 = vmatpush1.msra.mxu0 %v3980
    %4012 = vmatprep.subr.mxu0 0.0
    %4013 = vmatpush1.msra.mxu0 %v3979
    %4014 = vmatprep.subr.mxu0 0.0
    %4015 = vmatpush1.msra.mxu0 %v3978
    %4016 = vmatprep.subr.mxu0 0.0
    %4017 = vmatpush1.msra.mxu0 %v3977
    %4018 = vmatprep.subr.mxu0 0.0
    %4019 = vmatpush1.msra.mxu0 %v3976
    %4020 = vmatprep.subr.mxu0 0.0
    %4021 = vmatpush1.msra.mxu0 %v3975
    %4022 = vmatprep.subr.mxu0 0.0
    %4023 = vmatpush1.msra.mxu0 %v3974
    %4024 = vmatprep.subr.mxu0 0.0
    %4025 = vmatpush1.msra.mxu0 %v3973
    %4026 = vmatprep.subr.mxu0 0.0
    %4027 = vmatpush2.msra.mxu0 0.0
    %4028 = vmatprep.subr.mxu0 0.0
    %4029 = vmatpush2.msra.mxu0 0.0
    %4030 = vmatprep.subr.mxu0 0.0
    %4031 = vmatpush2.msra.mxu0 0.0
    %4032 = vmatprep.subr.mxu0 0.0
    %4033 = vmatpush2.msra.mxu0 0.0
    %4034 = vmatprep.subr.mxu0 0.0
    %4035 = vmatpush2.msra.mxu0 0.0
    %4036 = vmatprep.subr.mxu0 0.0
    %4037 = vmatpush2.msra.mxu0 0.0
    %4038 = vmatprep.subr.mxu0 0.0
    %4039 = vmatpush2.msra.mxu0 0.0
    %4040 = vmatprep.subr.mxu0 0.0
    %4041 = vmatpush2.msra.mxu0 0.0
    %4042 = vmatprep.subr.mxu0 0.0
    %4043 = vmatpush2.msra.mxu0 0.0
    %4044 = vmatprep.subr.mxu0 0.0
    %4045 = vmatpush2.msra.mxu0 0.0
    %4046 = vmatprep.subr.mxu0 0.0
    %4047 = vmatpush2.msra.mxu0 0.0
    %4048 = vmatprep.subr.mxu0 0.0
    %4049 = vmatpush2.msra.mxu0 0.0
    %4050 = vmatprep.subr.mxu0 0.0
    %4051 = vmatpush2.msra.mxu0 0.0
    %4052 = vmatprep.subr.mxu0 0.0
    %4053 = vmatpush2.msra.mxu0 0.0
    %4054 = vmatprep.subr.mxu0 0.0
    %4055 = vmatpush2.msra.mxu0 0.0
    %4056 = vmatprep.subr.mxu0 0.0
    %4057 = vmatpush2.msra.mxu0 0.0
    %4058 = vmatprep.mubr.f32.mxu0 0.0
    %4059 = vmatmul.mubr.f32.gmra.mxu0 %v3959
    %v4060 = vpop.f32.mrf.mxu0
    %v4061 = vadd.f32 %v3993, %v4060
    %v4062 = vpop.f32.mrf.mxu0
    %4063 = vdwg.mxu0
    %v4064 = vsel %vm139, %v4061, 0.0
    %v4065 = vrot.slane %v4064, 4
    %v4066 = vadd.f32 %v4064, %v4065
    %v4067 = vrot.slane %v4066, 2
    %v4068 = vadd.f32 %v4066, %v4067
    %v4069 = vrot.slane %v4068, 1
    %v4070 = vadd.f32 %v4068, %v4069
    %v4071 = vmul.f32 %v4070, %v147
    %v4072 = vsub.f32 %v4061, %v4071
    %v4073 = vmul.f32 %v4072, %v4072
    %v4074 = vsel %vm139, %v4073, 0.0
    %v4075 = vrot.slane %v4074, 4
    %v4076 = vadd.f32 %v4074, %v4075
    %v4077 = vrot.slane %v4076, 2
    %v4078 = vadd.f32 %v4076, %v4077
    %v4079 = vrot.slane %v4078, 1
    %v4080 = vadd.f32 %v4078, %v4079
    %v4081 = vmul.f32 %v4080, %v147
    %v4082 = vadd.f32 %v4081, 1e-05
    %v4083 = vrsqrt.pop %v4082
    %v4084 = vmul.f32 %v4072, %v4083
    %v4085 = vmax.f32 %v4084, 0.0
    %s4086 = scalar_lea.vmem [#allocation2], 4864
    %v4087 = vld [vmem:[%s4086] sm:$0xff]
    %v4088 = vld [vmem:[%s4086 + $0x8] sm:$0xff]
    %v4089 = vld [vmem:[%s4086 + $0x10] sm:$0xff]
    %v4090 = vld [vmem:[%s4086 + $0x18] sm:$0xff]
    %v4091 = vld [vmem:[%s4086 + $0x20] sm:$0xff]
    %v4092 = vld [vmem:[%s4086 + $0x28] sm:$0xff]
    %v4093 = vld [vmem:[%s4086 + $0x30] sm:$0xff]
    %v4094 = vld [vmem:[%s4086 + $0x38] sm:$0xff]
    %v4095 = vld [vmem:[%s4086 + $0x40] sm:$0xff]
    %v4096 = vld [vmem:[%s4086 + $0x48] sm:$0xff]
    %v4097 = vld [vmem:[%s4086 + $0x50] sm:$0xff]
    %v4098 = vld [vmem:[%s4086 + $0x58] sm:$0xff]
    %v4099 = vld [vmem:[%s4086 + $0x60] sm:$0xff]
    %v4100 = vld [vmem:[%s4086 + $0x68] sm:$0xff]
    %v4101 = vld [vmem:[%s4086 + $0x70] sm:$0xff]
    %v4102 = vld [vmem:[%s4086 + $0x78] sm:$0xff]
    %v4103 = vld [vmem:[#allocation5 + $0x1f] sm:$0x1]
    %v4104 = vlaneseq
    %v4105 = vshrl.u32 %v4104, 7
    %v4106 = vsub.s32 0, %v4105
    %v4107 = vrot.slane %v4103, %v4106
    %4108 = vmatprep.subr.mxu0 0.0
    %4109 = vmatpush1.msra.mxu0 %v4102
    %4110 = vmatprep.subr.mxu0 0.0
    %4111 = vmatpush1.msra.mxu0 %v4101
    %4112 = vmatprep.subr.mxu0 0.0
    %4113 = vmatpush1.msra.mxu0 %v4100
    %4114 = vmatprep.subr.mxu0 0.0
    %4115 = vmatpush1.msra.mxu0 %v4099
    %4116 = vmatprep.subr.mxu0 0.0
    %4117 = vmatpush1.msra.mxu0 %v4098
    %4118 = vmatprep.subr.mxu0 0.0
    %4119 = vmatpush1.msra.mxu0 %v4097
    %4120 = vmatprep.subr.mxu0 0.0
    %4121 = vmatpush1.msra.mxu0 %v4096
    %4122 = vmatprep.subr.mxu0 0.0
    %4123 = vmatpush1.msra.mxu0 %v4095
    %4124 = vmatprep.subr.mxu0 0.0
    %4125 = vmatpush1.msra.mxu0 %v4094
    %4126 = vmatprep.subr.mxu0 0.0
    %4127 = vmatpush1.msra.mxu0 %v4093
    %4128 = vmatprep.subr.mxu0 0.0
    %4129 = vmatpush1.msra.mxu0 %v4092
    %4130 = vmatprep.subr.mxu0 0.0
    %4131 = vmatpush1.msra.mxu0 %v4091
    %4132 = vmatprep.subr.mxu0 0.0
    %4133 = vmatpush1.msra.mxu0 %v4090
    %4134 = vmatprep.subr.mxu0 0.0
    %4135 = vmatpush1.msra.mxu0 %v4089
    %4136 = vmatprep.subr.mxu0 0.0
    %4137 = vmatpush1.msra.mxu0 %v4088
    %4138 = vmatprep.subr.mxu0 0.0
    %4139 = vmatpush1.msra.mxu0 %v4087
    %4140 = vmatprep.subr.mxu0 0.0
    %4141 = vmatpush2.msra.mxu0 0.0
    %4142 = vmatprep.subr.mxu0 0.0
    %4143 = vmatpush2.msra.mxu0 0.0
    %4144 = vmatprep.subr.mxu0 0.0
    %4145 = vmatpush2.msra.mxu0 0.0
    %4146 = vmatprep.subr.mxu0 0.0
    %4147 = vmatpush2.msra.mxu0 0.0
    %4148 = vmatprep.subr.mxu0 0.0
    %4149 = vmatpush2.msra.mxu0 0.0
    %4150 = vmatprep.subr.mxu0 0.0
    %4151 = vmatpush2.msra.mxu0 0.0
    %4152 = vmatprep.subr.mxu0 0.0
    %4153 = vmatpush2.msra.mxu0 0.0
    %4154 = vmatprep.subr.mxu0 0.0
    %4155 = vmatpush2.msra.mxu0 0.0
    %4156 = vmatprep.subr.mxu0 0.0
    %4157 = vmatpush2.msra.mxu0 0.0
    %4158 = vmatprep.subr.mxu0 0.0
    %4159 = vmatpush2.msra.mxu0 0.0
    %4160 = vmatprep.subr.mxu0 0.0
    %4161 = vmatpush2.msra.mxu0 0.0
    %4162 = vmatprep.subr.mxu0 0.0
    %4163 = vmatpush2.msra.mxu0 0.0
    %4164 = vmatprep.subr.mxu0 0.0
    %4165 = vmatpush2.msra.mxu0 0.0
    %4166 = vmatprep.subr.mxu0 0.0
    %4167 = vmatpush2.msra.mxu0 0.0
    %4168 = vmatprep.subr.mxu0 0.0
    %4169 = vmatpush2.msra.mxu0 0.0
    %4170 = vmatprep.subr.mxu0 0.0
    %4171 = vmatpush2.msra.mxu0 0.0
    %4172 = vmatprep.mubr.f32.mxu0 0.0
    %4173 = vmatmul.mubr.f32.gmra.mxu0 %v4085
    %v4174 = vpop.f32.mrf.mxu0
    %v4175 = vadd.f32 %v4107, %v4174
    %v4176 = vpop.f32.mrf.mxu0
    %4177 = vdwg.mxu0
    %v4178 = vld [vmem:[#allocation5 + $0x23] sm:$0x1]
    %v4179 = vlaneseq
    %v4180 = vshrl.u32 %v4179, 7
    %v4181 = vsub.s32 0, %v4180
    %v4182 = vrot.slane %v4178, %v4181
    %v4183 = vmul.f32 %v4175, %v4182
    %v4184 = vsel %vm139, %v4183, 0.0
    %4185 = vadd.xlane.f32.xlu0 %v4184
    %v4186 = vpop.xlane.xlu0 %4185
    %v4187 = vld [vmem:[#allocation5 + $0x24] sm:$0x1]
    %v4188 = vlaneseq
    %v4189 = vshrl.u32 %v4188, 7
    %v4190 = vsub.s32 0, %v4189
    %v4191 = vrot.slane %v4187, %v4190
    %v4192 = vadd.f32 %v4186, %v4191
    %v4193 = vxor.u32 %v4192, 2147483648
    %v4194 = vmul.f32 %v4193, 1.442695
    %v4195 = vpow.pop %v4194
    %v4196 = vadd.f32 %v4195, 1.0
    %v4197 = vrcp.pop %v4196
    %v4198 = vmul.f32 1.0, %v4197
    %v4199 = vsel %vm139, %v4198, 0.0
    %4200 = vadd.xlane.f32.xlu0 %v4199
    %v4201 = vpop.xlane.xlu0 %4200
    %v4202 = vrot.slane %v4201, 4
    %v4203 = vadd.f32 %v4201, %v4202
    %v4204 = vrot.slane %v4203, 2
    %v4205 = vadd.f32 %v4203, %v4204
    %v4206 = vrot.slane %v4205, 1
    %v4207 = vadd.f32 %v4205, %v4206
    %s4208 = vtos %v4207
    %v4209 = vstv %s4208
    %v4210 = vmul.f32 %v4209, 0.00390625
    %v4211 = vadd.f32 %v3959, %v2937
    %v4212 = vmax.f32 %v4211, 0.0
    %s4213 = scalar_lea.vmem [#allocation2], 5120
    %v4214 = vld [vmem:[%s4213] sm:$0xff]
    %v4215 = vld [vmem:[%s4213 + $0x8] sm:$0xff]
    %v4216 = vld [vmem:[%s4213 + $0x10] sm:$0xff]
    %v4217 = vld [vmem:[%s4213 + $0x18] sm:$0xff]
    %v4218 = vld [vmem:[%s4213 + $0x20] sm:$0xff]
    %v4219 = vld [vmem:[%s4213 + $0x28] sm:$0xff]
    %v4220 = vld [vmem:[%s4213 + $0x30] sm:$0xff]
    %v4221 = vld [vmem:[%s4213 + $0x38] sm:$0xff]
    %v4222 = vld [vmem:[%s4213 + $0x40] sm:$0xff]
    %v4223 = vld [vmem:[%s4213 + $0x48] sm:$0xff]
    %v4224 = vld [vmem:[%s4213 + $0x50] sm:$0xff]
    %v4225 = vld [vmem:[%s4213 + $0x58] sm:$0xff]
    %v4226 = vld [vmem:[%s4213 + $0x60] sm:$0xff]
    %v4227 = vld [vmem:[%s4213 + $0x68] sm:$0xff]
    %v4228 = vld [vmem:[%s4213 + $0x70] sm:$0xff]
    %v4229 = vld [vmem:[%s4213 + $0x78] sm:$0xff]
    %v4230 = vld [vmem:[#allocation5 + $0x25] sm:$0x1]
    %v4231 = vlaneseq
    %v4232 = vshrl.u32 %v4231, 7
    %v4233 = vsub.s32 0, %v4232
    %v4234 = vrot.slane %v4230, %v4233
    %4235 = vmatprep.subr.mxu0 0.0
    %4236 = vmatpush1.msra.mxu0 %v4229
    %4237 = vmatprep.subr.mxu0 0.0
    %4238 = vmatpush1.msra.mxu0 %v4228
    %4239 = vmatprep.subr.mxu0 0.0
    %4240 = vmatpush1.msra.mxu0 %v4227
    %4241 = vmatprep.subr.mxu0 0.0
    %4242 = vmatpush1.msra.mxu0 %v4226
    %4243 = vmatprep.subr.mxu0 0.0
    %4244 = vmatpush1.msra.mxu0 %v4225
    %4245 = vmatprep.subr.mxu0 0.0
    %4246 = vmatpush1.msra.mxu0 %v4224
    %4247 = vmatprep.subr.mxu0 0.0
    %4248 = vmatpush1.msra.mxu0 %v4223
    %4249 = vmatprep.subr.mxu0 0.0
    %4250 = vmatpush1.msra.mxu0 %v4222
    %4251 = vmatprep.subr.mxu0 0.0
    %4252 = vmatpush1.msra.mxu0 %v4221
    %4253 = vmatprep.subr.mxu0 0.0
    %4254 = vmatpush1.msra.mxu0 %v4220
    %4255 = vmatprep.subr.mxu0 0.0
    %4256 = vmatpush1.msra.mxu0 %v4219
    %4257 = vmatprep.subr.mxu0 0.0
    %4258 = vmatpush1.msra.mxu0 %v4218
    %4259 = vmatprep.subr.mxu0 0.0
    %4260 = vmatpush1.msra.mxu0 %v4217
    %4261 = vmatprep.subr.mxu0 0.0
    %4262 = vmatpush1.msra.mxu0 %v4216
    %4263 = vmatprep.subr.mxu0 0.0
    %4264 = vmatpush1.msra.mxu0 %v4215
    %4265 = vmatprep.subr.mxu0 0.0
    %4266 = vmatpush1.msra.mxu0 %v4214
    %4267 = vmatprep.subr.mxu0 0.0
    %4268 = vmatpush2.msra.mxu0 0.0
    %4269 = vmatprep.subr.mxu0 0.0
    %4270 = vmatpush2.msra.mxu0 0.0
    %4271 = vmatprep.subr.mxu0 0.0
    %4272 = vmatpush2.msra.mxu0 0.0
    %4273 = vmatprep.subr.mxu0 0.0
    %4274 = vmatpush2.msra.mxu0 0.0
    %4275 = vmatprep.subr.mxu0 0.0
    %4276 = vmatpush2.msra.mxu0 0.0
    %4277 = vmatprep.subr.mxu0 0.0
    %4278 = vmatpush2.msra.mxu0 0.0
    %4279 = vmatprep.subr.mxu0 0.0
    %4280 = vmatpush2.msra.mxu0 0.0
    %4281 = vmatprep.subr.mxu0 0.0
    %4282 = vmatpush2.msra.mxu0 0.0
    %4283 = vmatprep.subr.mxu0 0.0
    %4284 = vmatpush2.msra.mxu0 0.0
    %4285 = vmatprep.subr.mxu0 0.0
    %4286 = vmatpush2.msra.mxu0 0.0
    %4287 = vmatprep.subr.mxu0 0.0
    %4288 = vmatpush2.msra.mxu0 0.0
    %4289 = vmatprep.subr.mxu0 0.0
    %4290 = vmatpush2.msra.mxu0 0.0
    %4291 = vmatprep.subr.mxu0 0.0
    %4292 = vmatpush2.msra.mxu0 0.0
    %4293 = vmatprep.subr.mxu0 0.0
    %4294 = vmatpush2.msra.mxu0 0.0
    %4295 = vmatprep.subr.mxu0 0.0
    %4296 = vmatpush2.msra.mxu0 0.0
    %4297 = vmatprep.subr.mxu0 0.0
    %4298 = vmatpush2.msra.mxu0 0.0
    %4299 = vmatprep.mubr.f32.mxu0 0.0
    %4300 = vmatmul.mubr.f32.gmra.mxu0 %v4212
    %v4301 = vpop.f32.mrf.mxu0
    %v4302 = vadd.f32 %v4234, %v4301
    %v4303 = vpop.f32.mrf.mxu0
    %4304 = vdwg.mxu0
    %4305 = vst [vmem:[#allocation7] sm:$0x3] %v4302
    %vm4306 = vcmp.eq.s32.totalorder %v46, 0
    %v4307 = vsel %vm4306, %v1186, 0.0
    %vm4308 = vcmp.eq.s32.totalorder %v46, 1
    %v4309 = vsel %vm4308, %v1202, %v4307
    %vm4310 = vcmp.eq.s32.totalorder %v46, 2
    %v4311 = vsel %vm4310, %v1441, %v4309
    %vm4312 = vcmp.eq.s32.totalorder %v46, 3
    %v4313 = vsel %vm4312, %v2572, %v4311
    %vm4314 = vcmp.eq.s32.totalorder %v46, 4
    %v4315 = vsel %vm4314, %v2588, %v4313
    %vm4316 = vcmp.eq.s32.totalorder %v46, 5
    %v4317 = vsel %vm4316, %v2827, %v4315
    %vm4318 = vcmp.eq.s32.totalorder %v46, 6
    %v4319 = vsel %vm4318, %v3955, %v4317
    %vm4320 = vcmp.eq.s32.totalorder %v46, 7
    %v4321 = vsel %vm4320, %v3971, %v4319
    %vm4322 = vcmp.eq.s32.totalorder %v46, 8
    %v4323 = vsel %vm4322, %v4210, %v4321
    %4324 = vst [vmem:[%s4] sm:$0x1] %v4323
    // Predicated region
    $region22: #{forward.1} parent=1 // pred_check
      _
    $region23: #{forward.1} parent=1 // pred_check_branch
      %4326 = sbr.rel (0) target = $region25
    $region24: #{forward.1} parent=1 // pred_region
      %s4328 = ssub.s32 32, 32
      %4329 = vsyncadd [#allocation4], %s4328
      %s4331 = sshll.u32 [#allocation7], 4
      %s4332 = int_to_ptr.vmem [resolvable:$true] %s4331
      %4334 = dma.vmem_to_hbm [thread:$0]  %s4332, 32, %s3, [#allocation4]
    $region25: #{forward.1} parent=1 // pred_fallthru
      _
    // Predicated region
    $region26: #{forward.1} parent=1 // pred_check
      _
    $region27: #{forward.1} parent=1 // pred_check_branch
      %4336 = sbr.rel (0) target = $region29
    $region28: #{forward.1} parent=1 // pred_region
      _
    $region29: #{forward.1} parent=1 // pred_fallthru
      _
    // Predicated region
    $region30: #{forward.1} parent=1 // pred_check
      _
    $region31: #{forward.1} parent=1 // pred_check_branch
      %4338 = sbr.rel (0) target = $region33
    $region32: #{forward.1} parent=1 // pred_region
      %4339 = dma.done [#allocation4], 32
    $region33: #{forward.1} parent=1 // pred_fallthru
      _
    // Predicated region
    $region34: #{forward.1} parent=1 // pred_check
      _
    $region35: #{forward.1} parent=1 // pred_check_branch
      %4341 = sbr.rel (0) target = $region37
    $region36: #{forward.1} parent=1 // pred_region
      _
    $region37: #{forward.1} parent=1 // pred_fallthru
      _
    %4342 = vsyncpa [#allocation3], 1
    %4343 = vsyncpa [#allocation6], 1
    %4344 = vsyncpa [#allocation4], 1

</llo_original>
